<compile_context>
chip_gen: v6e
topology: v6e:2x2x1
jax: 0.10.0
libtpu: 0.0.40
codegen_flags: <defaults>
</compile_context>

<pallas_src>
import functools
import math

import numpy as np
import jax
import jax.numpy as jnp
from jax.experimental import pallas as pl
from jax.experimental.pallas import tpu as pltpu


def _round_up(x, m):
    return (x + m - 1) // m * m


def _pick_bt(B, target_bt=88):
    """Batch fold size: a multiple of 8 (sublane alignment of the component sub-slabs),
    as large as possible up to target_bt (3*88=264 fills the 256-wide v6e/v7x MXU;
    use target_bt=40 -> 3*40=120 on v5e) while keeping batch zero-padding <= B//4."""
    best = 8
    slack = max(0, B // 4)
    for bt in range(8, max(8, target_bt) + 1, 8):
        if _round_up(B, bt) - B <= slack:
            best = bt
    return best


def _pick_atom_tile(n_atoms, S, nb_p, itemsize, budget_bytes=16 << 20):
    """Atom-axis tile: a multiple of 256 (v6e/v7x MXU column width) sized so the
    double-buffered one-hot slab (S*nb_p, tn) stays within `budget_bytes` of VMEM."""
    tn = (budget_bytes // (2 * itemsize * S * nb_p)) // 256 * 256
    tn = max(256, tn)
    return min(tn, _round_up(n_atoms, 256))


def _vmem_cap_bytes():
    # ~20% headroom for compiler-internal scratch; conservative (v7x-sized) fallback.
    try:
        return int(pltpu.get_tpu_info().vmem_capacity_bytes * 0.8)
    except Exception:
        return int((64 << 20) * 0.8)


def _vmem_limit_bytes(bt, nb_p, S, tn, mat_itemsize):
    f32 = 4
    est = (3 * (3 * bt) * nb_p * f32 * 2          # p1/p2/P input blocks (double-buffered)
           + 6 * S * nb_p * f32                   # w(3) + sqrt2*cos + sqrt2*sin + scaling (x1)
           + S * nb_p * tn * mat_itemsize * 2     # one-hot tile (streams over atom axis)
           + (3 * bt) * S * nb_p * f32 * 2        # rot output block
           + (3 * bt) * tn * f32 * 2              # atoms output block
           + (3 * bt) * S * nb_p * mat_itemsize)  # recon scratch
    return int(min(_vmem_cap_bytes(), max(32 << 20, 2 * est)))


# ------------------------------ Pallas kernel ------------------------------ #
def backmapper_kernel(p1_ref, p2_ref, P_ref, w_ref, c2_ref, s2_ref, scal_ref, scat_ref,
                      rot_ref, atoms_ref, recon_scr, *, bead_size, bt, nb_p):
    # Per-slot VPU work only depends on the batch tile (grid axis 0); run it once per batch
    # tile (atom-tile j == 0) and let recon_scr persist across the inner atom-tile axis.
    @pl.when(pl.program_id(1) == 0)
    def _slot_loop():
        p1 = p1_ref[0]            # (3*bt, nb_p), rows ordered (xyz component, local batch)
        p2 = p2_ref[0]
        Pc = P_ref[0]
        w_all = w_ref[...]        # (3, S, nb_p); row 2 already folded by 1/sqrt(6)
        c2_all = c2_ref[...]      # (S, nb_p) = sqrt(2) * cos(angle)
        s2_all = s2_ref[...]      # (S, nb_p) = sqrt(2) * sin(angle)
        scal_all = scal_ref[...]  # (S, nb_p)

        # bt is a multiple of 8 -> sublane-aligned slices (no relayout copies).
        p1x, p1y, p1z = p1[0:bt], p1[bt:2 * bt], p1[2 * bt:3 * bt]
        p2x, p2y, p2z = p2[0:bt], p2[bt:2 * bt], p2[2 * bt:3 * bt]
        Px, Py, Pz = Pc[0:bt], Pc[bt:2 * bt], Pc[2 * bt:3 * bt]

        # e3nn TensorProduct('Nx1o','Nx1o','Nx1e','uuu', irrep_normalization='none')
        # == per-bead cross product; its 1/sqrt(6) normalization is folded into w_all[2].
        # TODO(synk): verify the Levi-Civita sign against a real e3nn install if bit-exact
        #             agreement with e3nn is required.
        cx = p1y * p2z - p1z * p2y
        cy = p1z * p2x - p1x * p2z
        cz = p1x * p2y - p1y * p2x

        for s in range(bead_size):                  # small, unrolled at trace time
            w0 = w_all[0, s:s + 1, :]               # (1, nb_p)
            w1 = w_all[1, s:s + 1, :]
            w2 = w_all[2, s:s + 1, :]
            # AELinear einsum('bijk,ijl->bjlk') restricted to output slot l == s.
            rx = w0 * p1x + w1 * p2x + w2 * cx      # (bt, nb_p)
            ry = w0 * p1y + w1 * p2y + w2 * cy
            rz = w0 * p1z + w1 * p2z + w2 * cz
            # eps clamp keeps padded/degenerate lanes finite (their one-hot columns are 0,
            # but NaN * 0 = NaN would otherwise poison the fused scatter matmul).
            inv = jax.lax.rsqrt(jnp.maximum(rx * rx + ry * ry + rz * rz, 1e-30))
            rx, ry, rz = rx * inv, ry * inv, rz * inv

            lo = s * nb_p                           # static, 128-lane-aligned offset
            rot_ref[0, 0:bt, lo:lo + nb_p] = rx
            rot_ref[0, bt:2 * bt, lo:lo + nb_p] = ry
            rot_ref[0, 2 * bt:3 * bt, lo:lo + nb_p] = rz

            # q = (cos a, sin a * r) is unit -> Rodrigues sandwich, with the 2x factors
            # folded into the sqrt(2)-scaled tables:
            #   v' = p1 + c2*t + u x t,  u = sqrt2*sin*r,  t = u x p1,  c2 = sqrt2*cos.
            c2 = c2_all[s:s + 1, :]
            s2 = s2_all[s:s + 1, :]
            ux, uy, uz = s2 * rx, s2 * ry, s2 * rz
            tx = uy * p1z - uz * p1y
            ty = uz * p1x - ux * p1z
            tz = ux * p1y - uy * p1x
            vx = p1x + c2 * tx + (uy * tz - uz * ty)
            vy = p1y + c2 * ty + (uz * tx - ux * tz)
            vz = p1z + c2 * tz + (ux * ty - uy * tx)

            sc = scal_all[s:s + 1, :]
            recon_scr[0:bt, lo:lo + nb_p] = (sc * vx + Px).astype(recon_scr.dtype)
            recon_scr[bt:2 * bt, lo:lo + nb_p] = (sc * vy + Py).astype(recon_scr.dtype)
            recon_scr[2 * bt:3 * bt, lo:lo + nb_p] = (sc * vz + Pz).astype(recon_scr.dtype)

    # Fused bead->atom scatter-add for this atom tile: ONE MXU call over K = S * nb_p.
    atoms_ref[0] = jnp.dot(recon_scr[...], scat_ref[...],
                           preferred_element_type=jnp.float32)


# ------------------------------ wrapper (glue) ------------------------------ #
def martini_backmapper_forward(P, p1, p2, weights, angles_polar, scaling,
                               mask_np, atom_idx_np, *, bt=None, target_bt=88,
                               matmul_dtype=jnp.float32):
    B, n_beads, _ = P.shape
    S = mask_np.shape[1]
    n_atoms = scaling.shape[0]
    valid_flat = np.nonzero(mask_np.reshape(-1))[0]        # row-major over (bead h, slot s)

    # ----- static geometry of the folded layout -----
    if bt is None:
        bt = _pick_bt(B, target_bt)
    bt = _round_up(max(bt, 8), 8)                          # sublane alignment
    B_pad = _round_up(B, bt)                               # never degrade to bt=1 for odd B
    bgrid = B_pad // bt
    nb_p = _round_up(n_beads, 128)                         # lane-dense bead axis
    mat_itemsize = np.dtype(matmul_dtype).itemsize
    tn_atoms = _pick_atom_tile(n_atoms, S, nb_p, mat_itemsize)
    na_p = _round_up(n_atoms, tn_atoms)
    n_at_tiles = na_p // tn_atoms
    # TODO(synk): when bgrid == 1 on v7x (2 TensorCores), the batch axis leaves one core
    #             idle; splitting bt into two grid steps (or dropping the pl.when guard and
    #             marking the atom axis parallel) would recover it.
    # TODO(synk): if production n_beads << 128, flatten (slot, bead) into one lane axis
    #             padded once to 128 instead of per-slot nb_p padding (shrinks K / the
    #             one-hot table ~32x at n_beads=4).

    # ----- dense per-slot parameter tables (parameter plumbing, plain JAX) -----
    sqrt2 = math.sqrt(2.0)
    ang_flat = jnp.zeros((n_beads * S,), jnp.float32).at[valid_flat].set(angles_polar[:, 0])
    ang = ang_flat.reshape(n_beads, S).T                   # (S, n_beads)
    c2_dense = jnp.zeros((S, nb_p), jnp.float32).at[:, :n_beads].set(sqrt2 * jnp.cos(ang))
    s2_dense = jnp.zeros((S, nb_p), jnp.float32).at[:, :n_beads].set(sqrt2 * jnp.sin(ang))
    scal_dense = jnp.zeros((S, nb_p), jnp.float32).at[:, :n_beads].set(
        scaling[atom_idx_np.reshape(-1), 0].reshape(n_beads, S).T)
    w_t = jnp.transpose(weights, (0, 2, 1)).astype(jnp.float32)   # (3, S, n_beads)
    w_t = w_t.at[2].multiply(1.0 / math.sqrt(6.0))                # fold cross-product norm
    wt = jnp.zeros((3, S, nb_p), jnp.float32).at[:, :, :n_beads].set(w_t)

    # static one-hot scatter table, flattened K index = s * nb_p + h (exact in bf16).
    # TODO(synk): for huge S*nb_p*na_p build/stream this block-sparsely instead of dense.
    scat_np = np.zeros((S, nb_p, na_p), np.float32)
    hh, ss = np.nonzero(mask_np)
    scat_np[ss, hh, atom_idx_np[hh, ss]] = 1.0
    scat_flat = jnp.asarray(scat_np.reshape(S * nb_p, na_p), dtype=matmul_dtype)

    def to_cm(x):  # (B, n_beads, 3) -> (bgrid, 3*bt, nb_p), rows = (component, local batch)
        x = jnp.transpose(x, (0, 2, 1)).astype(jnp.float32)
        x = jnp.pad(x, ((0, B_pad - B), (0, 0), (0, nb_p - n_beads)))
        x = x.reshape(bgrid, bt, 3, nb_p)
        return jnp.transpose(x, (0, 2, 1, 3)).reshape(bgrid, 3 * bt, nb_p)

    p1c, p2c, Pc = to_cm(p1), to_cm(p2), to_cm(P)

    kernel = functools.partial(backmapper_kernel, bead_size=S, bt=bt, nb_p=nb_p)
    out_shape = (jax.ShapeDtypeStruct((bgrid, 3 * bt, S * nb_p), jnp.float32),
                 jax.ShapeDtypeStruct((bgrid, 3 * bt, na_p), jnp.float32))

    def run(single_buffer_tables):
        # Grid-invariant tables are fetched once -> request a single pipeline buffer.
        tbl_kw = {"pipeline_mode": pl.Buffered(1)} if single_buffer_tables else {}
        in_specs = [
            pl.BlockSpec((1, 3 * bt, nb_p), lambda g, j: (g, 0, 0)),          # p1
            pl.BlockSpec((1, 3 * bt, nb_p), lambda g, j: (g, 0, 0)),          # p2
            pl.BlockSpec((1, 3 * bt, nb_p), lambda g, j: (g, 0, 0)),          # P
            pl.BlockSpec((3, S, nb_p), lambda g, j: (0, 0, 0), **tbl_kw),     # AELinear weights
            pl.BlockSpec((S, nb_p), lambda g, j: (0, 0), **tbl_kw),           # sqrt2*cos
            pl.BlockSpec((S, nb_p), lambda g, j: (0, 0), **tbl_kw),           # sqrt2*sin
            pl.BlockSpec((S, nb_p), lambda g, j: (0, 0), **tbl_kw),           # scaling
            pl.BlockSpec((S * nb_p, tn_atoms), lambda g, j: (0, j)),          # one-hot tile
        ]
        out_specs = (
            pl.BlockSpec((1, 3 * bt, S * nb_p), lambda g, j: (g, 0, 0)),      # rot axes
            pl.BlockSpec((1, 3 * bt, tn_atoms), lambda g, j: (g, 0, j)),      # atoms
        )
        return pl.pallas_call(
            kernel,
            out_shape=out_shape,
            grid=(bgrid, n_at_tiles),
            in_specs=in_specs,
            out_specs=out_specs,
            scratch_shapes=[pltpu.VMEM((3 * bt, S * nb_p), matmul_dtype)],
            compiler_params=pltpu.CompilerParams(
                dimension_semantics=("parallel", "arbitrary"),
                vmem_limit_bytes=_vmem_limit_bytes(bt, nb_p, S, tn_atoms, mat_itemsize)),
        )(p1c, p2c, Pc, wt, c2_dense, s2_dense, scal_dense, scat_flat)

    try:
        rot_cm, atoms_cm = run(True)      # single-buffer the grid-invariant tables
    except Exception:                     # this Pallas build rejects Buffered(1)
        rot_cm, atoms_cm = run(False)

    # atoms: rows (component, local batch) -> (B, n_atoms, 3)
    atoms = atoms_cm.reshape(bgrid, 3, bt, na_p)
    reconstructed = jnp.transpose(atoms, (0, 2, 3, 1)).reshape(B_pad, na_p, 3)[:B, :n_atoms, :]

    # rot: rows (component, local batch), lanes (slot, bead) -> masked (B*n_masked, 3)
    rot = rot_cm.reshape(bgrid, 3, bt, S, nb_p)
    rot = jnp.transpose(rot, (0, 2, 4, 3, 1))[:, :, :n_beads]       # (bgrid, bt, H, S, 3)
    rot_axes = rot.reshape(B_pad, n_beads * S, 3)[:B, valid_flat, :].reshape(-1, 3)
    return reconstructed, rot_axes


# --------------------------- pure-JAX reference ----------------------------- #
def _q_mult_ref(q1, q2):
    w1, x1, y1, z1 = q1[..., 0], q1[..., 1], q1[..., 2], q1[..., 3]
    w2, x2, y2, z2 = q2[..., 0], q2[..., 1], q2[..., 2], q2[..., 3]
    w = w1 * w2 - x1 * x2 - y1 * y2 - z1 * z2
    x = w1 * x2 + x1 * w2 + y1 * z2 - z1 * y2
    y = w1 * y2 + y1 * w2 + z1 * x2 - x1 * z2
    z = w1 * z2 + z1 * w2 + x1 * y2 - y1 * x2
    return jnp.stack((w, x, y, z), -1)


def _qv_mult_ref(q, v):
    real = jnp.zeros(v.shape[:-1] + (1,), v.dtype)
    q2 = jnp.concatenate([real, v], -1)
    conj = jnp.array([1.0, -1.0, -1.0, -1.0], q.dtype) * q
    return _q_mult_ref(_q_mult_ref(q, q2), conj)[..., 1:]


def reference_forward(P, p1, p2, weights, angles_polar, scaling, mask_np, atom_idx_np):
    B, n_beads, _ = P.shape
    bead_size = mask_np.shape[1]
    n_atoms = scaling.shape[0]
    p12 = jnp.cross(p1, p2) / np.sqrt(6.0)
    stacked = jnp.stack([p1, p2, p12], axis=1)                 # (B, 3, H, 3)
    rot = jnp.einsum('bijk,ijl->bjlk', stacked, weights)       # (B, H, S, 3)
    rot = rot / jnp.linalg.norm(rot, axis=-1, keepdims=True)
    valid_flat = np.nonzero(mask_np.reshape(-1))[0]
    n_masked = len(valid_flat)
    rot_axes = rot.reshape(B, n_beads * bead_size, 3)[:, valid_flat, :].reshape(-1, 3)

    angles = jnp.tile(angles_polar, (B, 1))
    q = jnp.concatenate([jnp.cos(angles), jnp.sin(angles) * rot_axes], axis=-1)
    counts = mask_np.sum(axis=1)
    v_ = jnp.repeat(p1.reshape(-1, 3), np.tile(counts, B), axis=0)
    v_rot = _qv_mult_ref(q, v_)

    atom_per_valid = atom_idx_np.reshape(-1)[valid_flat]
    bead_per_valid = valid_flat // bead_size
    scal = scaling[np.tile(atom_per_valid, B)]
    Pcent = P[:, bead_per_valid, :].reshape(-1, 3)
    recon = scal * v_rot + Pcent
    batch_ids = np.repeat(np.arange(B), n_masked)
    atom_ids = np.tile(atom_per_valid, B)
    reconstructed = jnp.zeros((B, n_atoms, 3), jnp.float32).at[batch_ids, atom_ids].add(recon)
    return reconstructed, rot_axes


# ----------------------------------- main ----------------------------------- #
if __name__ == "__main__":
    B, n_beads, bead_size, n_atoms = 2, 4, 4, 10

    # static bead->atom bookkeeping (buffers of the torch module)
    mask_np = np.array([[1, 1, 1, 0],
                        [1, 1, 0, 0],
                        [1, 1, 1, 1],
                        [1, 0, 0, 0]], dtype=bool)
    atom_idx_np = np.zeros((n_beads, bead_size), dtype=np.int32)   # "bead2atom_idcs_generator"
    nxt = 0
    for h in range(n_beads):
        for s in range(bead_size):
            if mask_np[h, s]:
                atom_idx_np[h, s] = nxt
                nxt += 1
    n_masked = int(mask_np.sum())

    key = jax.random.PRNGKey(0)
    k0, k1, k2, k3, k4, k5 = jax.random.split(key, 6)
    P = jax.random.normal(k0, (B, n_beads, 3), jnp.float32)
    p1 = jax.random.normal(k1, (B, n_beads, 3), jnp.float32)
    p2 = jax.random.normal(k2, (B, n_beads, 3), jnp.float32)
    weights = jax.random.normal(k3, (3, n_beads, bead_size), jnp.float32)   # AELinear.weights
    angles_polar = jax.random.normal(k4, (n_masked, 1), jnp.float32)
    scaling = jax.random.normal(k5, (n_atoms, 1), jnp.float32)
    # NOTE: angles_azimutal exists in the torch module but is unused in forward() -> omitted.

    recon, rot_axes = martini_backmapper_forward(
        P, p1, p2, weights, angles_polar, scaling, mask_np, atom_idx_np)
    jax.block_until_ready((recon, rot_axes))

    recon_ref, rotax_ref = reference_forward(
        P, p1, p2, weights, angles_polar, scaling, mask_np, atom_idx_np)
    np.testing.assert_allclose(np.asarray(recon), np.asarray(recon_ref), rtol=1e-4, atol=1e-4)
    np.testing.assert_allclose(np.asarray(rot_axes), np.asarray(rotax_ref), rtol=1e-4, atol=1e-4)

    print("KERNEL_OK")
</pallas_src>

<mosaic_0001>
module attributes {stable_mosaic.version = 11 : i64} {
  func.func @backmapper_kernel(%arg0: i32, %arg1: i32, %arg2: memref<1x24x128xf32, #tpu.memory_space<vmem>>, %arg3: memref<1x24x128xf32, #tpu.memory_space<vmem>>, %arg4: memref<1x24x128xf32, #tpu.memory_space<vmem>>, %arg5: memref<3x4x128xf32, #tpu.memory_space<vmem>>, %arg6: memref<4x128xf32, #tpu.memory_space<vmem>>, %arg7: memref<4x128xf32, #tpu.memory_space<vmem>>, %arg8: memref<4x128xf32, #tpu.memory_space<vmem>>, %arg9: memref<512x256xf32, #tpu.memory_space<vmem>>, %arg10: memref<1x24x512xf32, #tpu.memory_space<vmem>>, %arg11: memref<1x24x256xf32, #tpu.memory_space<vmem>>, %arg12: memref<24x512xf32, #tpu.memory_space<vmem>>) attributes {dimension_semantics = [#tpu.dimension_semantics<parallel>, #tpu.dimension_semantics<arbitrary>], iteration_bounds = array<i64: 1, 1>, scalar_prefetch = 0 : i64, scratch_operands = 1 : i64, tpu.core_type = #tpu.core_type<tc>, window_params = [{transform_indices = @transform_0, window_bounds = array<i64: 1, 24, 128>}, {transform_indices = @transform_1, window_bounds = array<i64: 1, 24, 128>}, {transform_indices = @transform_2, window_bounds = array<i64: 1, 24, 128>}, {pipeline_mode = #tpu.pipeline_mode<synchronous>, transform_indices = @transform_3, window_bounds = array<i64: 3, 4, 128>}, {pipeline_mode = #tpu.pipeline_mode<synchronous>, transform_indices = @transform_4, window_bounds = array<i64: 4, 128>}, {pipeline_mode = #tpu.pipeline_mode<synchronous>, transform_indices = @transform_5, window_bounds = array<i64: 4, 128>}, {pipeline_mode = #tpu.pipeline_mode<synchronous>, transform_indices = @transform_6, window_bounds = array<i64: 4, 128>}, {transform_indices = @transform_7, window_bounds = array<i64: 512, 256>}, {transform_indices = @transform_8, window_bounds = array<i64: 1, 24, 512>}, {transform_indices = @transform_9, window_bounds = array<i64: 1, 24, 256>}]} {
    %c0_i32 = arith.constant 0 : i32
    %0 = arith.cmpi eq, %arg1, %c0_i32 : i32
    %1 = arith.extui %0 : i1 to i32
    %c0_i32_0 = arith.constant 0 : i32
    %2 = arith.cmpi ne, %1, %c0_i32_0 : i32
    scf.if %2 {
      %c0_7 = arith.constant 0 : index
      %c0_8 = arith.constant 0 : index
      %c0_9 = arith.constant 0 : index
      %9 = vector.load %arg2[%c0_7, %c0_8, %c0_9] : memref<1x24x128xf32, #tpu.memory_space<vmem>>, vector<1x24x128xf32>
      %10 = vector.shape_cast %9 : vector<1x24x128xf32> to vector<24x128xf32>
      %c0_10 = arith.constant 0 : index
      %c0_11 = arith.constant 0 : index
      %c0_12 = arith.constant 0 : index
      %11 = vector.load %arg3[%c0_10, %c0_11, %c0_12] : memref<1x24x128xf32, #tpu.memory_space<vmem>>, vector<1x24x128xf32>
      %12 = vector.shape_cast %11 : vector<1x24x128xf32> to vector<24x128xf32>
      %c0_13 = arith.constant 0 : index
      %c0_14 = arith.constant 0 : index
      %c0_15 = arith.constant 0 : index
      %13 = vector.load %arg4[%c0_13, %c0_14, %c0_15] : memref<1x24x128xf32, #tpu.memory_space<vmem>>, vector<1x24x128xf32>
      %14 = vector.shape_cast %13 : vector<1x24x128xf32> to vector<24x128xf32>
      %c0_16 = arith.constant 0 : index
      %c0_17 = arith.constant 0 : index
      %c0_18 = arith.constant 0 : index
      %15 = vector.load %arg5[%c0_16, %c0_17, %c0_18] : memref<3x4x128xf32, #tpu.memory_space<vmem>>, vector<3x4x128xf32>
      %c0_19 = arith.constant 0 : index
      %c0_20 = arith.constant 0 : index
      %16 = vector.load %arg6[%c0_19, %c0_20] : memref<4x128xf32, #tpu.memory_space<vmem>>, vector<4x128xf32>
      %c0_21 = arith.constant 0 : index
      %c0_22 = arith.constant 0 : index
      %17 = vector.load %arg7[%c0_21, %c0_22] : memref<4x128xf32, #tpu.memory_space<vmem>>, vector<4x128xf32>
      %c0_23 = arith.constant 0 : index
      %c0_24 = arith.constant 0 : index
      %18 = vector.load %arg8[%c0_23, %c0_24] : memref<4x128xf32, #tpu.memory_space<vmem>>, vector<4x128xf32>
      %19 = vector.extract_strided_slice %10 {offsets = [0, 0], sizes = [8, 128], strides = [1, 1]} : vector<24x128xf32> to vector<8x128xf32>
      %20 = vector.extract_strided_slice %10 {offsets = [8, 0], sizes = [8, 128], strides = [1, 1]} : vector<24x128xf32> to vector<8x128xf32>
      %21 = vector.extract_strided_slice %10 {offsets = [16, 0], sizes = [8, 128], strides = [1, 1]} : vector<24x128xf32> to vector<8x128xf32>
      %22 = vector.extract_strided_slice %12 {offsets = [0, 0], sizes = [8, 128], strides = [1, 1]} : vector<24x128xf32> to vector<8x128xf32>
      %23 = vector.extract_strided_slice %12 {offsets = [8, 0], sizes = [8, 128], strides = [1, 1]} : vector<24x128xf32> to vector<8x128xf32>
      %24 = vector.extract_strided_slice %12 {offsets = [16, 0], sizes = [8, 128], strides = [1, 1]} : vector<24x128xf32> to vector<8x128xf32>
      %25 = vector.extract_strided_slice %14 {offsets = [0, 0], sizes = [8, 128], strides = [1, 1]} : vector<24x128xf32> to vector<8x128xf32>
      %26 = vector.extract_strided_slice %14 {offsets = [8, 0], sizes = [8, 128], strides = [1, 1]} : vector<24x128xf32> to vector<8x128xf32>
      %27 = vector.extract_strided_slice %14 {offsets = [16, 0], sizes = [8, 128], strides = [1, 1]} : vector<24x128xf32> to vector<8x128xf32>
      %28 = arith.mulf %20, %24 : vector<8x128xf32>
      %29 = arith.mulf %21, %23 : vector<8x128xf32>
      %30 = arith.subf %28, %29 : vector<8x128xf32>
      %31 = arith.mulf %21, %22 : vector<8x128xf32>
      %32 = arith.mulf %19, %24 : vector<8x128xf32>
      %33 = arith.subf %31, %32 : vector<8x128xf32>
      %34 = arith.mulf %19, %23 : vector<8x128xf32>
      %35 = arith.mulf %20, %22 : vector<8x128xf32>
      %36 = arith.subf %34, %35 : vector<8x128xf32>
      %37 = vector.extract_strided_slice %15 {offsets = [0, 0, 0], sizes = [1, 1, 128], strides = [1, 1, 1]} : vector<3x4x128xf32> to vector<1x1x128xf32>
      %38 = vector.shape_cast %37 : vector<1x1x128xf32> to vector<1x128xf32>
      %39 = vector.extract_strided_slice %15 {offsets = [1, 0, 0], sizes = [1, 1, 128], strides = [1, 1, 1]} : vector<3x4x128xf32> to vector<1x1x128xf32>
      %40 = vector.shape_cast %39 : vector<1x1x128xf32> to vector<1x128xf32>
      %41 = vector.extract_strided_slice %15 {offsets = [2, 0, 0], sizes = [1, 1, 128], strides = [1, 1, 1]} : vector<3x4x128xf32> to vector<1x1x128xf32>
      %42 = vector.shape_cast %41 : vector<1x1x128xf32> to vector<1x128xf32>
      %43 = vector.broadcast %38 : vector<1x128xf32> to vector<8x128xf32>
      %44 = arith.mulf %43, %19 : vector<8x128xf32>
      %45 = vector.broadcast %40 : vector<1x128xf32> to vector<8x128xf32>
      %46 = arith.mulf %45, %22 : vector<8x128xf32>
      %47 = arith.addf %44, %46 : vector<8x128xf32>
      %48 = vector.broadcast %42 : vector<1x128xf32> to vector<8x128xf32>
      %49 = arith.mulf %48, %30 : vector<8x128xf32>
      %50 = arith.addf %47, %49 : vector<8x128xf32>
      %51 = vector.broadcast %38 : vector<1x128xf32> to vector<8x128xf32>
      %52 = arith.mulf %51, %20 : vector<8x128xf32>
      %53 = vector.broadcast %40 : vector<1x128xf32> to vector<8x128xf32>
      %54 = arith.mulf %53, %23 : vector<8x128xf32>
      %55 = arith.addf %52, %54 : vector<8x128xf32>
      %56 = vector.broadcast %42 : vector<1x128xf32> to vector<8x128xf32>
      %57 = arith.mulf %56, %33 : vector<8x128xf32>
      %58 = arith.addf %55, %57 : vector<8x128xf32>
      %59 = vector.broadcast %38 : vector<1x128xf32> to vector<8x128xf32>
      %60 = arith.mulf %59, %21 : vector<8x128xf32>
      %61 = vector.broadcast %40 : vector<1x128xf32> to vector<8x128xf32>
      %62 = arith.mulf %61, %24 : vector<8x128xf32>
      %63 = arith.addf %60, %62 : vector<8x128xf32>
      %64 = vector.broadcast %42 : vector<1x128xf32> to vector<8x128xf32>
      %65 = arith.mulf %64, %36 : vector<8x128xf32>
      %66 = arith.addf %63, %65 : vector<8x128xf32>
      %67 = arith.mulf %50, %50 : vector<8x128xf32>
      %68 = arith.mulf %58, %58 : vector<8x128xf32>
      %69 = arith.addf %67, %68 : vector<8x128xf32>
      %70 = arith.mulf %66, %66 : vector<8x128xf32>
      %71 = arith.addf %69, %70 : vector<8x128xf32>
      %cst_25 = arith.constant 1.000000e-30 : f32
      %72 = vector.broadcast %cst_25 : f32 to vector<8x128xf32>
      %73 = arith.maximumf %71, %72 : vector<8x128xf32>
      %74 = math.rsqrt %73 : vector<8x128xf32>
      %75 = arith.mulf %50, %74 : vector<8x128xf32>
      %76 = arith.mulf %58, %74 : vector<8x128xf32>
      %77 = arith.mulf %66, %74 : vector<8x128xf32>
      %c0_26 = arith.constant 0 : index
      %c0_27 = arith.constant 0 : index
      %c0_28 = arith.constant 0 : index
      %78 = vector.load %arg10[%c0_26, %c0_27, %c0_28] : memref<1x24x512xf32, #tpu.memory_space<vmem>>, vector<1x8x128xf32>
      %79 = vector.shape_cast %78 : vector<1x8x128xf32> to vector<8x128xf32>
      %80 = vector.shape_cast %75 : vector<8x128xf32> to vector<1x8x128xf32>
      tpu.vector_store %arg10[%c0_26, %c0_27, %c0_28], %80 {strides = array<i32>} : memref<1x24x512xf32, #tpu.memory_space<vmem>>, vector<1x8x128xf32>,
      %c0_29 = arith.constant 0 : index
      %c8 = arith.constant 8 : index
      %c0_30 = arith.constant 0 : index
      %81 = vector.load %arg10[%c0_29, %c8, %c0_30] : memref<1x24x512xf32, #tpu.memory_space<vmem>>, vector<1x8x128xf32>
      %82 = vector.shape_cast %81 : vector<1x8x128xf32> to vector<8x128xf32>
      %83 = vector.shape_cast %76 : vector<8x128xf32> to vector<1x8x128xf32>
      tpu.vector_store %arg10[%c0_29, %c8, %c0_30], %83 {strides = array<i32>} : memref<1x24x512xf32, #tpu.memory_space<vmem>>, vector<1x8x128xf32>,
      %c0_31 = arith.constant 0 : index
      %c16 = arith.constant 16 : index
      %c0_32 = arith.constant 0 : index
      %84 = vector.load %arg10[%c0_31, %c16, %c0_32] : memref<1x24x512xf32, #tpu.memory_space<vmem>>, vector<1x8x128xf32>
      %85 = vector.shape_cast %84 : vector<1x8x128xf32> to vector<8x128xf32>
      %86 = vector.shape_cast %77 : vector<8x128xf32> to vector<1x8x128xf32>
      tpu.vector_store %arg10[%c0_31, %c16, %c0_32], %86 {strides = array<i32>} : memref<1x24x512xf32, #tpu.memory_space<vmem>>, vector<1x8x128xf32>,
      %87 = vector.extract_strided_slice %16 {offsets = [0, 0], sizes = [1, 128], strides = [1, 1]} : vector<4x128xf32> to vector<1x128xf32>
      %88 = vector.extract_strided_slice %17 {offsets = [0, 0], sizes = [1, 128], strides = [1, 1]} : vector<4x128xf32> to vector<1x128xf32>
      %89 = vector.broadcast %88 : vector<1x128xf32> to vector<8x128xf32>
      %90 = arith.mulf %89, %75 : vector<8x128xf32>
      %91 = vector.broadcast %88 : vector<1x128xf32> to vector<8x128xf32>
      %92 = arith.mulf %91, %76 : vector<8x128xf32>
      %93 = vector.broadcast %88 : vector<1x128xf32> to vector<8x128xf32>
      %94 = arith.mulf %93, %77 : vector<8x128xf32>
      %95 = arith.mulf %92, %21 : vector<8x128xf32>
      %96 = arith.mulf %94, %20 : vector<8x128xf32>
      %97 = arith.subf %95, %96 : vector<8x128xf32>
      %98 = arith.mulf %94, %19 : vector<8x128xf32>
      %99 = arith.mulf %90, %21 : vector<8x128xf32>
      %100 = arith.subf %98, %99 : vector<8x128xf32>
      %101 = arith.mulf %90, %20 : vector<8x128xf32>
      %102 = arith.mulf %92, %19 : vector<8x128xf32>
      %103 = arith.subf %101, %102 : vector<8x128xf32>
      %104 = vector.broadcast %87 : vector<1x128xf32> to vector<8x128xf32>
      %105 = arith.mulf %104, %97 : vector<8x128xf32>
      %106 = arith.addf %19, %105 : vector<8x128xf32>
      %107 = arith.mulf %92, %103 : vector<8x128xf32>
      %108 = arith.mulf %94, %100 : vector<8x128xf32>
      %109 = arith.subf %107, %108 : vector<8x128xf32>
      %110 = arith.addf %106, %109 : vector<8x128xf32>
      %111 = vector.broadcast %87 : vector<1x128xf32> to vector<8x128xf32>
      %112 = arith.mulf %111, %100 : vector<8x128xf32>
      %113 = arith.addf %20, %112 : vector<8x128xf32>
      %114 = arith.mulf %94, %97 : vector<8x128xf32>
      %115 = arith.mulf %90, %103 : vector<8x128xf32>
      %116 = arith.subf %114, %115 : vector<8x128xf32>
      %117 = arith.addf %113, %116 : vector<8x128xf32>
      %118 = vector.broadcast %87 : vector<1x128xf32> to vector<8x128xf32>
      %119 = arith.mulf %118, %103 : vector<8x128xf32>
      %120 = arith.addf %21, %119 : vector<8x128xf32>
      %121 = arith.mulf %90, %100 : vector<8x128xf32>
      %122 = arith.mulf %92, %97 : vector<8x128xf32>
      %123 = arith.subf %121, %122 : vector<8x128xf32>
      %124 = arith.addf %120, %123 : vector<8x128xf32>
      %125 = vector.extract_strided_slice %18 {offsets = [0, 0], sizes = [1, 128], strides = [1, 1]} : vector<4x128xf32> to vector<1x128xf32>
      %126 = vector.broadcast %125 : vector<1x128xf32> to vector<8x128xf32>
      %127 = arith.mulf %126, %110 : vector<8x128xf32>
      %128 = arith.addf %127, %25 : vector<8x128xf32>
      %c0_33 = arith.constant 0 : index
      %c0_34 = arith.constant 0 : index
      %129 = vector.load %arg12[%c0_33, %c0_34] : memref<24x512xf32, #tpu.memory_space<vmem>>, vector<8x128xf32>
      tpu.vector_store %arg12[%c0_33, %c0_34], %128 {strides = array<i32>} : memref<24x512xf32, #tpu.memory_space<vmem>>, vector<8x128xf32>,
      %130 = vector.broadcast %125 : vector<1x128xf32> to vector<8x128xf32>
      %131 = arith.mulf %130, %117 : vector<8x128xf32>
      %132 = arith.addf %131, %26 : vector<8x128xf32>
      %c8_35 = arith.constant 8 : index
      %c0_36 = arith.constant 0 : index
      %133 = vector.load %arg12[%c8_35, %c0_36] : memref<24x512xf32, #tpu.memory_space<vmem>>, vector<8x128xf32>
      tpu.vector_store %arg12[%c8_35, %c0_36], %132 {strides = array<i32>} : memref<24x512xf32, #tpu.memory_space<vmem>>, vector<8x128xf32>,
      %134 = vector.broadcast %125 : vector<1x128xf32> to vector<8x128xf32>
      %135 = arith.mulf %134, %124 : vector<8x128xf32>
      %136 = arith.addf %135, %27 : vector<8x128xf32>
      %c16_37 = arith.constant 16 : index
      %c0_38 = arith.constant 0 : index
      %137 = vector.load %arg12[%c16_37, %c0_38] : memref<24x512xf32, #tpu.memory_space<vmem>>, vector<8x128xf32>
      tpu.vector_store %arg12[%c16_37, %c0_38], %136 {strides = array<i32>} : memref<24x512xf32, #tpu.memory_space<vmem>>, vector<8x128xf32>,
      %138 = vector.extract_strided_slice %15 {offsets = [0, 1, 0], sizes = [1, 1, 128], strides = [1, 1, 1]} : vector<3x4x128xf32> to vector<1x1x128xf32>
      %139 = vector.shape_cast %138 : vector<1x1x128xf32> to vector<1x128xf32>
      %140 = vector.extract_strided_slice %15 {offsets = [1, 1, 0], sizes = [1, 1, 128], strides = [1, 1, 1]} : vector<3x4x128xf32> to vector<1x1x128xf32>
      %141 = vector.shape_cast %140 : vector<1x1x128xf32> to vector<1x128xf32>
      %142 = vector.extract_strided_slice %15 {offsets = [2, 1, 0], sizes = [1, 1, 128], strides = [1, 1, 1]} : vector<3x4x128xf32> to vector<1x1x128xf32>
      %143 = vector.shape_cast %142 : vector<1x1x128xf32> to vector<1x128xf32>
      %144 = vector.broadcast %139 : vector<1x128xf32> to vector<8x128xf32>
      %145 = arith.mulf %144, %19 : vector<8x128xf32>
      %146 = vector.broadcast %141 : vector<1x128xf32> to vector<8x128xf32>
      %147 = arith.mulf %146, %22 : vector<8x128xf32>
      %148 = arith.addf %145, %147 : vector<8x128xf32>
      %149 = vector.broadcast %143 : vector<1x128xf32> to vector<8x128xf32>
      %150 = arith.mulf %149, %30 : vector<8x128xf32>
      %151 = arith.addf %148, %150 : vector<8x128xf32>
      %152 = vector.broadcast %139 : vector<1x128xf32> to vector<8x128xf32>
      %153 = arith.mulf %152, %20 : vector<8x128xf32>
      %154 = vector.broadcast %141 : vector<1x128xf32> to vector<8x128xf32>
      %155 = arith.mulf %154, %23 : vector<8x128xf32>
      %156 = arith.addf %153, %155 : vector<8x128xf32>
      %157 = vector.broadcast %143 : vector<1x128xf32> to vector<8x128xf32>
      %158 = arith.mulf %157, %33 : vector<8x128xf32>
      %159 = arith.addf %156, %158 : vector<8x128xf32>
      %160 = vector.broadcast %139 : vector<1x128xf32> to vector<8x128xf32>
      %161 = arith.mulf %160, %21 : vector<8x128xf32>
      %162 = vector.broadcast %141 : vector<1x128xf32> to vector<8x128xf32>
      %163 = arith.mulf %162, %24 : vector<8x128xf32>
      %164 = arith.addf %161, %163 : vector<8x128xf32>
      %165 = vector.broadcast %143 : vector<1x128xf32> to vector<8x128xf32>
      %166 = arith.mulf %165, %36 : vector<8x128xf32>
      %167 = arith.addf %164, %166 : vector<8x128xf32>
      %168 = arith.mulf %151, %151 : vector<8x128xf32>
      %169 = arith.mulf %159, %159 : vector<8x128xf32>
      %170 = arith.addf %168, %169 : vector<8x128xf32>
      %171 = arith.mulf %167, %167 : vector<8x128xf32>
      %172 = arith.addf %170, %171 : vector<8x128xf32>
      %cst_39 = arith.constant 1.000000e-30 : f32
      %173 = vector.broadcast %cst_39 : f32 to vector<8x128xf32>
      %174 = arith.maximumf %172, %173 : vector<8x128xf32>
      %175 = math.rsqrt %174 : vector<8x128xf32>
      %176 = arith.mulf %151, %175 : vector<8x128xf32>
      %177 = arith.mulf %159, %175 : vector<8x128xf32>
      %178 = arith.mulf %167, %175 : vector<8x128xf32>
      %c0_40 = arith.constant 0 : index
      %c0_41 = arith.constant 0 : index
      %c128 = arith.constant 128 : index
      %179 = vector.load %arg10[%c0_40, %c0_41, %c128] : memref<1x24x512xf32, #tpu.memory_space<vmem>>, vector<1x8x128xf32>
      %180 = vector.shape_cast %179 : vector<1x8x128xf32> to vector<8x128xf32>
      %181 = vector.shape_cast %176 : vector<8x128xf32> to vector<1x8x128xf32>
      tpu.vector_store %arg10[%c0_40, %c0_41, %c128], %181 {strides = array<i32>} : memref<1x24x512xf32, #tpu.memory_space<vmem>>, vector<1x8x128xf32>,
      %c0_42 = arith.constant 0 : index
      %c8_43 = arith.constant 8 : index
      %c128_44 = arith.constant 128 : index
      %182 = vector.load %arg10[%c0_42, %c8_43, %c128_44] : memref<1x24x512xf32, #tpu.memory_space<vmem>>, vector<1x8x128xf32>
      %183 = vector.shape_cast %182 : vector<1x8x128xf32> to vector<8x128xf32>
      %184 = vector.shape_cast %177 : vector<8x128xf32> to vector<1x8x128xf32>
      tpu.vector_store %arg10[%c0_42, %c8_43, %c128_44], %184 {strides = array<i32>} : memref<1x24x512xf32, #tpu.memory_space<vmem>>, vector<1x8x128xf32>,
      %c0_45 = arith.constant 0 : index
      %c16_46 = arith.constant 16 : index
      %c128_47 = arith.constant 128 : index
      %185 = vector.load %arg10[%c0_45, %c16_46, %c128_47] : memref<1x24x512xf32, #tpu.memory_space<vmem>>, vector<1x8x128xf32>
      %186 = vector.shape_cast %185 : vector<1x8x128xf32> to vector<8x128xf32>
      %187 = vector.shape_cast %178 : vector<8x128xf32> to vector<1x8x128xf32>
      tpu.vector_store %arg10[%c0_45, %c16_46, %c128_47], %187 {strides = array<i32>} : memref<1x24x512xf32, #tpu.memory_space<vmem>>, vector<1x8x128xf32>,
      %188 = vector.extract_strided_slice %16 {offsets = [1, 0], sizes = [1, 128], strides = [1, 1]} : vector<4x128xf32> to vector<1x128xf32>
      %189 = vector.extract_strided_slice %17 {offsets = [1, 0], sizes = [1, 128], strides = [1, 1]} : vector<4x128xf32> to vector<1x128xf32>
      %190 = vector.broadcast %189 : vector<1x128xf32> to vector<8x128xf32>
      %191 = arith.mulf %190, %176 : vector<8x128xf32>
      %192 = vector.broadcast %189 : vector<1x128xf32> to vector<8x128xf32>
      %193 = arith.mulf %192, %177 : vector<8x128xf32>
      %194 = vector.broadcast %189 : vector<1x128xf32> to vector<8x128xf32>
      %195 = arith.mulf %194, %178 : vector<8x128xf32>
      %196 = arith.mulf %193, %21 : vector<8x128xf32>
      %197 = arith.mulf %195, %20 : vector<8x128xf32>
      %198 = arith.subf %196, %197 : vector<8x128xf32>
      %199 = arith.mulf %195, %19 : vector<8x128xf32>
      %200 = arith.mulf %191, %21 : vector<8x128xf32>
      %201 = arith.subf %199, %200 : vector<8x128xf32>
      %202 = arith.mulf %191, %20 : vector<8x128xf32>
      %203 = arith.mulf %193, %19 : vector<8x128xf32>
      %204 = arith.subf %202, %203 : vector<8x128xf32>
      %205 = vector.broadcast %188 : vector<1x128xf32> to vector<8x128xf32>
      %206 = arith.mulf %205, %198 : vector<8x128xf32>
      %207 = arith.addf %19, %206 : vector<8x128xf32>
      %208 = arith.mulf %193, %204 : vector<8x128xf32>
      %209 = arith.mulf %195, %201 : vector<8x128xf32>
      %210 = arith.subf %208, %209 : vector<8x128xf32>
      %211 = arith.addf %207, %210 : vector<8x128xf32>
      %212 = vector.broadcast %188 : vector<1x128xf32> to vector<8x128xf32>
      %213 = arith.mulf %212, %201 : vector<8x128xf32>
      %214 = arith.addf %20, %213 : vector<8x128xf32>
      %215 = arith.mulf %195, %198 : vector<8x128xf32>
      %216 = arith.mulf %191, %204 : vector<8x128xf32>
      %217 = arith.subf %215, %216 : vector<8x128xf32>
      %218 = arith.addf %214, %217 : vector<8x128xf32>
      %219 = vector.broadcast %188 : vector<1x128xf32> to vector<8x128xf32>
      %220 = arith.mulf %219, %204 : vector<8x128xf32>
      %221 = arith.addf %21, %220 : vector<8x128xf32>
      %222 = arith.mulf %191, %201 : vector<8x128xf32>
      %223 = arith.mulf %193, %198 : vector<8x128xf32>
      %224 = arith.subf %222, %223 : vector<8x128xf32>
      %225 = arith.addf %221, %224 : vector<8x128xf32>
      %226 = vector.extract_strided_slice %18 {offsets = [1, 0], sizes = [1, 128], strides = [1, 1]} : vector<4x128xf32> to vector<1x128xf32>
      %227 = vector.broadcast %226 : vector<1x128xf32> to vector<8x128xf32>
      %228 = arith.mulf %227, %211 : vector<8x128xf32>
      %229 = arith.addf %228, %25 : vector<8x128xf32>
      %c0_48 = arith.constant 0 : index
      %c128_49 = arith.constant 128 : index
      %230 = vector.load %arg12[%c0_48, %c128_49] : memref<24x512xf32, #tpu.memory_space<vmem>>, vector<8x128xf32>
      tpu.vector_store %arg12[%c0_48, %c128_49], %229 {strides = array<i32>} : memref<24x512xf32, #tpu.memory_space<vmem>>, vector<8x128xf32>,
      %231 = vector.broadcast %226 : vector<1x128xf32> to vector<8x128xf32>
      %232 = arith.mulf %231, %218 : vector<8x128xf32>
      %233 = arith.addf %232, %26 : vector<8x128xf32>
      %c8_50 = arith.constant 8 : index
      %c128_51 = arith.constant 128 : index
      %234 = vector.load %arg12[%c8_50, %c128_51] : memref<24x512xf32, #tpu.memory_space<vmem>>, vector<8x128xf32>
      tpu.vector_store %arg12[%c8_50, %c128_51], %233 {strides = array<i32>} : memref<24x512xf32, #tpu.memory_space<vmem>>, vector<8x128xf32>,
      %235 = vector.broadcast %226 : vector<1x128xf32> to vector<8x128xf32>
      %236 = arith.mulf %235, %225 : vector<8x128xf32>
      %237 = arith.addf %236, %27 : vector<8x128xf32>
      %c16_52 = arith.constant 16 : index
      %c128_53 = arith.constant 128 : index
      %238 = vector.load %arg12[%c16_52, %c128_53] : memref<24x512xf32, #tpu.memory_space<vmem>>, vector<8x128xf32>
      tpu.vector_store %arg12[%c16_52, %c128_53], %237 {strides = array<i32>} : memref<24x512xf32, #tpu.memory_space<vmem>>, vector<8x128xf32>,
      %239 = vector.extract_strided_slice %15 {offsets = [0, 2, 0], sizes = [1, 1, 128], strides = [1, 1, 1]} : vector<3x4x128xf32> to vector<1x1x128xf32>
      %240 = vector.shape_cast %239 : vector<1x1x128xf32> to vector<1x128xf32>
      %241 = vector.extract_strided_slice %15 {offsets = [1, 2, 0], sizes = [1, 1, 128], strides = [1, 1, 1]} : vector<3x4x128xf32> to vector<1x1x128xf32>
      %242 = vector.shape_cast %241 : vector<1x1x128xf32> to vector<1x128xf32>
      %243 = vector.extract_strided_slice %15 {offsets = [2, 2, 0], sizes = [1, 1, 128], strides = [1, 1, 1]} : vector<3x4x128xf32> to vector<1x1x128xf32>
      %244 = vector.shape_cast %243 : vector<1x1x128xf32> to vector<1x128xf32>
      %245 = vector.broadcast %240 : vector<1x128xf32> to vector<8x128xf32>
      %246 = arith.mulf %245, %19 : vector<8x128xf32>
      %247 = vector.broadcast %242 : vector<1x128xf32> to vector<8x128xf32>
      %248 = arith.mulf %247, %22 : vector<8x128xf32>
      %249 = arith.addf %246, %248 : vector<8x128xf32>
      %250 = vector.broadcast %244 : vector<1x128xf32> to vector<8x128xf32>
      %251 = arith.mulf %250, %30 : vector<8x128xf32>
      %252 = arith.addf %249, %251 : vector<8x128xf32>
      %253 = vector.broadcast %240 : vector<1x128xf32> to vector<8x128xf32>
      %254 = arith.mulf %253, %20 : vector<8x128xf32>
      %255 = vector.broadcast %242 : vector<1x128xf32> to vector<8x128xf32>
      %256 = arith.mulf %255, %23 : vector<8x128xf32>
      %257 = arith.addf %254, %256 : vector<8x128xf32>
      %258 = vector.broadcast %244 : vector<1x128xf32> to vector<8x128xf32>
      %259 = arith.mulf %258, %33 : vector<8x128xf32>
      %260 = arith.addf %257, %259 : vector<8x128xf32>
      %261 = vector.broadcast %240 : vector<1x128xf32> to vector<8x128xf32>
      %262 = arith.mulf %261, %21 : vector<8x128xf32>
      %263 = vector.broadcast %242 : vector<1x128xf32> to vector<8x128xf32>
      %264 = arith.mulf %263, %24 : vector<8x128xf32>
      %265 = arith.addf %262, %264 : vector<8x128xf32>
      %266 = vector.broadcast %244 : vector<1x128xf32> to vector<8x128xf32>
      %267 = arith.mulf %266, %36 : vector<8x128xf32>
      %268 = arith.addf %265, %267 : vector<8x128xf32>
      %269 = arith.mulf %252, %252 : vector<8x128xf32>
      %270 = arith.mulf %260, %260 : vector<8x128xf32>
      %271 = arith.addf %269, %270 : vector<8x128xf32>
      %272 = arith.mulf %268, %268 : vector<8x128xf32>
      %273 = arith.addf %271, %272 : vector<8x128xf32>
      %cst_54 = arith.constant 1.000000e-30 : f32
      %274 = vector.broadcast %cst_54 : f32 to vector<8x128xf32>
      %275 = arith.maximumf %273, %274 : vector<8x128xf32>
      %276 = math.rsqrt %275 : vector<8x128xf32>
      %277 = arith.mulf %252, %276 : vector<8x128xf32>
      %278 = arith.mulf %260, %276 : vector<8x128xf32>
      %279 = arith.mulf %268, %276 : vector<8x128xf32>
      %c0_55 = arith.constant 0 : index
      %c0_56 = arith.constant 0 : index
      %c256 = arith.constant 256 : index
      %280 = vector.load %arg10[%c0_55, %c0_56, %c256] : memref<1x24x512xf32, #tpu.memory_space<vmem>>, vector<1x8x128xf32>
      %281 = vector.shape_cast %280 : vector<1x8x128xf32> to vector<8x128xf32>
      %282 = vector.shape_cast %277 : vector<8x128xf32> to vector<1x8x128xf32>
      tpu.vector_store %arg10[%c0_55, %c0_56, %c256], %282 {strides = array<i32>} : memref<1x24x512xf32, #tpu.memory_space<vmem>>, vector<1x8x128xf32>,
      %c0_57 = arith.constant 0 : index
      %c8_58 = arith.constant 8 : index
      %c256_59 = arith.constant 256 : index
      %283 = vector.load %arg10[%c0_57, %c8_58, %c256_59] : memref<1x24x512xf32, #tpu.memory_space<vmem>>, vector<1x8x128xf32>
      %284 = vector.shape_cast %283 : vector<1x8x128xf32> to vector<8x128xf32>
      %285 = vector.shape_cast %278 : vector<8x128xf32> to vector<1x8x128xf32>
      tpu.vector_store %arg10[%c0_57, %c8_58, %c256_59], %285 {strides = array<i32>} : memref<1x24x512xf32, #tpu.memory_space<vmem>>, vector<1x8x128xf32>,
      %c0_60 = arith.constant 0 : index
      %c16_61 = arith.constant 16 : index
      %c256_62 = arith.constant 256 : index
      %286 = vector.load %arg10[%c0_60, %c16_61, %c256_62] : memref<1x24x512xf32, #tpu.memory_space<vmem>>, vector<1x8x128xf32>
      %287 = vector.shape_cast %286 : vector<1x8x128xf32> to vector<8x128xf32>
      %288 = vector.shape_cast %279 : vector<8x128xf32> to vector<1x8x128xf32>
      tpu.vector_store %arg10[%c0_60, %c16_61, %c256_62], %288 {strides = array<i32>} : memref<1x24x512xf32, #tpu.memory_space<vmem>>, vector<1x8x128xf32>,
      %289 = vector.extract_strided_slice %16 {offsets = [2, 0], sizes = [1, 128], strides = [1, 1]} : vector<4x128xf32> to vector<1x128xf32>
      %290 = vector.extract_strided_slice %17 {offsets = [2, 0], sizes = [1, 128], strides = [1, 1]} : vector<4x128xf32> to vector<1x128xf32>
      %291 = vector.broadcast %290 : vector<1x128xf32> to vector<8x128xf32>
      %292 = arith.mulf %291, %277 : vector<8x128xf32>
      %293 = vector.broadcast %290 : vector<1x128xf32> to vector<8x128xf32>
      %294 = arith.mulf %293, %278 : vector<8x128xf32>
      %295 = vector.broadcast %290 : vector<1x128xf32> to vector<8x128xf32>
      %296 = arith.mulf %295, %279 : vector<8x128xf32>
      %297 = arith.mulf %294, %21 : vector<8x128xf32>
      %298 = arith.mulf %296, %20 : vector<8x128xf32>
      %299 = arith.subf %297, %298 : vector<8x128xf32>
      %300 = arith.mulf %296, %19 : vector<8x128xf32>
      %301 = arith.mulf %292, %21 : vector<8x128xf32>
      %302 = arith.subf %300, %301 : vector<8x128xf32>
      %303 = arith.mulf %292, %20 : vector<8x128xf32>
      %304 = arith.mulf %294, %19 : vector<8x128xf32>
      %305 = arith.subf %303, %304 : vector<8x128xf32>
      %306 = vector.broadcast %289 : vector<1x128xf32> to vector<8x128xf32>
      %307 = arith.mulf %306, %299 : vector<8x128xf32>
      %308 = arith.addf %19, %307 : vector<8x128xf32>
      %309 = arith.mulf %294, %305 : vector<8x128xf32>
      %310 = arith.mulf %296, %302 : vector<8x128xf32>
      %311 = arith.subf %309, %310 : vector<8x128xf32>
      %312 = arith.addf %308, %311 : vector<8x128xf32>
      %313 = vector.broadcast %289 : vector<1x128xf32> to vector<8x128xf32>
      %314 = arith.mulf %313, %302 : vector<8x128xf32>
      %315 = arith.addf %20, %314 : vector<8x128xf32>
      %316 = arith.mulf %296, %299 : vector<8x128xf32>
      %317 = arith.mulf %292, %305 : vector<8x128xf32>
      %318 = arith.subf %316, %317 : vector<8x128xf32>
      %319 = arith.addf %315, %318 : vector<8x128xf32>
      %320 = vector.broadcast %289 : vector<1x128xf32> to vector<8x128xf32>
      %321 = arith.mulf %320, %305 : vector<8x128xf32>
      %322 = arith.addf %21, %321 : vector<8x128xf32>
      %323 = arith.mulf %292, %302 : vector<8x128xf32>
      %324 = arith.mulf %294, %299 : vector<8x128xf32>
      %325 = arith.subf %323, %324 : vector<8x128xf32>
      %326 = arith.addf %322, %325 : vector<8x128xf32>
      %327 = vector.extract_strided_slice %18 {offsets = [2, 0], sizes = [1, 128], strides = [1, 1]} : vector<4x128xf32> to vector<1x128xf32>
      %328 = vector.broadcast %327 : vector<1x128xf32> to vector<8x128xf32>
      %329 = arith.mulf %328, %312 : vector<8x128xf32>
      %330 = arith.addf %329, %25 : vector<8x128xf32>
      %c0_63 = arith.constant 0 : index
      %c256_64 = arith.constant 256 : index
      %331 = vector.load %arg12[%c0_63, %c256_64] : memref<24x512xf32, #tpu.memory_space<vmem>>, vector<8x128xf32>
      tpu.vector_store %arg12[%c0_63, %c256_64], %330 {strides = array<i32>} : memref<24x512xf32, #tpu.memory_space<vmem>>, vector<8x128xf32>,
      %332 = vector.broadcast %327 : vector<1x128xf32> to vector<8x128xf32>
      %333 = arith.mulf %332, %319 : vector<8x128xf32>
      %334 = arith.addf %333, %26 : vector<8x128xf32>
      %c8_65 = arith.constant 8 : index
      %c256_66 = arith.constant 256 : index
      %335 = vector.load %arg12[%c8_65, %c256_66] : memref<24x512xf32, #tpu.memory_space<vmem>>, vector<8x128xf32>
      tpu.vector_store %arg12[%c8_65, %c256_66], %334 {strides = array<i32>} : memref<24x512xf32, #tpu.memory_space<vmem>>, vector<8x128xf32>,
      %336 = vector.broadcast %327 : vector<1x128xf32> to vector<8x128xf32>
      %337 = arith.mulf %336, %326 : vector<8x128xf32>
      %338 = arith.addf %337, %27 : vector<8x128xf32>
      %c16_67 = arith.constant 16 : index
      %c256_68 = arith.constant 256 : index
      %339 = vector.load %arg12[%c16_67, %c256_68] : memref<24x512xf32, #tpu.memory_space<vmem>>, vector<8x128xf32>
      tpu.vector_store %arg12[%c16_67, %c256_68], %338 {strides = array<i32>} : memref<24x512xf32, #tpu.memory_space<vmem>>, vector<8x128xf32>,
      %340 = vector.extract_strided_slice %15 {offsets = [0, 3, 0], sizes = [1, 1, 128], strides = [1, 1, 1]} : vector<3x4x128xf32> to vector<1x1x128xf32>
      %341 = vector.shape_cast %340 : vector<1x1x128xf32> to vector<1x128xf32>
      %342 = vector.extract_strided_slice %15 {offsets = [1, 3, 0], sizes = [1, 1, 128], strides = [1, 1, 1]} : vector<3x4x128xf32> to vector<1x1x128xf32>
      %343 = vector.shape_cast %342 : vector<1x1x128xf32> to vector<1x128xf32>
      %344 = vector.extract_strided_slice %15 {offsets = [2, 3, 0], sizes = [1, 1, 128], strides = [1, 1, 1]} : vector<3x4x128xf32> to vector<1x1x128xf32>
      %345 = vector.shape_cast %344 : vector<1x1x128xf32> to vector<1x128xf32>
      %346 = vector.broadcast %341 : vector<1x128xf32> to vector<8x128xf32>
      %347 = arith.mulf %346, %19 : vector<8x128xf32>
      %348 = vector.broadcast %343 : vector<1x128xf32> to vector<8x128xf32>
      %349 = arith.mulf %348, %22 : vector<8x128xf32>
      %350 = arith.addf %347, %349 : vector<8x128xf32>
      %351 = vector.broadcast %345 : vector<1x128xf32> to vector<8x128xf32>
      %352 = arith.mulf %351, %30 : vector<8x128xf32>
      %353 = arith.addf %350, %352 : vector<8x128xf32>
      %354 = vector.broadcast %341 : vector<1x128xf32> to vector<8x128xf32>
      %355 = arith.mulf %354, %20 : vector<8x128xf32>
      %356 = vector.broadcast %343 : vector<1x128xf32> to vector<8x128xf32>
      %357 = arith.mulf %356, %23 : vector<8x128xf32>
      %358 = arith.addf %355, %357 : vector<8x128xf32>
      %359 = vector.broadcast %345 : vector<1x128xf32> to vector<8x128xf32>
      %360 = arith.mulf %359, %33 : vector<8x128xf32>
      %361 = arith.addf %358, %360 : vector<8x128xf32>
      %362 = vector.broadcast %341 : vector<1x128xf32> to vector<8x128xf32>
      %363 = arith.mulf %362, %21 : vector<8x128xf32>
      %364 = vector.broadcast %343 : vector<1x128xf32> to vector<8x128xf32>
      %365 = arith.mulf %364, %24 : vector<8x128xf32>
      %366 = arith.addf %363, %365 : vector<8x128xf32>
      %367 = vector.broadcast %345 : vector<1x128xf32> to vector<8x128xf32>
      %368 = arith.mulf %367, %36 : vector<8x128xf32>
      %369 = arith.addf %366, %368 : vector<8x128xf32>
      %370 = arith.mulf %353, %353 : vector<8x128xf32>
      %371 = arith.mulf %361, %361 : vector<8x128xf32>
      %372 = arith.addf %370, %371 : vector<8x128xf32>
      %373 = arith.mulf %369, %369 : vector<8x128xf32>
      %374 = arith.addf %372, %373 : vector<8x128xf32>
      %cst_69 = arith.constant 1.000000e-30 : f32
      %375 = vector.broadcast %cst_69 : f32 to vector<8x128xf32>
      %376 = arith.maximumf %374, %375 : vector<8x128xf32>
      %377 = math.rsqrt %376 : vector<8x128xf32>
      %378 = arith.mulf %353, %377 : vector<8x128xf32>
      %379 = arith.mulf %361, %377 : vector<8x128xf32>
      %380 = arith.mulf %369, %377 : vector<8x128xf32>
      %c0_70 = arith.constant 0 : index
      %c0_71 = arith.constant 0 : index
      %c384 = arith.constant 384 : index
      %381 = vector.load %arg10[%c0_70, %c0_71, %c384] : memref<1x24x512xf32, #tpu.memory_space<vmem>>, vector<1x8x128xf32>
      %382 = vector.shape_cast %381 : vector<1x8x128xf32> to vector<8x128xf32>
      %383 = vector.shape_cast %378 : vector<8x128xf32> to vector<1x8x128xf32>
      tpu.vector_store %arg10[%c0_70, %c0_71, %c384], %383 {strides = array<i32>} : memref<1x24x512xf32, #tpu.memory_space<vmem>>, vector<1x8x128xf32>,
      %c0_72 = arith.constant 0 : index
      %c8_73 = arith.constant 8 : index
      %c384_74 = arith.constant 384 : index
      %384 = vector.load %arg10[%c0_72, %c8_73, %c384_74] : memref<1x24x512xf32, #tpu.memory_space<vmem>>, vector<1x8x128xf32>
      %385 = vector.shape_cast %384 : vector<1x8x128xf32> to vector<8x128xf32>
      %386 = vector.shape_cast %379 : vector<8x128xf32> to vector<1x8x128xf32>
      tpu.vector_store %arg10[%c0_72, %c8_73, %c384_74], %386 {strides = array<i32>} : memref<1x24x512xf32, #tpu.memory_space<vmem>>, vector<1x8x128xf32>,
      %c0_75 = arith.constant 0 : index
      %c16_76 = arith.constant 16 : index
      %c384_77 = arith.constant 384 : index
      %387 = vector.load %arg10[%c0_75, %c16_76, %c384_77] : memref<1x24x512xf32, #tpu.memory_space<vmem>>, vector<1x8x128xf32>
      %388 = vector.shape_cast %387 : vector<1x8x128xf32> to vector<8x128xf32>
      %389 = vector.shape_cast %380 : vector<8x128xf32> to vector<1x8x128xf32>
      tpu.vector_store %arg10[%c0_75, %c16_76, %c384_77], %389 {strides = array<i32>} : memref<1x24x512xf32, #tpu.memory_space<vmem>>, vector<1x8x128xf32>,
      %390 = vector.extract_strided_slice %16 {offsets = [3, 0], sizes = [1, 128], strides = [1, 1]} : vector<4x128xf32> to vector<1x128xf32>
      %391 = vector.extract_strided_slice %17 {offsets = [3, 0], sizes = [1, 128], strides = [1, 1]} : vector<4x128xf32> to vector<1x128xf32>
      %392 = vector.broadcast %391 : vector<1x128xf32> to vector<8x128xf32>
      %393 = arith.mulf %392, %378 : vector<8x128xf32>
      %394 = vector.broadcast %391 : vector<1x128xf32> to vector<8x128xf32>
      %395 = arith.mulf %394, %379 : vector<8x128xf32>
      %396 = vector.broadcast %391 : vector<1x128xf32> to vector<8x128xf32>
      %397 = arith.mulf %396, %380 : vector<8x128xf32>
      %398 = arith.mulf %395, %21 : vector<8x128xf32>
      %399 = arith.mulf %397, %20 : vector<8x128xf32>
      %400 = arith.subf %398, %399 : vector<8x128xf32>
      %401 = arith.mulf %397, %19 : vector<8x128xf32>
      %402 = arith.mulf %393, %21 : vector<8x128xf32>
      %403 = arith.subf %401, %402 : vector<8x128xf32>
      %404 = arith.mulf %393, %20 : vector<8x128xf32>
      %405 = arith.mulf %395, %19 : vector<8x128xf32>
      %406 = arith.subf %404, %405 : vector<8x128xf32>
      %407 = vector.broadcast %390 : vector<1x128xf32> to vector<8x128xf32>
      %408 = arith.mulf %407, %400 : vector<8x128xf32>
      %409 = arith.addf %19, %408 : vector<8x128xf32>
      %410 = arith.mulf %395, %406 : vector<8x128xf32>
      %411 = arith.mulf %397, %403 : vector<8x128xf32>
      %412 = arith.subf %410, %411 : vector<8x128xf32>
      %413 = arith.addf %409, %412 : vector<8x128xf32>
      %414 = vector.broadcast %390 : vector<1x128xf32> to vector<8x128xf32>
      %415 = arith.mulf %414, %403 : vector<8x128xf32>
      %416 = arith.addf %20, %415 : vector<8x128xf32>
      %417 = arith.mulf %397, %400 : vector<8x128xf32>
      %418 = arith.mulf %393, %406 : vector<8x128xf32>
      %419 = arith.subf %417, %418 : vector<8x128xf32>
      %420 = arith.addf %416, %419 : vector<8x128xf32>
      %421 = vector.broadcast %390 : vector<1x128xf32> to vector<8x128xf32>
      %422 = arith.mulf %421, %406 : vector<8x128xf32>
      %423 = arith.addf %21, %422 : vector<8x128xf32>
      %424 = arith.mulf %393, %403 : vector<8x128xf32>
      %425 = arith.mulf %395, %400 : vector<8x128xf32>
      %426 = arith.subf %424, %425 : vector<8x128xf32>
      %427 = arith.addf %423, %426 : vector<8x128xf32>
      %428 = vector.extract_strided_slice %18 {offsets = [3, 0], sizes = [1, 128], strides = [1, 1]} : vector<4x128xf32> to vector<1x128xf32>
      %429 = vector.broadcast %428 : vector<1x128xf32> to vector<8x128xf32>
      %430 = arith.mulf %429, %413 : vector<8x128xf32>
      %431 = arith.addf %430, %25 : vector<8x128xf32>
      %c0_78 = arith.constant 0 : index
      %c384_79 = arith.constant 384 : index
      %432 = vector.load %arg12[%c0_78, %c384_79] : memref<24x512xf32, #tpu.memory_space<vmem>>, vector<8x128xf32>
      tpu.vector_store %arg12[%c0_78, %c384_79], %431 {strides = array<i32>} : memref<24x512xf32, #tpu.memory_space<vmem>>, vector<8x128xf32>,
      %433 = vector.broadcast %428 : vector<1x128xf32> to vector<8x128xf32>
      %434 = arith.mulf %433, %420 : vector<8x128xf32>
      %435 = arith.addf %434, %26 : vector<8x128xf32>
      %c8_80 = arith.constant 8 : index
      %c384_81 = arith.constant 384 : index
      %436 = vector.load %arg12[%c8_80, %c384_81] : memref<24x512xf32, #tpu.memory_space<vmem>>, vector<8x128xf32>
      tpu.vector_store %arg12[%c8_80, %c384_81], %435 {strides = array<i32>} : memref<24x512xf32, #tpu.memory_space<vmem>>, vector<8x128xf32>,
      %437 = vector.broadcast %428 : vector<1x128xf32> to vector<8x128xf32>
      %438 = arith.mulf %437, %427 : vector<8x128xf32>
      %439 = arith.addf %438, %27 : vector<8x128xf32>
      %c16_82 = arith.constant 16 : index
      %c384_83 = arith.constant 384 : index
      %440 = vector.load %arg12[%c16_82, %c384_83] : memref<24x512xf32, #tpu.memory_space<vmem>>, vector<8x128xf32>
      tpu.vector_store %arg12[%c16_82, %c384_83], %439 {strides = array<i32>} : memref<24x512xf32, #tpu.memory_space<vmem>>, vector<8x128xf32>,
    } else {
    }
    %c0 = arith.constant 0 : index
    %c0_1 = arith.constant 0 : index
    %3 = vector.load %arg12[%c0, %c0_1] : memref<24x512xf32, #tpu.memory_space<vmem>>, vector<24x512xf32>
    %c0_2 = arith.constant 0 : index
    %c0_3 = arith.constant 0 : index
    %4 = vector.load %arg9[%c0_2, %c0_3] : memref<512x256xf32, #tpu.memory_space<vmem>>, vector<512x256xf32>
    %cst = arith.constant dense<0.000000e+00> : vector<24x256xf32>
    %5 = tpu.matmul %3, %4, %cst {dimension_numbers = #tpu.dot_dimension_numbers<[1], [0], [0], [1], [0, 0, 1, 1], [], []>} : vector<24x512xf32>, vector<512x256xf32>, vector<24x256xf32> -> vector<24x256xf32>
    %c0_4 = arith.constant 0 : index
    %c0_5 = arith.constant 0 : index
    %c0_6 = arith.constant 0 : index
    %6 = vector.load %arg11[%c0_4, %c0_5, %c0_6] : memref<1x24x256xf32, #tpu.memory_space<vmem>>, vector<1x24x256xf32>
    %7 = vector.shape_cast %6 : vector<1x24x256xf32> to vector<24x256xf32>
    %8 = vector.shape_cast %5 : vector<24x256xf32> to vector<1x24x256xf32>
    tpu.vector_store %arg11[%c0_4, %c0_5, %c0_6], %8 {strides = array<i32>} : memref<1x24x256xf32, #tpu.memory_space<vmem>>, vector<1x24x256xf32>,
    return
  }
  func.func @transform_0(%arg0: i32, %arg1: i32) -> (i32, i32, i32) {
    %c0_i32 = arith.constant 0 : i32
    %c0_i32_0 = arith.constant 0 : i32
    %c0_i32_1 = arith.constant 0 : i32
    return %arg0, %c0_i32, %c0_i32_0 : i32, i32, i32
  }
  func.func @transform_1(%arg0: i32, %arg1: i32) -> (i32, i32, i32) {
    %c0_i32 = arith.constant 0 : i32
    %c0_i32_0 = arith.constant 0 : i32
    %c0_i32_1 = arith.constant 0 : i32
    return %arg0, %c0_i32, %c0_i32_0 : i32, i32, i32
  }
  func.func @transform_2(%arg0: i32, %arg1: i32) -> (i32, i32, i32) {
    %c0_i32 = arith.constant 0 : i32
    %c0_i32_0 = arith.constant 0 : i32
    %c0_i32_1 = arith.constant 0 : i32
    return %arg0, %c0_i32, %c0_i32_0 : i32, i32, i32
  }
  func.func @transform_3(%arg0: i32, %arg1: i32) -> (i32, i32, i32) {
    %c0_i32 = arith.constant 0 : i32
    %c0_i32_0 = arith.constant 0 : i32
    %c0_i32_1 = arith.constant 0 : i32
    %c0_i32_2 = arith.constant 0 : i32
    return %c0_i32, %c0_i32_0, %c0_i32_1 : i32, i32, i32
  }
  func.func @transform_4(%arg0: i32, %arg1: i32) -> (i32, i32) {
    %c0_i32 = arith.constant 0 : i32
    %c0_i32_0 = arith.constant 0 : i32
    %c0_i32_1 = arith.constant 0 : i32
    return %c0_i32, %c0_i32_0 : i32, i32
  }
  func.func @transform_5(%arg0: i32, %arg1: i32) -> (i32, i32) {
    %c0_i32 = arith.constant 0 : i32
    %c0_i32_0 = arith.constant 0 : i32
    %c0_i32_1 = arith.constant 0 : i32
    return %c0_i32, %c0_i32_0 : i32, i32
  }
  func.func @transform_6(%arg0: i32, %arg1: i32) -> (i32, i32) {
    %c0_i32 = arith.constant 0 : i32
    %c0_i32_0 = arith.constant 0 : i32
    %c0_i32_1 = arith.constant 0 : i32
    return %c0_i32, %c0_i32_0 : i32, i32
  }
  func.func @transform_7(%arg0: i32, %arg1: i32) -> (i32, i32) {
    %c0_i32 = arith.constant 0 : i32
    %c0_i32_0 = arith.constant 0 : i32
    return %c0_i32, %arg1 : i32, i32
  }
  func.func @transform_8(%arg0: i32, %arg1: i32) -> (i32, i32, i32) {
    %c0_i32 = arith.constant 0 : i32
    %c0_i32_0 = arith.constant 0 : i32
    %c0_i32_1 = arith.constant 0 : i32
    return %arg0, %c0_i32, %c0_i32_0 : i32, i32, i32
  }
  func.func @transform_9(%arg0: i32, %arg1: i32) -> (i32, i32, i32) {
    %c0_i32 = arith.constant 0 : i32
    %c0_i32_0 = arith.constant 0 : i32
    return %arg0, %c0_i32, %arg1 : i32, i32, i32
  }
}

module attributes {stable_mosaic.version = 11 : i64} {
  func.func @backmapper_kernel(%arg0: i32, %arg1: i32, %arg2: memref<1x24x128xf32, #tpu.memory_space<vmem>>, %arg3: memref<1x24x128xf32, #tpu.memory_space<vmem>>, %arg4: memref<1x24x128xf32, #tpu.memory_space<vmem>>, %arg5: memref<3x4x128xf32, #tpu.memory_space<vmem>>, %arg6: memref<4x128xf32, #tpu.memory_space<vmem>>, %arg7: memref<4x128xf32, #tpu.memory_space<vmem>>, %arg8: memref<4x128xf32, #tpu.memory_space<vmem>>, %arg9: memref<512x256xf32, #tpu.memory_space<vmem>>, %arg10: memref<1x24x512xf32, #tpu.memory_space<vmem>>, %arg11: memref<1x24x256xf32, #tpu.memory_space<vmem>>, %arg12: memref<24x512xf32, #tpu.memory_space<vmem>>) attributes {dimension_semantics = [#tpu.dimension_semantics<parallel>, #tpu.dimension_semantics<arbitrary>], iteration_bounds = array<i64: 1, 1>, scalar_prefetch = 0 : i64, scratch_operands = 1 : i64, tpu.core_type = #tpu.core_type<tc>, window_params = [{transform_indices = @transform_0, window_bounds = array<i64: 1, 24, 128>}, {transform_indices = @transform_1, window_bounds = array<i64: 1, 24, 128>}, {transform_indices = @transform_2, window_bounds = array<i64: 1, 24, 128>}, {pipeline_mode = #tpu.pipeline_mode<synchronous>, transform_indices = @transform_3, window_bounds = array<i64: 3, 4, 128>}, {pipeline_mode = #tpu.pipeline_mode<synchronous>, transform_indices = @transform_4, window_bounds = array<i64: 4, 128>}, {pipeline_mode = #tpu.pipeline_mode<synchronous>, transform_indices = @transform_5, window_bounds = array<i64: 4, 128>}, {pipeline_mode = #tpu.pipeline_mode<synchronous>, transform_indices = @transform_6, window_bounds = array<i64: 4, 128>}, {transform_indices = @transform_7, window_bounds = array<i64: 512, 256>}, {transform_indices = @transform_8, window_bounds = array<i64: 1, 24, 512>}, {transform_indices = @transform_9, window_bounds = array<i64: 1, 24, 256>}]} {
    %c0_i32 = arith.constant 0 : i32
    %0 = arith.cmpi eq, %arg1, %c0_i32 : i32
    %1 = arith.extui %0 : i1 to i32
    %c0_i32_0 = arith.constant 0 : i32
    %2 = arith.cmpi ne, %1, %c0_i32_0 : i32
    scf.if %2 {
      %c0_7 = arith.constant 0 : index
      %c0_8 = arith.constant 0 : index
      %c0_9 = arith.constant 0 : index
      %9 = vector.load %arg2[%c0_7, %c0_8, %c0_9] : memref<1x24x128xf32, #tpu.memory_space<vmem>>, vector<1x24x128xf32>
      %10 = vector.shape_cast %9 : vector<1x24x128xf32> to vector<24x128xf32>
      %c0_10 = arith.constant 0 : index
      %c0_11 = arith.constant 0 : index
      %c0_12 = arith.constant 0 : index
      %11 = vector.load %arg3[%c0_10, %c0_11, %c0_12] : memref<1x24x128xf32, #tpu.memory_space<vmem>>, vector<1x24x128xf32>
      %12 = vector.shape_cast %11 : vector<1x24x128xf32> to vector<24x128xf32>
      %c0_13 = arith.constant 0 : index
      %c0_14 = arith.constant 0 : index
      %c0_15 = arith.constant 0 : index
      %13 = vector.load %arg4[%c0_13, %c0_14, %c0_15] : memref<1x24x128xf32, #tpu.memory_space<vmem>>, vector<1x24x128xf32>
      %14 = vector.shape_cast %13 : vector<1x24x128xf32> to vector<24x128xf32>
      %c0_16 = arith.constant 0 : index
      %c0_17 = arith.constant 0 : index
      %c0_18 = arith.constant 0 : index
      %15 = vector.load %arg5[%c0_16, %c0_17, %c0_18] : memref<3x4x128xf32, #tpu.memory_space<vmem>>, vector<3x4x128xf32>
      %c0_19 = arith.constant 0 : index
      %c0_20 = arith.constant 0 : index
      %16 = vector.load %arg6[%c0_19, %c0_20] : memref<4x128xf32, #tpu.memory_space<vmem>>, vector<4x128xf32>
      %c0_21 = arith.constant 0 : index
      %c0_22 = arith.constant 0 : index
      %17 = vector.load %arg7[%c0_21, %c0_22] : memref<4x128xf32, #tpu.memory_space<vmem>>, vector<4x128xf32>
      %c0_23 = arith.constant 0 : index
      %c0_24 = arith.constant 0 : index
      %18 = vector.load %arg8[%c0_23, %c0_24] : memref<4x128xf32, #tpu.memory_space<vmem>>, vector<4x128xf32>
      %19 = vector.extract_strided_slice %10 {offsets = [0, 0], sizes = [8, 128], strides = [1, 1]} : vector<24x128xf32> to vector<8x128xf32>
      %20 = vector.extract_strided_slice %10 {offsets = [8, 0], sizes = [8, 128], strides = [1, 1]} : vector<24x128xf32> to vector<8x128xf32>
      %21 = vector.extract_strided_slice %10 {offsets = [16, 0], sizes = [8, 128], strides = [1, 1]} : vector<24x128xf32> to vector<8x128xf32>
      %22 = vector.extract_strided_slice %12 {offsets = [0, 0], sizes = [8, 128], strides = [1, 1]} : vector<24x128xf32> to vector<8x128xf32>
      %23 = vector.extract_strided_slice %12 {offsets = [8, 0], sizes = [8, 128], strides = [1, 1]} : vector<24x128xf32> to vector<8x128xf32>
      %24 = vector.extract_strided_slice %12 {offsets = [16, 0], sizes = [8, 128], strides = [1, 1]} : vector<24x128xf32> to vector<8x128xf32>
      %25 = vector.extract_strided_slice %14 {offsets = [0, 0], sizes = [8, 128], strides = [1, 1]} : vector<24x128xf32> to vector<8x128xf32>
      %26 = vector.extract_strided_slice %14 {offsets = [8, 0], sizes = [8, 128], strides = [1, 1]} : vector<24x128xf32> to vector<8x128xf32>
      %27 = vector.extract_strided_slice %14 {offsets = [16, 0], sizes = [8, 128], strides = [1, 1]} : vector<24x128xf32> to vector<8x128xf32>
      %28 = arith.mulf %20, %24 : vector<8x128xf32>
      %29 = arith.mulf %21, %23 : vector<8x128xf32>
      %30 = arith.subf %28, %29 : vector<8x128xf32>
      %31 = arith.mulf %21, %22 : vector<8x128xf32>
      %32 = arith.mulf %19, %24 : vector<8x128xf32>
      %33 = arith.subf %31, %32 : vector<8x128xf32>
      %34 = arith.mulf %19, %23 : vector<8x128xf32>
      %35 = arith.mulf %20, %22 : vector<8x128xf32>
      %36 = arith.subf %34, %35 : vector<8x128xf32>
      %37 = vector.extract_strided_slice %15 {offsets = [0, 0, 0], sizes = [1, 1, 128], strides = [1, 1, 1]} : vector<3x4x128xf32> to vector<1x1x128xf32>
      %38 = vector.shape_cast %37 : vector<1x1x128xf32> to vector<1x128xf32>
      %39 = vector.extract_strided_slice %15 {offsets = [1, 0, 0], sizes = [1, 1, 128], strides = [1, 1, 1]} : vector<3x4x128xf32> to vector<1x1x128xf32>
      %40 = vector.shape_cast %39 : vector<1x1x128xf32> to vector<1x128xf32>
      %41 = vector.extract_strided_slice %15 {offsets = [2, 0, 0], sizes = [1, 1, 128], strides = [1, 1, 1]} : vector<3x4x128xf32> to vector<1x1x128xf32>
      %42 = vector.shape_cast %41 : vector<1x1x128xf32> to vector<1x128xf32>
      %43 = vector.broadcast %38 : vector<1x128xf32> to vector<8x128xf32>
      %44 = arith.mulf %43, %19 : vector<8x128xf32>
      %45 = vector.broadcast %40 : vector<1x128xf32> to vector<8x128xf32>
      %46 = arith.mulf %45, %22 : vector<8x128xf32>
      %47 = arith.addf %44, %46 : vector<8x128xf32>
      %48 = vector.broadcast %42 : vector<1x128xf32> to vector<8x128xf32>
      %49 = arith.mulf %48, %30 : vector<8x128xf32>
      %50 = arith.addf %47, %49 : vector<8x128xf32>
      %51 = vector.broadcast %38 : vector<1x128xf32> to vector<8x128xf32>
      %52 = arith.mulf %51, %20 : vector<8x128xf32>
      %53 = vector.broadcast %40 : vector<1x128xf32> to vector<8x128xf32>
      %54 = arith.mulf %53, %23 : vector<8x128xf32>
      %55 = arith.addf %52, %54 : vector<8x128xf32>
      %56 = vector.broadcast %42 : vector<1x128xf32> to vector<8x128xf32>
      %57 = arith.mulf %56, %33 : vector<8x128xf32>
      %58 = arith.addf %55, %57 : vector<8x128xf32>
      %59 = vector.broadcast %38 : vector<1x128xf32> to vector<8x128xf32>
      %60 = arith.mulf %59, %21 : vector<8x128xf32>
      %61 = vector.broadcast %40 : vector<1x128xf32> to vector<8x128xf32>
      %62 = arith.mulf %61, %24 : vector<8x128xf32>
      %63 = arith.addf %60, %62 : vector<8x128xf32>
      %64 = vector.broadcast %42 : vector<1x128xf32> to vector<8x128xf32>
      %65 = arith.mulf %64, %36 : vector<8x128xf32>
      %66 = arith.addf %63, %65 : vector<8x128xf32>
      %67 = arith.mulf %50, %50 : vector<8x128xf32>
      %68 = arith.mulf %58, %58 : vector<8x128xf32>
      %69 = arith.addf %67, %68 : vector<8x128xf32>
      %70 = arith.mulf %66, %66 : vector<8x128xf32>
      %71 = arith.addf %69, %70 : vector<8x128xf32>
      %cst_25 = arith.constant 1.000000e-30 : f32
      %72 = vector.broadcast %cst_25 : f32 to vector<8x128xf32>
      %73 = arith.maximumf %71, %72 : vector<8x128xf32>
      %74 = math.rsqrt %73 : vector<8x128xf32>
      %75 = arith.mulf %50, %74 : vector<8x128xf32>
      %76 = arith.mulf %58, %74 : vector<8x128xf32>
      %77 = arith.mulf %66, %74 : vector<8x128xf32>
      %c0_26 = arith.constant 0 : index
      %c0_27 = arith.constant 0 : index
      %c0_28 = arith.constant 0 : index
      %78 = vector.load %arg10[%c0_26, %c0_27, %c0_28] : memref<1x24x512xf32, #tpu.memory_space<vmem>>, vector<1x8x128xf32>
      %79 = vector.shape_cast %78 : vector<1x8x128xf32> to vector<8x128xf32>
      %80 = vector.shape_cast %75 : vector<8x128xf32> to vector<1x8x128xf32>
      tpu.vector_store %arg10[%c0_26, %c0_27, %c0_28], %80 {strides = array<i32>} : memref<1x24x512xf32, #tpu.memory_space<vmem>>, vector<1x8x128xf32>,
      %c0_29 = arith.constant 0 : index
      %c8 = arith.constant 8 : index
      %c0_30 = arith.constant 0 : index
      %81 = vector.load %arg10[%c0_29, %c8, %c0_30] : memref<1x24x512xf32, #tpu.memory_space<vmem>>, vector<1x8x128xf32>
      %82 = vector.shape_cast %81 : vector<1x8x128xf32> to vector<8x128xf32>
      %83 = vector.shape_cast %76 : vector<8x128xf32> to vector<1x8x128xf32>
      tpu.vector_store %arg10[%c0_29, %c8, %c0_30], %83 {strides = array<i32>} : memref<1x24x512xf32, #tpu.memory_space<vmem>>, vector<1x8x128xf32>,
      %c0_31 = arith.constant 0 : index
      %c16 = arith.constant 16 : index
      %c0_32 = arith.constant 0 : index
      %84 = vector.load %arg10[%c0_31, %c16, %c0_32] : memref<1x24x512xf32, #tpu.memory_space<vmem>>, vector<1x8x128xf32>
      %85 = vector.shape_cast %84 : vector<1x8x128xf32> to vector<8x128xf32>
      %86 = vector.shape_cast %77 : vector<8x128xf32> to vector<1x8x128xf32>
      tpu.vector_store %arg10[%c0_31, %c16, %c0_32], %86 {strides = array<i32>} : memref<1x24x512xf32, #tpu.memory_space<vmem>>, vector<1x8x128xf32>,
      %87 = vector.extract_strided_slice %16 {offsets = [0, 0], sizes = [1, 128], strides = [1, 1]} : vector<4x128xf32> to vector<1x128xf32>
      %88 = vector.extract_strided_slice %17 {offsets = [0, 0], sizes = [1, 128], strides = [1, 1]} : vector<4x128xf32> to vector<1x128xf32>
      %89 = vector.broadcast %88 : vector<1x128xf32> to vector<8x128xf32>
      %90 = arith.mulf %89, %75 : vector<8x128xf32>
      %91 = vector.broadcast %88 : vector<1x128xf32> to vector<8x128xf32>
      %92 = arith.mulf %91, %76 : vector<8x128xf32>
      %93 = vector.broadcast %88 : vector<1x128xf32> to vector<8x128xf32>
      %94 = arith.mulf %93, %77 : vector<8x128xf32>
      %95 = arith.mulf %92, %21 : vector<8x128xf32>
      %96 = arith.mulf %94, %20 : vector<8x128xf32>
      %97 = arith.subf %95, %96 : vector<8x128xf32>
      %98 = arith.mulf %94, %19 : vector<8x128xf32>
      %99 = arith.mulf %90, %21 : vector<8x128xf32>
      %100 = arith.subf %98, %99 : vector<8x128xf32>
      %101 = arith.mulf %90, %20 : vector<8x128xf32>
      %102 = arith.mulf %92, %19 : vector<8x128xf32>
      %103 = arith.subf %101, %102 : vector<8x128xf32>
      %104 = vector.broadcast %87 : vector<1x128xf32> to vector<8x128xf32>
      %105 = arith.mulf %104, %97 : vector<8x128xf32>
      %106 = arith.addf %19, %105 : vector<8x128xf32>
      %107 = arith.mulf %92, %103 : vector<8x128xf32>
      %108 = arith.mulf %94, %100 : vector<8x128xf32>
      %109 = arith.subf %107, %108 : vector<8x128xf32>
      %110 = arith.addf %106, %109 : vector<8x128xf32>
      %111 = vector.broadcast %87 : vector<1x128xf32> to vector<8x128xf32>
      %112 = arith.mulf %111, %100 : vector<8x128xf32>
      %113 = arith.addf %20, %112 : vector<8x128xf32>
      %114 = arith.mulf %94, %97 : vector<8x128xf32>
      %115 = arith.mulf %90, %103 : vector<8x128xf32>
      %116 = arith.subf %114, %115 : vector<8x128xf32>
      %117 = arith.addf %113, %116 : vector<8x128xf32>
      %118 = vector.broadcast %87 : vector<1x128xf32> to vector<8x128xf32>
      %119 = arith.mulf %118, %103 : vector<8x128xf32>
      %120 = arith.addf %21, %119 : vector<8x128xf32>
      %121 = arith.mulf %90, %100 : vector<8x128xf32>
      %122 = arith.mulf %92, %97 : vector<8x128xf32>
      %123 = arith.subf %121, %122 : vector<8x128xf32>
      %124 = arith.addf %120, %123 : vector<8x128xf32>
      %125 = vector.extract_strided_slice %18 {offsets = [0, 0], sizes = [1, 128], strides = [1, 1]} : vector<4x128xf32> to vector<1x128xf32>
      %126 = vector.broadcast %125 : vector<1x128xf32> to vector<8x128xf32>
      %127 = arith.mulf %126, %110 : vector<8x128xf32>
      %128 = arith.addf %127, %25 : vector<8x128xf32>
      %c0_33 = arith.constant 0 : index
      %c0_34 = arith.constant 0 : index
      %129 = vector.load %arg12[%c0_33, %c0_34] : memref<24x512xf32, #tpu.memory_space<vmem>>, vector<8x128xf32>
      tpu.vector_store %arg12[%c0_33, %c0_34], %128 {strides = array<i32>} : memref<24x512xf32, #tpu.memory_space<vmem>>, vector<8x128xf32>,
      %130 = vector.broadcast %125 : vector<1x128xf32> to vector<8x128xf32>
      %131 = arith.mulf %130, %117 : vector<8x128xf32>
      %132 = arith.addf %131, %26 : vector<8x128xf32>
      %c8_35 = arith.constant 8 : index
      %c0_36 = arith.constant 0 : index
      %133 = vector.load %arg12[%c8_35, %c0_36] : memref<24x512xf32, #tpu.memory_space<vmem>>, vector<8x128xf32>
      tpu.vector_store %arg12[%c8_35, %c0_36], %132 {strides = array<i32>} : memref<24x512xf32, #tpu.memory_space<vmem>>, vector<8x128xf32>,
      %134 = vector.broadcast %125 : vector<1x128xf32> to vector<8x128xf32>
      %135 = arith.mulf %134, %124 : vector<8x128xf32>
      %136 = arith.addf %135, %27 : vector<8x128xf32>
      %c16_37 = arith.constant 16 : index
      %c0_38 = arith.constant 0 : index
      %137 = vector.load %arg12[%c16_37, %c0_38] : memref<24x512xf32, #tpu.memory_space<vmem>>, vector<8x128xf32>
      tpu.vector_store %arg12[%c16_37, %c0_38], %136 {strides = array<i32>} : memref<24x512xf32, #tpu.memory_space<vmem>>, vector<8x128xf32>,
      %138 = vector.extract_strided_slice %15 {offsets = [0, 1, 0], sizes = [1, 1, 128], strides = [1, 1, 1]} : vector<3x4x128xf32> to vector<1x1x128xf32>
      %139 = vector.shape_cast %138 : vector<1x1x128xf32> to vector<1x128xf32>
      %140 = vector.extract_strided_slice %15 {offsets = [1, 1, 0], sizes = [1, 1, 128], strides = [1, 1, 1]} : vector<3x4x128xf32> to vector<1x1x128xf32>
      %141 = vector.shape_cast %140 : vector<1x1x128xf32> to vector<1x128xf32>
      %142 = vector.extract_strided_slice %15 {offsets = [2, 1, 0], sizes = [1, 1, 128], strides = [1, 1, 1]} : vector<3x4x128xf32> to vector<1x1x128xf32>
      %143 = vector.shape_cast %142 : vector<1x1x128xf32> to vector<1x128xf32>
      %144 = vector.broadcast %139 : vector<1x128xf32> to vector<8x128xf32>
      %145 = arith.mulf %144, %19 : vector<8x128xf32>
      %146 = vector.broadcast %141 : vector<1x128xf32> to vector<8x128xf32>
      %147 = arith.mulf %146, %22 : vector<8x128xf32>
      %148 = arith.addf %145, %147 : vector<8x128xf32>
      %149 = vector.broadcast %143 : vector<1x128xf32> to vector<8x128xf32>
      %150 = arith.mulf %149, %30 : vector<8x128xf32>
      %151 = arith.addf %148, %150 : vector<8x128xf32>
      %152 = vector.broadcast %139 : vector<1x128xf32> to vector<8x128xf32>
      %153 = arith.mulf %152, %20 : vector<8x128xf32>
      %154 = vector.broadcast %141 : vector<1x128xf32> to vector<8x128xf32>
      %155 = arith.mulf %154, %23 : vector<8x128xf32>
      %156 = arith.addf %153, %155 : vector<8x128xf32>
      %157 = vector.broadcast %143 : vector<1x128xf32> to vector<8x128xf32>
      %158 = arith.mulf %157, %33 : vector<8x128xf32>
      %159 = arith.addf %156, %158 : vector<8x128xf32>
      %160 = vector.broadcast %139 : vector<1x128xf32> to vector<8x128xf32>
      %161 = arith.mulf %160, %21 : vector<8x128xf32>
      %162 = vector.broadcast %141 : vector<1x128xf32> to vector<8x128xf32>
      %163 = arith.mulf %162, %24 : vector<8x128xf32>
      %164 = arith.addf %161, %163 : vector<8x128xf32>
      %165 = vector.broadcast %143 : vector<1x128xf32> to vector<8x128xf32>
      %166 = arith.mulf %165, %36 : vector<8x128xf32>
      %167 = arith.addf %164, %166 : vector<8x128xf32>
      %168 = arith.mulf %151, %151 : vector<8x128xf32>
      %169 = arith.mulf %159, %159 : vector<8x128xf32>
      %170 = arith.addf %168, %169 : vector<8x128xf32>
      %171 = arith.mulf %167, %167 : vector<8x128xf32>
      %172 = arith.addf %170, %171 : vector<8x128xf32>
      %cst_39 = arith.constant 1.000000e-30 : f32
      %173 = vector.broadcast %cst_39 : f32 to vector<8x128xf32>
      %174 = arith.maximumf %172, %173 : vector<8x128xf32>
      %175 = math.rsqrt %174 : vector<8x128xf32>
      %176 = arith.mulf %151, %175 : vector<8x128xf32>
      %177 = arith.mulf %159, %175 : vector<8x128xf32>
      %178 = arith.mulf %167, %175 : vector<8x128xf32>
      %c0_40 = arith.constant 0 : index
      %c0_41 = arith.constant 0 : index
      %c128 = arith.constant 128 : index
      %179 = vector.load %arg10[%c0_40, %c0_41, %c128] : memref<1x24x512xf32, #tpu.memory_space<vmem>>, vector<1x8x128xf32>
      %180 = vector.shape_cast %179 : vector<1x8x128xf32> to vector<8x128xf32>
      %181 = vector.shape_cast %176 : vector<8x128xf32> to vector<1x8x128xf32>
      tpu.vector_store %arg10[%c0_40, %c0_41, %c128], %181 {strides = array<i32>} : memref<1x24x512xf32, #tpu.memory_space<vmem>>, vector<1x8x128xf32>,
      %c0_42 = arith.constant 0 : index
      %c8_43 = arith.constant 8 : index
      %c128_44 = arith.constant 128 : index
      %182 = vector.load %arg10[%c0_42, %c8_43, %c128_44] : memref<1x24x512xf32, #tpu.memory_space<vmem>>, vector<1x8x128xf32>
      %183 = vector.shape_cast %182 : vector<1x8x128xf32> to vector<8x128xf32>
      %184 = vector.shape_cast %177 : vector<8x128xf32> to vector<1x8x128xf32>
      tpu.vector_store %arg10[%c0_42, %c8_43, %c128_44], %184 {strides = array<i32>} : memref<1x24x512xf32, #tpu.memory_space<vmem>>, vector<1x8x128xf32>,
      %c0_45 = arith.constant 0 : index
      %c16_46 = arith.constant 16 : index
      %c128_47 = arith.constant 128 : index
      %185 = vector.load %arg10[%c0_45, %c16_46, %c128_47] : memref<1x24x512xf32, #tpu.memory_space<vmem>>, vector<1x8x128xf32>
      %186 = vector.shape_cast %185 : vector<1x8x128xf32> to vector<8x128xf32>
      %187 = vector.shape_cast %178 : vector<8x128xf32> to vector<1x8x128xf32>
      tpu.vector_store %arg10[%c0_45, %c16_46, %c128_47], %187 {strides = array<i32>} : memref<1x24x512xf32, #tpu.memory_space<vmem>>, vector<1x8x128xf32>,
      %188 = vector.extract_strided_slice %16 {offsets = [1, 0], sizes = [1, 128], strides = [1, 1]} : vector<4x128xf32> to vector<1x128xf32>
      %189 = vector.extract_strided_slice %17 {offsets = [1, 0], sizes = [1, 128], strides = [1, 1]} : vector<4x128xf32> to vector<1x128xf32>
      %190 = vector.broadcast %189 : vector<1x128xf32> to vector<8x128xf32>
      %191 = arith.mulf %190, %176 : vector<8x128xf32>
      %192 = vector.broadcast %189 : vector<1x128xf32> to vector<8x128xf32>
      %193 = arith.mulf %192, %177 : vector<8x128xf32>
      %194 = vector.broadcast %189 : vector<1x128xf32> to vector<8x128xf32>
      %195 = arith.mulf %194, %178 : vector<8x128xf32>
      %196 = arith.mulf %193, %21 : vector<8x128xf32>
      %197 = arith.mulf %195, %20 : vector<8x128xf32>
      %198 = arith.subf %196, %197 : vector<8x128xf32>
      %199 = arith.mulf %195, %19 : vector<8x128xf32>
      %200 = arith.mulf %191, %21 : vector<8x128xf32>
      %201 = arith.subf %199, %200 : vector<8x128xf32>
      %202 = arith.mulf %191, %20 : vector<8x128xf32>
      %203 = arith.mulf %193, %19 : vector<8x128xf32>
      %204 = arith.subf %202, %203 : vector<8x128xf32>
      %205 = vector.broadcast %188 : vector<1x128xf32> to vector<8x128xf32>
      %206 = arith.mulf %205, %198 : vector<8x128xf32>
      %207 = arith.addf %19, %206 : vector<8x128xf32>
      %208 = arith.mulf %193, %204 : vector<8x128xf32>
      %209 = arith.mulf %195, %201 : vector<8x128xf32>
      %210 = arith.subf %208, %209 : vector<8x128xf32>
      %211 = arith.addf %207, %210 : vector<8x128xf32>
      %212 = vector.broadcast %188 : vector<1x128xf32> to vector<8x128xf32>
      %213 = arith.mulf %212, %201 : vector<8x128xf32>
      %214 = arith.addf %20, %213 : vector<8x128xf32>
      %215 = arith.mulf %195, %198 : vector<8x128xf32>
      %216 = arith.mulf %191, %204 : vector<8x128xf32>
      %217 = arith.subf %215, %216 : vector<8x128xf32>
      %218 = arith.addf %214, %217 : vector<8x128xf32>
      %219 = vector.broadcast %188 : vector<1x128xf32> to vector<8x128xf32>
      %220 = arith.mulf %219, %204 : vector<8x128xf32>
      %221 = arith.addf %21, %220 : vector<8x128xf32>
      %222 = arith.mulf %191, %201 : vector<8x128xf32>
      %223 = arith.mulf %193, %198 : vector<8x128xf32>
      %224 = arith.subf %222, %223 : vector<8x128xf32>
      %225 = arith.addf %221, %224 : vector<8x128xf32>
      %226 = vector.extract_strided_slice %18 {offsets = [1, 0], sizes = [1, 128], strides = [1, 1]} : vector<4x128xf32> to vector<1x128xf32>
      %227 = vector.broadcast %226 : vector<1x128xf32> to vector<8x128xf32>
      %228 = arith.mulf %227, %211 : vector<8x128xf32>
      %229 = arith.addf %228, %25 : vector<8x128xf32>
      %c0_48 = arith.constant 0 : index
      %c128_49 = arith.constant 128 : index
      %230 = vector.load %arg12[%c0_48, %c128_49] : memref<24x512xf32, #tpu.memory_space<vmem>>, vector<8x128xf32>
      tpu.vector_store %arg12[%c0_48, %c128_49], %229 {strides = array<i32>} : memref<24x512xf32, #tpu.memory_space<vmem>>, vector<8x128xf32>,
      %231 = vector.broadcast %226 : vector<1x128xf32> to vector<8x128xf32>
      %232 = arith.mulf %231, %218 : vector<8x128xf32>
      %233 = arith.addf %232, %26 : vector<8x128xf32>
      %c8_50 = arith.constant 8 : index
      %c128_51 = arith.constant 128 : index
      %234 = vector.load %arg12[%c8_50, %c128_51] : memref<24x512xf32, #tpu.memory_space<vmem>>, vector<8x128xf32>
      tpu.vector_store %arg12[%c8_50, %c128_51], %233 {strides = array<i32>} : memref<24x512xf32, #tpu.memory_space<vmem>>, vector<8x128xf32>,
      %235 = vector.broadcast %226 : vector<1x128xf32> to vector<8x128xf32>
      %236 = arith.mulf %235, %225 : vector<8x128xf32>
      %237 = arith.addf %236, %27 : vector<8x128xf32>
      %c16_52 = arith.constant 16 : index
      %c128_53 = arith.constant 128 : index
      %238 = vector.load %arg12[%c16_52, %c128_53] : memref<24x512xf32, #tpu.memory_space<vmem>>, vector<8x128xf32>
      tpu.vector_store %arg12[%c16_52, %c128_53], %237 {strides = array<i32>} : memref<24x512xf32, #tpu.memory_space<vmem>>, vector<8x128xf32>,
      %239 = vector.extract_strided_slice %15 {offsets = [0, 2, 0], sizes = [1, 1, 128], strides = [1, 1, 1]} : vector<3x4x128xf32> to vector<1x1x128xf32>
      %240 = vector.shape_cast %239 : vector<1x1x128xf32> to vector<1x128xf32>
      %241 = vector.extract_strided_slice %15 {offsets = [1, 2, 0], sizes = [1, 1, 128], strides = [1, 1, 1]} : vector<3x4x128xf32> to vector<1x1x128xf32>
      %242 = vector.shape_cast %241 : vector<1x1x128xf32> to vector<1x128xf32>
      %243 = vector.extract_strided_slice %15 {offsets = [2, 2, 0], sizes = [1, 1, 128], strides = [1, 1, 1]} : vector<3x4x128xf32> to vector<1x1x128xf32>
      %244 = vector.shape_cast %243 : vector<1x1x128xf32> to vector<1x128xf32>
      %245 = vector.broadcast %240 : vector<1x128xf32> to vector<8x128xf32>
      %246 = arith.mulf %245, %19 : vector<8x128xf32>
      %247 = vector.broadcast %242 : vector<1x128xf32> to vector<8x128xf32>
      %248 = arith.mulf %247, %22 : vector<8x128xf32>
      %249 = arith.addf %246, %248 : vector<8x128xf32>
      %250 = vector.broadcast %244 : vector<1x128xf32> to vector<8x128xf32>
      %251 = arith.mulf %250, %30 : vector<8x128xf32>
      %252 = arith.addf %249, %251 : vector<8x128xf32>
      %253 = vector.broadcast %240 : vector<1x128xf32> to vector<8x128xf32>
      %254 = arith.mulf %253, %20 : vector<8x128xf32>
      %255 = vector.broadcast %242 : vector<1x128xf32> to vector<8x128xf32>
      %256 = arith.mulf %255, %23 : vector<8x128xf32>
      %257 = arith.addf %254, %256 : vector<8x128xf32>
      %258 = vector.broadcast %244 : vector<1x128xf32> to vector<8x128xf32>
      %259 = arith.mulf %258, %33 : vector<8x128xf32>
      %260 = arith.addf %257, %259 : vector<8x128xf32>
      %261 = vector.broadcast %240 : vector<1x128xf32> to vector<8x128xf32>
      %262 = arith.mulf %261, %21 : vector<8x128xf32>
      %263 = vector.broadcast %242 : vector<1x128xf32> to vector<8x128xf32>
      %264 = arith.mulf %263, %24 : vector<8x128xf32>
      %265 = arith.addf %262, %264 : vector<8x128xf32>
      %266 = vector.broadcast %244 : vector<1x128xf32> to vector<8x128xf32>
      %267 = arith.mulf %266, %36 : vector<8x128xf32>
      %268 = arith.addf %265, %267 : vector<8x128xf32>
      %269 = arith.mulf %252, %252 : vector<8x128xf32>
      %270 = arith.mulf %260, %260 : vector<8x128xf32>
      %271 = arith.addf %269, %270 : vector<8x128xf32>
      %272 = arith.mulf %268, %268 : vector<8x128xf32>
      %273 = arith.addf %271, %272 : vector<8x128xf32>
      %cst_54 = arith.constant 1.000000e-30 : f32
      %274 = vector.broadcast %cst_54 : f32 to vector<8x128xf32>
      %275 = arith.maximumf %273, %274 : vector<8x128xf32>
      %276 = math.rsqrt %275 : vector<8x128xf32>
      %277 = arith.mulf %252, %276 : vector<8x128xf32>
      %278 = arith.mulf %260, %276 : vector<8x128xf32>
      %279 = arith.mulf %268, %276 : vector<8x128xf32>
      %c0_55 = arith.constant 0 : index
      %c0_56 = arith.constant 0 : index
      %c256 = arith.constant 256 : index
      %280 = vector.load %arg10[%c0_55, %c0_56, %c256] : memref<1x24x512xf32, #tpu.memory_space<vmem>>, vector<1x8x128xf32>
      %281 = vector.shape_cast %280 : vector<1x8x128xf32> to vector<8x128xf32>
      %282 = vector.shape_cast %277 : vector<8x128xf32> to vector<1x8x128xf32>
      tpu.vector_store %arg10[%c0_55, %c0_56, %c256], %282 {strides = array<i32>} : memref<1x24x512xf32, #tpu.memory_space<vmem>>, vector<1x8x128xf32>,
      %c0_57 = arith.constant 0 : index
      %c8_58 = arith.constant 8 : index
      %c256_59 = arith.constant 256 : index
      %283 = vector.load %arg10[%c0_57, %c8_58, %c256_59] : memref<1x24x512xf32, #tpu.memory_space<vmem>>, vector<1x8x128xf32>
      %284 = vector.shape_cast %283 : vector<1x8x128xf32> to vector<8x128xf32>
      %285 = vector.shape_cast %278 : vector<8x128xf32> to vector<1x8x128xf32>
      tpu.vector_store %arg10[%c0_57, %c8_58, %c256_59], %285 {strides = array<i32>} : memref<1x24x512xf32, #tpu.memory_space<vmem>>, vector<1x8x128xf32>,
      %c0_60 = arith.constant 0 : index
      %c16_61 = arith.constant 16 : index
      %c256_62 = arith.constant 256 : index
      %286 = vector.load %arg10[%c0_60, %c16_61, %c256_62] : memref<1x24x512xf32, #tpu.memory_space<vmem>>, vector<1x8x128xf32>
      %287 = vector.shape_cast %286 : vector<1x8x128xf32> to vector<8x128xf32>
      %288 = vector.shape_cast %279 : vector<8x128xf32> to vector<1x8x128xf32>
      tpu.vector_store %arg10[%c0_60, %c16_61, %c256_62], %288 {strides = array<i32>} : memref<1x24x512xf32, #tpu.memory_space<vmem>>, vector<1x8x128xf32>,
      %289 = vector.extract_strided_slice %16 {offsets = [2, 0], sizes = [1, 128], strides = [1, 1]} : vector<4x128xf32> to vector<1x128xf32>
      %290 = vector.extract_strided_slice %17 {offsets = [2, 0], sizes = [1, 128], strides = [1, 1]} : vector<4x128xf32> to vector<1x128xf32>
      %291 = vector.broadcast %290 : vector<1x128xf32> to vector<8x128xf32>
      %292 = arith.mulf %291, %277 : vector<8x128xf32>
      %293 = vector.broadcast %290 : vector<1x128xf32> to vector<8x128xf32>
      %294 = arith.mulf %293, %278 : vector<8x128xf32>
      %295 = vector.broadcast %290 : vector<1x128xf32> to vector<8x128xf32>
      %296 = arith.mulf %295, %279 : vector<8x128xf32>
      %297 = arith.mulf %294, %21 : vector<8x128xf32>
      %298 = arith.mulf %296, %20 : vector<8x128xf32>
      %299 = arith.subf %297, %298 : vector<8x128xf32>
      %300 = arith.mulf %296, %19 : vector<8x128xf32>
      %301 = arith.mulf %292, %21 : vector<8x128xf32>
      %302 = arith.subf %300, %301 : vector<8x128xf32>
      %303 = arith.mulf %292, %20 : vector<8x128xf32>
      %304 = arith.mulf %294, %19 : vector<8x128xf32>
      %305 = arith.subf %303, %304 : vector<8x128xf32>
      %306 = vector.broadcast %289 : vector<1x128xf32> to vector<8x128xf32>
      %307 = arith.mulf %306, %299 : vector<8x128xf32>
      %308 = arith.addf %19, %307 : vector<8x128xf32>
      %309 = arith.mulf %294, %305 : vector<8x128xf32>
      %310 = arith.mulf %296, %302 : vector<8x128xf32>
      %311 = arith.subf %309, %310 : vector<8x128xf32>
      %312 = arith.addf %308, %311 : vector<8x128xf32>
      %313 = vector.broadcast %289 : vector<1x128xf32> to vector<8x128xf32>
      %314 = arith.mulf %313, %302 : vector<8x128xf32>
      %315 = arith.addf %20, %314 : vector<8x128xf32>
      %316 = arith.mulf %296, %299 : vector<8x128xf32>
      %317 = arith.mulf %292, %305 : vector<8x128xf32>
      %318 = arith.subf %316, %317 : vector<8x128xf32>
      %319 = arith.addf %315, %318 : vector<8x128xf32>
      %320 = vector.broadcast %289 : vector<1x128xf32> to vector<8x128xf32>
      %321 = arith.mulf %320, %305 : vector<8x128xf32>
      %322 = arith.addf %21, %321 : vector<8x128xf32>
      %323 = arith.mulf %292, %302 : vector<8x128xf32>
      %324 = arith.mulf %294, %299 : vector<8x128xf32>
      %325 = arith.subf %323, %324 : vector<8x128xf32>
      %326 = arith.addf %322, %325 : vector<8x128xf32>
      %327 = vector.extract_strided_slice %18 {offsets = [2, 0], sizes = [1, 128], strides = [1, 1]} : vector<4x128xf32> to vector<1x128xf32>
      %328 = vector.broadcast %327 : vector<1x128xf32> to vector<8x128xf32>
      %329 = arith.mulf %328, %312 : vector<8x128xf32>
      %330 = arith.addf %329, %25 : vector<8x128xf32>
      %c0_63 = arith.constant 0 : index
      %c256_64 = arith.constant 256 : index
      %331 = vector.load %arg12[%c0_63, %c256_64] : memref<24x512xf32, #tpu.memory_space<vmem>>, vector<8x128xf32>
      tpu.vector_store %arg12[%c0_63, %c256_64], %330 {strides = array<i32>} : memref<24x512xf32, #tpu.memory_space<vmem>>, vector<8x128xf32>,
      %332 = vector.broadcast %327 : vector<1x128xf32> to vector<8x128xf32>
      %333 = arith.mulf %332, %319 : vector<8x128xf32>
      %334 = arith.addf %333, %26 : vector<8x128xf32>
      %c8_65 = arith.constant 8 : index
      %c256_66 = arith.constant 256 : index
      %335 = vector.load %arg12[%c8_65, %c256_66] : memref<24x512xf32, #tpu.memory_space<vmem>>, vector<8x128xf32>
      tpu.vector_store %arg12[%c8_65, %c256_66], %334 {strides = array<i32>} : memref<24x512xf32, #tpu.memory_space<vmem>>, vector<8x128xf32>,
      %336 = vector.broadcast %327 : vector<1x128xf32> to vector<8x128xf32>
      %337 = arith.mulf %336, %326 : vector<8x128xf32>
      %338 = arith.addf %337, %27 : vector<8x128xf32>
      %c16_67 = arith.constant 16 : index
      %c256_68 = arith.constant 256 : index
      %339 = vector.load %arg12[%c16_67, %c256_68] : memref<24x512xf32, #tpu.memory_space<vmem>>, vector<8x128xf32>
      tpu.vector_store %arg12[%c16_67, %c256_68], %338 {strides = array<i32>} : memref<24x512xf32, #tpu.memory_space<vmem>>, vector<8x128xf32>,
      %340 = vector.extract_strided_slice %15 {offsets = [0, 3, 0], sizes = [1, 1, 128], strides = [1, 1, 1]} : vector<3x4x128xf32> to vector<1x1x128xf32>
      %341 = vector.shape_cast %340 : vector<1x1x128xf32> to vector<1x128xf32>
      %342 = vector.extract_strided_slice %15 {offsets = [1, 3, 0], sizes = [1, 1, 128], strides = [1, 1, 1]} : vector<3x4x128xf32> to vector<1x1x128xf32>
      %343 = vector.shape_cast %342 : vector<1x1x128xf32> to vector<1x128xf32>
      %344 = vector.extract_strided_slice %15 {offsets = [2, 3, 0], sizes = [1, 1, 128], strides = [1, 1, 1]} : vector<3x4x128xf32> to vector<1x1x128xf32>
      %345 = vector.shape_cast %344 : vector<1x1x128xf32> to vector<1x128xf32>
      %346 = vector.broadcast %341 : vector<1x128xf32> to vector<8x128xf32>
      %347 = arith.mulf %346, %19 : vector<8x128xf32>
      %348 = vector.broadcast %343 : vector<1x128xf32> to vector<8x128xf32>
      %349 = arith.mulf %348, %22 : vector<8x128xf32>
      %350 = arith.addf %347, %349 : vector<8x128xf32>
      %351 = vector.broadcast %345 : vector<1x128xf32> to vector<8x128xf32>
      %352 = arith.mulf %351, %30 : vector<8x128xf32>
      %353 = arith.addf %350, %352 : vector<8x128xf32>
      %354 = vector.broadcast %341 : vector<1x128xf32> to vector<8x128xf32>
      %355 = arith.mulf %354, %20 : vector<8x128xf32>
      %356 = vector.broadcast %343 : vector<1x128xf32> to vector<8x128xf32>
      %357 = arith.mulf %356, %23 : vector<8x128xf32>
      %358 = arith.addf %355, %357 : vector<8x128xf32>
      %359 = vector.broadcast %345 : vector<1x128xf32> to vector<8x128xf32>
      %360 = arith.mulf %359, %33 : vector<8x128xf32>
      %361 = arith.addf %358, %360 : vector<8x128xf32>
      %362 = vector.broadcast %341 : vector<1x128xf32> to vector<8x128xf32>
      %363 = arith.mulf %362, %21 : vector<8x128xf32>
      %364 = vector.broadcast %343 : vector<1x128xf32> to vector<8x128xf32>
      %365 = arith.mulf %364, %24 : vector<8x128xf32>
      %366 = arith.addf %363, %365 : vector<8x128xf32>
      %367 = vector.broadcast %345 : vector<1x128xf32> to vector<8x128xf32>
      %368 = arith.mulf %367, %36 : vector<8x128xf32>
      %369 = arith.addf %366, %368 : vector<8x128xf32>
      %370 = arith.mulf %353, %353 : vector<8x128xf32>
      %371 = arith.mulf %361, %361 : vector<8x128xf32>
      %372 = arith.addf %370, %371 : vector<8x128xf32>
      %373 = arith.mulf %369, %369 : vector<8x128xf32>
      %374 = arith.addf %372, %373 : vector<8x128xf32>
      %cst_69 = arith.constant 1.000000e-30 : f32
      %375 = vector.broadcast %cst_69 : f32 to vector<8x128xf32>
      %376 = arith.maximumf %374, %375 : vector<8x128xf32>
      %377 = math.rsqrt %376 : vector<8x128xf32>
      %378 = arith.mulf %353, %377 : vector<8x128xf32>
      %379 = arith.mulf %361, %377 : vector<8x128xf32>
      %380 = arith.mulf %369, %377 : vector<8x128xf32>
      %c0_70 = arith.constant 0 : index
      %c0_71 = arith.constant 0 : index
      %c384 = arith.constant 384 : index
      %381 = vector.load %arg10[%c0_70, %c0_71, %c384] : memref<1x24x512xf32, #tpu.memory_space<vmem>>, vector<1x8x128xf32>
      %382 = vector.shape_cast %381 : vector<1x8x128xf32> to vector<8x128xf32>
      %383 = vector.shape_cast %378 : vector<8x128xf32> to vector<1x8x128xf32>
      tpu.vector_store %arg10[%c0_70, %c0_71, %c384], %383 {strides = array<i32>} : memref<1x24x512xf32, #tpu.memory_space<vmem>>, vector<1x8x128xf32>,
      %c0_72 = arith.constant 0 : index
      %c8_73 = arith.constant 8 : index
      %c384_74 = arith.constant 384 : index
      %384 = vector.load %arg10[%c0_72, %c8_73, %c384_74] : memref<1x24x512xf32, #tpu.memory_space<vmem>>, vector<1x8x128xf32>
      %385 = vector.shape_cast %384 : vector<1x8x128xf32> to vector<8x128xf32>
      %386 = vector.shape_cast %379 : vector<8x128xf32> to vector<1x8x128xf32>
      tpu.vector_store %arg10[%c0_72, %c8_73, %c384_74], %386 {strides = array<i32>} : memref<1x24x512xf32, #tpu.memory_space<vmem>>, vector<1x8x128xf32>,
      %c0_75 = arith.constant 0 : index
      %c16_76 = arith.constant 16 : index
      %c384_77 = arith.constant 384 : index
      %387 = vector.load %arg10[%c0_75, %c16_76, %c384_77] : memref<1x24x512xf32, #tpu.memory_space<vmem>>, vector<1x8x128xf32>
      %388 = vector.shape_cast %387 : vector<1x8x128xf32> to vector<8x128xf32>
      %389 = vector.shape_cast %380 : vector<8x128xf32> to vector<1x8x128xf32>
      tpu.vector_store %arg10[%c0_75, %c16_76, %c384_77], %389 {strides = array<i32>} : memref<1x24x512xf32, #tpu.memory_space<vmem>>, vector<1x8x128xf32>,
      %390 = vector.extract_strided_slice %16 {offsets = [3, 0], sizes = [1, 128], strides = [1, 1]} : vector<4x128xf32> to vector<1x128xf32>
      %391 = vector.extract_strided_slice %17 {offsets = [3, 0], sizes = [1, 128], strides = [1, 1]} : vector<4x128xf32> to vector<1x128xf32>
      %392 = vector.broadcast %391 : vector<1x128xf32> to vector<8x128xf32>
      %393 = arith.mulf %392, %378 : vector<8x128xf32>
      %394 = vector.broadcast %391 : vector<1x128xf32> to vector<8x128xf32>
      %395 = arith.mulf %394, %379 : vector<8x128xf32>
      %396 = vector.broadcast %391 : vector<1x128xf32> to vector<8x128xf32>
      %397 = arith.mulf %396, %380 : vector<8x128xf32>
      %398 = arith.mulf %395, %21 : vector<8x128xf32>
      %399 = arith.mulf %397, %20 : vector<8x128xf32>
      %400 = arith.subf %398, %399 : vector<8x128xf32>
      %401 = arith.mulf %397, %19 : vector<8x128xf32>
      %402 = arith.mulf %393, %21 : vector<8x128xf32>
      %403 = arith.subf %401, %402 : vector<8x128xf32>
      %404 = arith.mulf %393, %20 : vector<8x128xf32>
      %405 = arith.mulf %395, %19 : vector<8x128xf32>
      %406 = arith.subf %404, %405 : vector<8x128xf32>
      %407 = vector.broadcast %390 : vector<1x128xf32> to vector<8x128xf32>
      %408 = arith.mulf %407, %400 : vector<8x128xf32>
      %409 = arith.addf %19, %408 : vector<8x128xf32>
      %410 = arith.mulf %395, %406 : vector<8x128xf32>
      %411 = arith.mulf %397, %403 : vector<8x128xf32>
      %412 = arith.subf %410, %411 : vector<8x128xf32>
      %413 = arith.addf %409, %412 : vector<8x128xf32>
      %414 = vector.broadcast %390 : vector<1x128xf32> to vector<8x128xf32>
      %415 = arith.mulf %414, %403 : vector<8x128xf32>
      %416 = arith.addf %20, %415 : vector<8x128xf32>
      %417 = arith.mulf %397, %400 : vector<8x128xf32>
      %418 = arith.mulf %393, %406 : vector<8x128xf32>
      %419 = arith.subf %417, %418 : vector<8x128xf32>
      %420 = arith.addf %416, %419 : vector<8x128xf32>
      %421 = vector.broadcast %390 : vector<1x128xf32> to vector<8x128xf32>
      %422 = arith.mulf %421, %406 : vector<8x128xf32>
      %423 = arith.addf %21, %422 : vector<8x128xf32>
      %424 = arith.mulf %393, %403 : vector<8x128xf32>
      %425 = arith.mulf %395, %400 : vector<8x128xf32>
      %426 = arith.subf %424, %425 : vector<8x128xf32>
      %427 = arith.addf %423, %426 : vector<8x128xf32>
      %428 = vector.extract_strided_slice %18 {offsets = [3, 0], sizes = [1, 128], strides = [1, 1]} : vector<4x128xf32> to vector<1x128xf32>
      %429 = vector.broadcast %428 : vector<1x128xf32> to vector<8x128xf32>
      %430 = arith.mulf %429, %413 : vector<8x128xf32>
      %431 = arith.addf %430, %25 : vector<8x128xf32>
      %c0_78 = arith.constant 0 : index
      %c384_79 = arith.constant 384 : index
      %432 = vector.load %arg12[%c0_78, %c384_79] : memref<24x512xf32, #tpu.memory_space<vmem>>, vector<8x128xf32>
      tpu.vector_store %arg12[%c0_78, %c384_79], %431 {strides = array<i32>} : memref<24x512xf32, #tpu.memory_space<vmem>>, vector<8x128xf32>,
      %433 = vector.broadcast %428 : vector<1x128xf32> to vector<8x128xf32>
      %434 = arith.mulf %433, %420 : vector<8x128xf32>
      %435 = arith.addf %434, %26 : vector<8x128xf32>
      %c8_80 = arith.constant 8 : index
      %c384_81 = arith.constant 384 : index
      %436 = vector.load %arg12[%c8_80, %c384_81] : memref<24x512xf32, #tpu.memory_space<vmem>>, vector<8x128xf32>
      tpu.vector_store %arg12[%c8_80, %c384_81], %435 {strides = array<i32>} : memref<24x512xf32, #tpu.memory_space<vmem>>, vector<8x128xf32>,
      %437 = vector.broadcast %428 : vector<1x128xf32> to vector<8x128xf32>
      %438 = arith.mulf %437, %427 : vector<8x128xf32>
      %439 = arith.addf %438, %27 : vector<8x128xf32>
      %c16_82 = arith.constant 16 : index
      %c384_83 = arith.constant 384 : index
      %440 = vector.load %arg12[%c16_82, %c384_83] : memref<24x512xf32, #tpu.memory_space<vmem>>, vector<8x128xf32>
      tpu.vector_store %arg12[%c16_82, %c384_83], %439 {strides = array<i32>} : memref<24x512xf32, #tpu.memory_space<vmem>>, vector<8x128xf32>,
    } else {
    }
    %c0 = arith.constant 0 : index
    %c0_1 = arith.constant 0 : index
    %3 = vector.load %arg12[%c0, %c0_1] : memref<24x512xf32, #tpu.memory_space<vmem>>, vector<24x512xf32>
    %c0_2 = arith.constant 0 : index
    %c0_3 = arith.constant 0 : index
    %4 = vector.load %arg9[%c0_2, %c0_3] : memref<512x256xf32, #tpu.memory_space<vmem>>, vector<512x256xf32>
    %cst = arith.constant dense<0.000000e+00> : vector<24x256xf32>
    %5 = tpu.matmul %3, %4, %cst {dimension_numbers = #tpu.dot_dimension_numbers<[1], [0], [0], [1], [0, 0, 1, 1], [], []>} : vector<24x512xf32>, vector<512x256xf32>, vector<24x256xf32> -> vector<24x256xf32>
    %c0_4 = arith.constant 0 : index
    %c0_5 = arith.constant 0 : index
    %c0_6 = arith.constant 0 : index
    %6 = vector.load %arg11[%c0_4, %c0_5, %c0_6] : memref<1x24x256xf32, #tpu.memory_space<vmem>>, vector<1x24x256xf32>
    %7 = vector.shape_cast %6 : vector<1x24x256xf32> to vector<24x256xf32>
    %8 = vector.shape_cast %5 : vector<24x256xf32> to vector<1x24x256xf32>
    tpu.vector_store %arg11[%c0_4, %c0_5, %c0_6], %8 {strides = array<i32>} : memref<1x24x256xf32, #tpu.memory_space<vmem>>, vector<1x24x256xf32>,
    return
  }
  func.func @transform_0(%arg0: i32, %arg1: i32) -> (i32, i32, i32) {
    %c0_i32 = arith.constant 0 : i32
    %c0_i32_0 = arith.constant 0 : i32
    %c0_i32_1 = arith.constant 0 : i32
    return %arg0, %c0_i32, %c0_i32_0 : i32, i32, i32
  }
  func.func @transform_1(%arg0: i32, %arg1: i32) -> (i32, i32, i32) {
    %c0_i32 = arith.constant 0 : i32
    %c0_i32_0 = arith.constant 0 : i32
    %c0_i32_1 = arith.constant 0 : i32
    return %arg0, %c0_i32, %c0_i32_0 : i32, i32, i32
  }
  func.func @transform_2(%arg0: i32, %arg1: i32) -> (i32, i32, i32) {
    %c0_i32 = arith.constant 0 : i32
    %c0_i32_0 = arith.constant 0 : i32
    %c0_i32_1 = arith.constant 0 : i32
    return %arg0, %c0_i32, %c0_i32_0 : i32, i32, i32
  }
  func.func @transform_3(%arg0: i32, %arg1: i32) -> (i32, i32, i32) {
    %c0_i32 = arith.constant 0 : i32
    %c0_i32_0 = arith.constant 0 : i32
    %c0_i32_1 = arith.constant 0 : i32
    %c0_i32_2 = arith.constant 0 : i32
    return %c0_i32, %c0_i32_0, %c0_i32_1 : i32, i32, i32
  }
  func.func @transform_4(%arg0: i32, %arg1: i32) -> (i32, i32) {
    %c0_i32 = arith.constant 0 : i32
    %c0_i32_0 = arith.constant 0 : i32
    %c0_i32_1 = arith.constant 0 : i32
    return %c0_i32, %c0_i32_0 : i32, i32
  }
  func.func @transform_5(%arg0: i32, %arg1: i32) -> (i32, i32) {
    %c0_i32 = arith.constant 0 : i32
    %c0_i32_0 = arith.constant 0 : i32
    %c0_i32_1 = arith.constant 0 : i32
    return %c0_i32, %c0_i32_0 : i32, i32
  }
  func.func @transform_6(%arg0: i32, %arg1: i32) -> (i32, i32) {
    %c0_i32 = arith.constant 0 : i32
    %c0_i32_0 = arith.constant 0 : i32
    %c0_i32_1 = arith.constant 0 : i32
    return %c0_i32, %c0_i32_0 : i32, i32
  }
  func.func @transform_7(%arg0: i32, %arg1: i32) -> (i32, i32) {
    %c0_i32 = arith.constant 0 : i32
    %c0_i32_0 = arith.constant 0 : i32
    return %c0_i32, %arg1 : i32, i32
  }
  func.func @transform_8(%arg0: i32, %arg1: i32) -> (i32, i32, i32) {
    %c0_i32 = arith.constant 0 : i32
    %c0_i32_0 = arith.constant 0 : i32
    %c0_i32_1 = arith.constant 0 : i32
    return %arg0, %c0_i32, %c0_i32_0 : i32, i32, i32
  }
  func.func @transform_9(%arg0: i32, %arg1: i32) -> (i32, i32, i32) {
    %c0_i32 = arith.constant 0 : i32
    %c0_i32_0 = arith.constant 0 : i32
    return %arg0, %c0_i32, %arg1 : i32, i32, i32
  }
}

</mosaic_0001>

<llo_original>
// kernel: tpu_custom_call.1
$region0: #{tpu_custom_call.1}
  #allocation0 [shape = 'u32[]', space=smem, size = 0x4, offset = 0x4, fixed_abs, tag = 'smem constant byte address 0x4 - core index']
  #allocation1 [shape = 'u32[144,128]{1,0:T(1,128)}', space=vmem, size = 0x12000, scoped, tag = 'internal scratch']
  #allocation2 [shape = 'f32[24,512]{1,0:T(8,128)}', space=vmem, size = 0xc000, scoped, tag = 'scratch operand']
  %s0 = inlined_call_operand.hbm [shape: f32[1,24,128], index: 0, kind: input, shape index: {}]
  %s1 = inlined_call_operand.hbm [shape: f32[1,24,128], index: 1, kind: input, shape index: {}]
  %s2 = inlined_call_operand.hbm [shape: f32[1,24,128], index: 2, kind: input, shape index: {}]
  %s3 = inlined_call_operand.hbm [shape: f32[3,4,128], index: 3, kind: input, shape index: {}]
  %s4 = inlined_call_operand.vmem [shape: f32[4,128], index: 4, kind: input, shape index: {}]
  %s5 = inlined_call_operand.vmem [shape: f32[4,128], index: 5, kind: input, shape index: {}]
  %s6 = inlined_call_operand.hbm [shape: f32[4,128], index: 6, kind: input, shape index: {}]
  %s7 = inlined_call_operand.hbm [shape: f32[512,256], index: 7, kind: input, shape index: {}]
  %s8 = inlined_call_operand.hbm [shape: f32[1,24,512], index: 8, kind: output, shape index: {0}]
  %s9 = inlined_call_operand.hbm [shape: f32[1,24,256], index: 9, kind: output, shape index: {1}]
  %10 = xla_tuple %s8, %s9
  %s11 = sld [smem:[#allocation0]]
  $region78: #{tpu_custom_call.1} parent=0
    _
  %s13 = ssub.s32 1, %s11
  %s14 = scalar_select 0, %s13, %s11
  $region1: #{tpu_custom_call.1} parent=0
    #allocation3 [shape = 'u8[12288]{0}', space=vmem, size = 0x3000, scoped, tag = 'input window, operand 0, single buffered']
    #allocation4 [shape = 's32[1]{0}', space=sflag, size = 0x4, scoped, tag = 'scoped memory for tpu_custom_call.1']
    #allocation5 [shape = 's32[1]{0}', space=sflag, size = 0x4, scoped, tag = 'scoped memory for tpu_custom_call.1']
    #allocation6 [shape = 'u8[12288]{0}', space=vmem, size = 0x3000, scoped, tag = 'input window, operand 1, single buffered']
    #allocation7 [shape = 's32[1]{0}', space=sflag, size = 0x4, scoped, tag = 'scoped memory for tpu_custom_call.1']
    #allocation8 [shape = 'u8[12288]{0}', space=vmem, size = 0x3000, scoped, tag = 'input window, operand 2, single buffered']
    #allocation9 [shape = 'u8[6144]{0}', space=vmem, size = 0x1800, scoped, tag = 'input window, operand 3, single buffered']
    #allocation10 [shape = 's32[1]{0}', space=sflag, size = 0x4, scoped, tag = 'scoped memory for tpu_custom_call.1']
    #allocation11 [shape = 'u8[2048]{0}', space=vmem, size = 0x800, scoped, tag = 'input window, operand 6, single buffered']
    #allocation12 [shape = 'u8[524288]{0}', space=vmem, size = 0x80000, scoped, tag = 'input window, operand 7, single buffered']
    #allocation13 [shape = 's32[1]{0}', space=sflag, size = 0x4, scoped, tag = 'scoped memory for tpu_custom_call.1']
    #allocation14 [shape = 'u8[49152]{0}', space=vmem, size = 0xc000, scoped, tag = 'output window, operand 0, single buffered']
    #allocation15 [shape = 'u8[24576]{0}', space=vmem, size = 0x6000, scoped, tag = 'output window, operand 1, single buffered']
    #allocation16 [shape = 's32[1]{0}', space=sflag, size = 0x4, scoped, tag = 'scoped memory for tpu_custom_call.1']
    %15 = vsyncpa [#allocation4], 0
    %16 = vsyncpa [#allocation7], 0
    %17 = vsyncpa [#allocation10], 0
    %18 = vsyncpa [#allocation13], 0
    %19 = vsyncpa [#allocation5], 0
    %20 = vsyncpa [#allocation16], 0
    // Predicated region
    $region2: #{tpu_custom_call.1} parent=1 // pred_check
      _
    $region3: #{tpu_custom_call.1} parent=1 // pred_check_branch
      %22 = sbr.rel (0) target = $region5
    $region4: #{tpu_custom_call.1} parent=1 // pred_region
      %s24 = ssub.s32 384, 384
      %25 = vsyncadd [#allocation4], %s24
      %s26 = sshll.u32 [#allocation3], 4
      %s27 = int_to_ptr.vmem [resolvable:$true] %s26
      %32 = dma.hbm_to_vmem [thread:$0]  %s0, 384, %s27, [#allocation4], 128, 128, 8
    $region5: #{tpu_custom_call.1} parent=1 // pred_fallthru
      _
    // Predicated region
    $region6: #{tpu_custom_call.1} parent=1 // pred_check
      _
    $region7: #{tpu_custom_call.1} parent=1 // pred_check_branch
      %34 = sbr.rel (0) target = $region9
    $region8: #{tpu_custom_call.1} parent=1 // pred_region
      %s36 = ssub.s32 384, 384
      %37 = vsyncadd [#allocation7], %s36
      %s38 = sshll.u32 [#allocation6], 4
      %s39 = int_to_ptr.vmem [resolvable:$true] %s38
      %44 = dma.hbm_to_vmem [thread:$0]  %s1, 384, %s39, [#allocation7], 128, 128, 8
    $region9: #{tpu_custom_call.1} parent=1 // pred_fallthru
      _
    // Predicated region
    $region10: #{tpu_custom_call.1} parent=1 // pred_check
      _
    $region11: #{tpu_custom_call.1} parent=1 // pred_check_branch
      %46 = sbr.rel (0) target = $region13
    $region12: #{tpu_custom_call.1} parent=1 // pred_region
      %s48 = ssub.s32 384, 384
      %49 = vsyncadd [#allocation7], %s48
      %s50 = sshll.u32 [#allocation8], 4
      %s51 = int_to_ptr.vmem [resolvable:$true] %s50
      %56 = dma.hbm_to_vmem [thread:$0]  %s2, 384, %s51, [#allocation7], 128, 128, 8
    $region13: #{tpu_custom_call.1} parent=1 // pred_fallthru
      _
    // Predicated region
    $region14: #{tpu_custom_call.1} parent=1 // pred_check
      _
    $region15: #{tpu_custom_call.1} parent=1 // pred_check_branch
      %58 = sbr.rel (0) target = $region17
    $region16: #{tpu_custom_call.1} parent=1 // pred_region
      %s60 = ssub.s32 192, 192
      %61 = vsyncadd [#allocation10], %s60
      %s62 = sshll.u32 [#allocation9], 4
      %s63 = int_to_ptr.vmem [resolvable:$true] %s62
      %68 = dma.hbm_to_vmem [thread:$0]  %s3, 192, %s63, [#allocation10], 64, 64, 4
    $region17: #{tpu_custom_call.1} parent=1 // pred_fallthru
      _
    // Predicated region
    $region18: #{tpu_custom_call.1} parent=1 // pred_check
      _
    $region19: #{tpu_custom_call.1} parent=1 // pred_check_branch
      %70 = sbr.rel (0) target = $region21
    $region20: #{tpu_custom_call.1} parent=1 // pred_region
      _
    $region21: #{tpu_custom_call.1} parent=1 // pred_fallthru
      _
    // Predicated region
    $region22: #{tpu_custom_call.1} parent=1 // pred_check
      _
    $region23: #{tpu_custom_call.1} parent=1 // pred_check_branch
      %72 = sbr.rel (0) target = $region25
    $region24: #{tpu_custom_call.1} parent=1 // pred_region
      _
    $region25: #{tpu_custom_call.1} parent=1 // pred_fallthru
      _
    // Predicated region
    $region26: #{tpu_custom_call.1} parent=1 // pred_check
      _
    $region27: #{tpu_custom_call.1} parent=1 // pred_check_branch
      %74 = sbr.rel (0) target = $region29
    $region28: #{tpu_custom_call.1} parent=1 // pred_region
      %s76 = ssub.s32 64, 64
      %77 = vsyncadd [#allocation10], %s76
      %s79 = sshll.u32 [#allocation11], 4
      %s80 = int_to_ptr.vmem [resolvable:$true] %s79
      %82 = dma.hbm_to_vmem [thread:$0]  %s6, 64, %s80, [#allocation10]
    $region29: #{tpu_custom_call.1} parent=1 // pred_fallthru
      _
    // Predicated region
    $region30: #{tpu_custom_call.1} parent=1 // pred_check
      _
    $region31: #{tpu_custom_call.1} parent=1 // pred_check_branch
      %84 = sbr.rel (0) target = $region33
    $region32: #{tpu_custom_call.1} parent=1 // pred_region
      %s86 = ssub.s32 16384, 16384
      %87 = vsyncadd [#allocation13], %s86
      %s88 = sshll.u32 [#allocation12], 4
      %s89 = int_to_ptr.vmem [resolvable:$true] %s88
      %94 = dma.hbm_to_vmem [thread:$0]  %s7, 16384, %s89, [#allocation13], 256, 256, 16
    $region33: #{tpu_custom_call.1} parent=1 // pred_fallthru
      _
    // Predicated region
    $region34: #{tpu_custom_call.1} parent=1 // pred_check
      _
    $region35: #{tpu_custom_call.1} parent=1 // pred_check_branch
      %96 = sbr.rel (0) target = $region37
    $region36: #{tpu_custom_call.1} parent=1 // pred_region
      %97 = dma.done [#allocation4], 384
    $region37: #{tpu_custom_call.1} parent=1 // pred_fallthru
      _
    // Predicated region
    $region38: #{tpu_custom_call.1} parent=1 // pred_check
      _
    $region39: #{tpu_custom_call.1} parent=1 // pred_check_branch
      %99 = sbr.rel (0) target = $region41
    $region40: #{tpu_custom_call.1} parent=1 // pred_region
      %100 = dma.done [#allocation7], 384
    $region41: #{tpu_custom_call.1} parent=1 // pred_fallthru
      _
    // Predicated region
    $region42: #{tpu_custom_call.1} parent=1 // pred_check
      _
    $region43: #{tpu_custom_call.1} parent=1 // pred_check_branch
      %102 = sbr.rel (0) target = $region45
    $region44: #{tpu_custom_call.1} parent=1 // pred_region
      %103 = dma.done [#allocation7], 384
    $region45: #{tpu_custom_call.1} parent=1 // pred_fallthru
      _
    // Predicated region
    $region46: #{tpu_custom_call.1} parent=1 // pred_check
      _
    $region47: #{tpu_custom_call.1} parent=1 // pred_check_branch
      %105 = sbr.rel (0) target = $region49
    $region48: #{tpu_custom_call.1} parent=1 // pred_region
      %106 = dma.done [#allocation10], 192
    $region49: #{tpu_custom_call.1} parent=1 // pred_fallthru
      _
    // Predicated region
    $region50: #{tpu_custom_call.1} parent=1 // pred_check
      _
    $region51: #{tpu_custom_call.1} parent=1 // pred_check_branch
      %108 = sbr.rel (0) target = $region53
    $region52: #{tpu_custom_call.1} parent=1 // pred_region
      %109 = dma.done [#allocation10], 64
    $region53: #{tpu_custom_call.1} parent=1 // pred_fallthru
      _
    // Predicated region
    $region54: #{tpu_custom_call.1} parent=1 // pred_check
      _
    $region55: #{tpu_custom_call.1} parent=1 // pred_check_branch
      %111 = sbr.rel (0) target = $region57
    $region56: #{tpu_custom_call.1} parent=1 // pred_region
      %112 = dma.done [#allocation13], 16384
    $region57: #{tpu_custom_call.1} parent=1 // pred_fallthru
      _
    %p113 = scmp.eq.s32.totalorder 0, 0
    // Predicated region
    $region58: #{tpu_custom_call.1} parent=1 // pred_check
      %p114 = pneg %p113
    $region59: #{tpu_custom_call.1} parent=1 // pred_check_branch
      %116 = sbr.rel (%p114) target = $region61
    $region60: #{tpu_custom_call.1} parent=1 // pred_region
      %v117 = vld [vmem:[#allocation3] sm:$0xff]
      %v118 = vld [vmem:[#allocation3 + $0x8] sm:$0xff]
      %v119 = vld [vmem:[#allocation3 + $0x10] sm:$0xff]
      %v120 = vld [vmem:[#allocation6] sm:$0xff]
      %v121 = vld [vmem:[#allocation6 + $0x8] sm:$0xff]
      %v122 = vld [vmem:[#allocation6 + $0x10] sm:$0xff]
      %v123 = vld [vmem:[#allocation8] sm:$0xff]
      %v124 = vld [vmem:[#allocation8 + $0x8] sm:$0xff]
      %v125 = vld [vmem:[#allocation8 + $0x10] sm:$0xff]
      %v126 = vld [vmem:[#allocation9] sm:$0xf]
      %v127 = vld [vmem:[#allocation9 + $0x4] sm:$0xf]
      %v128 = vld [vmem:[#allocation9 + $0x8] sm:$0xf]
      %v129 = vld [vmem:[%s4] sm:$0xf]
      %v130 = vld [vmem:[%s5] sm:$0xf]
      %v131 = vld [vmem:[#allocation11] sm:$0xf]
      %v132 = vmul.f32 %v118, %v122
      %v133 = vmul.f32 %v119, %v121
      %v134 = vsub.f32 %v132, %v133
      %v135 = vmul.f32 %v119, %v120
      %v136 = vmul.f32 %v117, %v122
      %v137 = vsub.f32 %v135, %v136
      %v138 = vmul.f32 %v117, %v121
      %v139 = vmul.f32 %v118, %v120
      %v140 = vsub.f32 %v138, %v139
      %v141 = vlaneseq
      %v142 = vshrl.u32 %v141, 7
      %v143 = vsub.s32 0, %v142
      %v144 = vrot.slane %v126, %v143
      %v145 = vmul.f32 %v144, %v117
      %v146 = vlaneseq
      %v147 = vshrl.u32 %v146, 7
      %v148 = vsub.s32 0, %v147
      %v149 = vrot.slane %v127, %v148
      %v150 = vmul.f32 %v149, %v120
      %v151 = vadd.f32 %v145, %v150
      %v152 = vlaneseq
      %v153 = vshrl.u32 %v152, 7
      %v154 = vsub.s32 0, %v153
      %v155 = vrot.slane %v128, %v154
      %v156 = vmul.f32 %v155, %v134
      %v157 = vadd.f32 %v151, %v156
      %v158 = vmul.f32 %v144, %v118
      %v159 = vmul.f32 %v149, %v121
      %v160 = vadd.f32 %v158, %v159
      %v161 = vmul.f32 %v155, %v137
      %v162 = vadd.f32 %v160, %v161
      %v163 = vmul.f32 %v144, %v119
      %v164 = vmul.f32 %v149, %v122
      %v165 = vadd.f32 %v163, %v164
      %v166 = vmul.f32 %v155, %v140
      %v167 = vadd.f32 %v165, %v166
      %v168 = vmul.f32 %v157, %v157
      %v169 = vmul.f32 %v162, %v162
      %v170 = vadd.f32 %v168, %v169
      %v171 = vmul.f32 %v167, %v167
      %v172 = vadd.f32 %v170, %v171
      %v173 = vmax.f32 %v172, 1e-30
      %v174 = vrsqrt.pop %v173
      %v175 = vmul.f32 %v157, %v174
      %v176 = vmul.f32 %v162, %v174
      %v177 = vmul.f32 %v167, %v174
      %178 = vst [vmem:[#allocation14] sm:$0xff] %v175
      %179 = vst [vmem:[#allocation14 + $0x20] sm:$0xff] %v176
      %180 = vst [vmem:[#allocation14 + $0x40] sm:$0xff] %v177
      %v181 = vlaneseq
      %v182 = vshrl.u32 %v181, 7
      %v183 = vsub.s32 0, %v182
      %v184 = vrot.slane %v130, %v183
      %v185 = vmul.f32 %v184, %v175
      %v186 = vmul.f32 %v184, %v176
      %v187 = vmul.f32 %v184, %v177
      %v188 = vmul.f32 %v186, %v119
      %v189 = vmul.f32 %v187, %v118
      %v190 = vsub.f32 %v188, %v189
      %v191 = vmul.f32 %v187, %v117
      %v192 = vmul.f32 %v185, %v119
      %v193 = vsub.f32 %v191, %v192
      %v194 = vmul.f32 %v185, %v118
      %v195 = vmul.f32 %v186, %v117
      %v196 = vsub.f32 %v194, %v195
      %v197 = vlaneseq
      %v198 = vshrl.u32 %v197, 7
      %v199 = vsub.s32 0, %v198
      %v200 = vrot.slane %v129, %v199
      %v201 = vmul.f32 %v200, %v190
      %v202 = vadd.f32 %v117, %v201
      %v203 = vmul.f32 %v186, %v196
      %v204 = vmul.f32 %v187, %v193
      %v205 = vsub.f32 %v203, %v204
      %v206 = vadd.f32 %v202, %v205
      %v207 = vmul.f32 %v200, %v193
      %v208 = vadd.f32 %v118, %v207
      %v209 = vmul.f32 %v187, %v190
      %v210 = vmul.f32 %v185, %v196
      %v211 = vsub.f32 %v209, %v210
      %v212 = vadd.f32 %v208, %v211
      %v213 = vmul.f32 %v200, %v196
      %v214 = vadd.f32 %v119, %v213
      %v215 = vmul.f32 %v185, %v193
      %v216 = vmul.f32 %v186, %v190
      %v217 = vsub.f32 %v215, %v216
      %v218 = vadd.f32 %v214, %v217
      %v219 = vlaneseq
      %v220 = vshrl.u32 %v219, 7
      %v221 = vsub.s32 0, %v220
      %v222 = vrot.slane %v131, %v221
      %v223 = vmul.f32 %v222, %v206
      %v224 = vadd.f32 %v223, %v123
      %225 = vst [vmem:[#allocation2] sm:$0xff] %v224
      %v226 = vmul.f32 %v222, %v212
      %v227 = vadd.f32 %v226, %v124
      %228 = vst [vmem:[#allocation2 + $0x20] sm:$0xff] %v227
      %v229 = vmul.f32 %v222, %v218
      %v230 = vadd.f32 %v229, %v125
      %231 = vst [vmem:[#allocation2 + $0x40] sm:$0xff] %v230
      %v232 = vlaneseq
      %v233 = vshrl.u32 %v232, 7
      %v234 = vsub.s32 1, %v233
      %v235 = vrot.slane %v126, %v234
      %v236 = vmul.f32 %v235, %v117
      %v237 = vlaneseq
      %v238 = vshrl.u32 %v237, 7
      %v239 = vsub.s32 1, %v238
      %v240 = vrot.slane %v127, %v239
      %v241 = vmul.f32 %v240, %v120
      %v242 = vadd.f32 %v236, %v241
      %v243 = vlaneseq
      %v244 = vshrl.u32 %v243, 7
      %v245 = vsub.s32 1, %v244
      %v246 = vrot.slane %v128, %v245
      %v247 = vmul.f32 %v246, %v134
      %v248 = vadd.f32 %v242, %v247
      %v249 = vmul.f32 %v235, %v118
      %v250 = vmul.f32 %v240, %v121
      %v251 = vadd.f32 %v249, %v250
      %v252 = vmul.f32 %v246, %v137
      %v253 = vadd.f32 %v251, %v252
      %v254 = vmul.f32 %v235, %v119
      %v255 = vmul.f32 %v240, %v122
      %v256 = vadd.f32 %v254, %v255
      %v257 = vmul.f32 %v246, %v140
      %v258 = vadd.f32 %v256, %v257
      %v259 = vmul.f32 %v248, %v248
      %v260 = vmul.f32 %v253, %v253
      %v261 = vadd.f32 %v259, %v260
      %v262 = vmul.f32 %v258, %v258
      %v263 = vadd.f32 %v261, %v262
      %v264 = vmax.f32 %v263, 1e-30
      %v265 = vrsqrt.pop %v264
      %v266 = vmul.f32 %v248, %v265
      %v267 = vmul.f32 %v253, %v265
      %v268 = vmul.f32 %v258, %v265
      %269 = vst [vmem:[#allocation14 + $0x8] sm:$0xff] %v266
      %270 = vst [vmem:[#allocation14 + $0x28] sm:$0xff] %v267
      %271 = vst [vmem:[#allocation14 + $0x48] sm:$0xff] %v268
      %v272 = vlaneseq
      %v273 = vshrl.u32 %v272, 7
      %v274 = vsub.s32 1, %v273
      %v275 = vrot.slane %v130, %v274
      %v276 = vmul.f32 %v275, %v266
      %v277 = vmul.f32 %v275, %v267
      %v278 = vmul.f32 %v275, %v268
      %v279 = vmul.f32 %v277, %v119
      %v280 = vmul.f32 %v278, %v118
      %v281 = vsub.f32 %v279, %v280
      %v282 = vmul.f32 %v278, %v117
      %v283 = vmul.f32 %v276, %v119
      %v284 = vsub.f32 %v282, %v283
      %v285 = vmul.f32 %v276, %v118
      %v286 = vmul.f32 %v277, %v117
      %v287 = vsub.f32 %v285, %v286
      %v288 = vlaneseq
      %v289 = vshrl.u32 %v288, 7
      %v290 = vsub.s32 1, %v289
      %v291 = vrot.slane %v129, %v290
      %v292 = vmul.f32 %v291, %v281
      %v293 = vadd.f32 %v117, %v292
      %v294 = vmul.f32 %v277, %v287
      %v295 = vmul.f32 %v278, %v284
      %v296 = vsub.f32 %v294, %v295
      %v297 = vadd.f32 %v293, %v296
      %v298 = vmul.f32 %v291, %v284
      %v299 = vadd.f32 %v118, %v298
      %v300 = vmul.f32 %v278, %v281
      %v301 = vmul.f32 %v276, %v287
      %v302 = vsub.f32 %v300, %v301
      %v303 = vadd.f32 %v299, %v302
      %v304 = vmul.f32 %v291, %v287
      %v305 = vadd.f32 %v119, %v304
      %v306 = vmul.f32 %v276, %v284
      %v307 = vmul.f32 %v277, %v281
      %v308 = vsub.f32 %v306, %v307
      %v309 = vadd.f32 %v305, %v308
      %v310 = vlaneseq
      %v311 = vshrl.u32 %v310, 7
      %v312 = vsub.s32 1, %v311
      %v313 = vrot.slane %v131, %v312
      %v314 = vmul.f32 %v313, %v297
      %v315 = vadd.f32 %v314, %v123
      %316 = vst [vmem:[#allocation2 + $0x8] sm:$0xff] %v315
      %v317 = vmul.f32 %v313, %v303
      %v318 = vadd.f32 %v317, %v124
      %319 = vst [vmem:[#allocation2 + $0x28] sm:$0xff] %v318
      %v320 = vmul.f32 %v313, %v309
      %v321 = vadd.f32 %v320, %v125
      %322 = vst [vmem:[#allocation2 + $0x48] sm:$0xff] %v321
      %v323 = vlaneseq
      %v324 = vshrl.u32 %v323, 7
      %v325 = vsub.s32 2, %v324
      %v326 = vrot.slane %v126, %v325
      %v327 = vmul.f32 %v326, %v117
      %v328 = vlaneseq
      %v329 = vshrl.u32 %v328, 7
      %v330 = vsub.s32 2, %v329
      %v331 = vrot.slane %v127, %v330
      %v332 = vmul.f32 %v331, %v120
      %v333 = vadd.f32 %v327, %v332
      %v334 = vlaneseq
      %v335 = vshrl.u32 %v334, 7
      %v336 = vsub.s32 2, %v335
      %v337 = vrot.slane %v128, %v336
      %v338 = vmul.f32 %v337, %v134
      %v339 = vadd.f32 %v333, %v338
      %v340 = vmul.f32 %v326, %v118
      %v341 = vmul.f32 %v331, %v121
      %v342 = vadd.f32 %v340, %v341
      %v343 = vmul.f32 %v337, %v137
      %v344 = vadd.f32 %v342, %v343
      %v345 = vmul.f32 %v326, %v119
      %v346 = vmul.f32 %v331, %v122
      %v347 = vadd.f32 %v345, %v346
      %v348 = vmul.f32 %v337, %v140
      %v349 = vadd.f32 %v347, %v348
      %v350 = vmul.f32 %v339, %v339
      %v351 = vmul.f32 %v344, %v344
      %v352 = vadd.f32 %v350, %v351
      %v353 = vmul.f32 %v349, %v349
      %v354 = vadd.f32 %v352, %v353
      %v355 = vmax.f32 %v354, 1e-30
      %v356 = vrsqrt.pop %v355
      %v357 = vmul.f32 %v339, %v356
      %v358 = vmul.f32 %v344, %v356
      %v359 = vmul.f32 %v349, %v356
      %360 = vst [vmem:[#allocation14 + $0x10] sm:$0xff] %v357
      %361 = vst [vmem:[#allocation14 + $0x30] sm:$0xff] %v358
      %362 = vst [vmem:[#allocation14 + $0x50] sm:$0xff] %v359
      %v363 = vlaneseq
      %v364 = vshrl.u32 %v363, 7
      %v365 = vsub.s32 2, %v364
      %v366 = vrot.slane %v130, %v365
      %v367 = vmul.f32 %v366, %v357
      %v368 = vmul.f32 %v366, %v358
      %v369 = vmul.f32 %v366, %v359
      %v370 = vmul.f32 %v368, %v119
      %v371 = vmul.f32 %v369, %v118
      %v372 = vsub.f32 %v370, %v371
      %v373 = vmul.f32 %v369, %v117
      %v374 = vmul.f32 %v367, %v119
      %v375 = vsub.f32 %v373, %v374
      %v376 = vmul.f32 %v367, %v118
      %v377 = vmul.f32 %v368, %v117
      %v378 = vsub.f32 %v376, %v377
      %v379 = vlaneseq
      %v380 = vshrl.u32 %v379, 7
      %v381 = vsub.s32 2, %v380
      %v382 = vrot.slane %v129, %v381
      %v383 = vmul.f32 %v382, %v372
      %v384 = vadd.f32 %v117, %v383
      %v385 = vmul.f32 %v368, %v378
      %v386 = vmul.f32 %v369, %v375
      %v387 = vsub.f32 %v385, %v386
      %v388 = vadd.f32 %v384, %v387
      %v389 = vmul.f32 %v382, %v375
      %v390 = vadd.f32 %v118, %v389
      %v391 = vmul.f32 %v369, %v372
      %v392 = vmul.f32 %v367, %v378
      %v393 = vsub.f32 %v391, %v392
      %v394 = vadd.f32 %v390, %v393
      %v395 = vmul.f32 %v382, %v378
      %v396 = vadd.f32 %v119, %v395
      %v397 = vmul.f32 %v367, %v375
      %v398 = vmul.f32 %v368, %v372
      %v399 = vsub.f32 %v397, %v398
      %v400 = vadd.f32 %v396, %v399
      %v401 = vlaneseq
      %v402 = vshrl.u32 %v401, 7
      %v403 = vsub.s32 2, %v402
      %v404 = vrot.slane %v131, %v403
      %v405 = vmul.f32 %v404, %v388
      %v406 = vadd.f32 %v405, %v123
      %407 = vst [vmem:[#allocation2 + $0x10] sm:$0xff] %v406
      %v408 = vmul.f32 %v404, %v394
      %v409 = vadd.f32 %v408, %v124
      %410 = vst [vmem:[#allocation2 + $0x30] sm:$0xff] %v409
      %v411 = vmul.f32 %v404, %v400
      %v412 = vadd.f32 %v411, %v125
      %413 = vst [vmem:[#allocation2 + $0x50] sm:$0xff] %v412
      %v414 = vlaneseq
      %v415 = vshrl.u32 %v414, 7
      %v416 = vsub.s32 3, %v415
      %v417 = vrot.slane %v126, %v416
      %v418 = vmul.f32 %v417, %v117
      %v419 = vlaneseq
      %v420 = vshrl.u32 %v419, 7
      %v421 = vsub.s32 3, %v420
      %v422 = vrot.slane %v127, %v421
      %v423 = vmul.f32 %v422, %v120
      %v424 = vadd.f32 %v418, %v423
      %v425 = vlaneseq
      %v426 = vshrl.u32 %v425, 7
      %v427 = vsub.s32 3, %v426
      %v428 = vrot.slane %v128, %v427
      %v429 = vmul.f32 %v428, %v134
      %v430 = vadd.f32 %v424, %v429
      %v431 = vmul.f32 %v417, %v118
      %v432 = vmul.f32 %v422, %v121
      %v433 = vadd.f32 %v431, %v432
      %v434 = vmul.f32 %v428, %v137
      %v435 = vadd.f32 %v433, %v434
      %v436 = vmul.f32 %v417, %v119
      %v437 = vmul.f32 %v422, %v122
      %v438 = vadd.f32 %v436, %v437
      %v439 = vmul.f32 %v428, %v140
      %v440 = vadd.f32 %v438, %v439
      %v441 = vmul.f32 %v430, %v430
      %v442 = vmul.f32 %v435, %v435
      %v443 = vadd.f32 %v441, %v442
      %v444 = vmul.f32 %v440, %v440
      %v445 = vadd.f32 %v443, %v444
      %v446 = vmax.f32 %v445, 1e-30
      %v447 = vrsqrt.pop %v446
      %v448 = vmul.f32 %v430, %v447
      %v449 = vmul.f32 %v435, %v447
      %v450 = vmul.f32 %v440, %v447
      %451 = vst [vmem:[#allocation14 + $0x18] sm:$0xff] %v448
      %452 = vst [vmem:[#allocation14 + $0x38] sm:$0xff] %v449
      %453 = vst [vmem:[#allocation14 + $0x58] sm:$0xff] %v450
      %v454 = vlaneseq
      %v455 = vshrl.u32 %v454, 7
      %v456 = vsub.s32 3, %v455
      %v457 = vrot.slane %v130, %v456
      %v458 = vmul.f32 %v457, %v448
      %v459 = vmul.f32 %v457, %v449
      %v460 = vmul.f32 %v457, %v450
      %v461 = vmul.f32 %v459, %v119
      %v462 = vmul.f32 %v460, %v118
      %v463 = vsub.f32 %v461, %v462
      %v464 = vmul.f32 %v460, %v117
      %v465 = vmul.f32 %v458, %v119
      %v466 = vsub.f32 %v464, %v465
      %v467 = vmul.f32 %v458, %v118
      %v468 = vmul.f32 %v459, %v117
      %v469 = vsub.f32 %v467, %v468
      %v470 = vlaneseq
      %v471 = vshrl.u32 %v470, 7
      %v472 = vsub.s32 3, %v471
      %v473 = vrot.slane %v129, %v472
      %v474 = vmul.f32 %v473, %v463
      %v475 = vadd.f32 %v117, %v474
      %v476 = vmul.f32 %v459, %v469
      %v477 = vmul.f32 %v460, %v466
      %v478 = vsub.f32 %v476, %v477
      %v479 = vadd.f32 %v475, %v478
      %v480 = vmul.f32 %v473, %v466
      %v481 = vadd.f32 %v118, %v480
      %v482 = vmul.f32 %v460, %v463
      %v483 = vmul.f32 %v458, %v469
      %v484 = vsub.f32 %v482, %v483
      %v485 = vadd.f32 %v481, %v484
      %v486 = vmul.f32 %v473, %v469
      %v487 = vadd.f32 %v119, %v486
      %v488 = vmul.f32 %v458, %v466
      %v489 = vmul.f32 %v459, %v463
      %v490 = vsub.f32 %v488, %v489
      %v491 = vadd.f32 %v487, %v490
      %v492 = vlaneseq
      %v493 = vshrl.u32 %v492, 7
      %v494 = vsub.s32 3, %v493
      %v495 = vrot.slane %v131, %v494
      %v496 = vmul.f32 %v495, %v479
      %v497 = vadd.f32 %v496, %v123
      %498 = vst [vmem:[#allocation2 + $0x18] sm:$0xff] %v497
      %v499 = vmul.f32 %v495, %v485
      %v500 = vadd.f32 %v499, %v124
      %501 = vst [vmem:[#allocation2 + $0x38] sm:$0xff] %v500
      %v502 = vmul.f32 %v495, %v491
      %v503 = vadd.f32 %v502, %v125
      %504 = vst [vmem:[#allocation2 + $0x58] sm:$0xff] %v503
    $region61: #{tpu_custom_call.1} parent=1 // pred_fallthru
      _
    %v505 = vld [vmem:[#allocation2] sm:$0xff]
    %v506 = vld [vmem:[#allocation2 + $0x8] sm:$0xff]
    %v507 = vld [vmem:[#allocation2 + $0x10] sm:$0xff]
    %v508 = vld [vmem:[#allocation2 + $0x18] sm:$0xff]
    %v509 = vld [vmem:[#allocation2 + $0x20] sm:$0xff]
    %v510 = vld [vmem:[#allocation2 + $0x28] sm:$0xff]
    %v511 = vld [vmem:[#allocation2 + $0x30] sm:$0xff]
    %v512 = vld [vmem:[#allocation2 + $0x38] sm:$0xff]
    %v513 = vld [vmem:[#allocation2 + $0x40] sm:$0xff]
    %v514 = vld [vmem:[#allocation2 + $0x48] sm:$0xff]
    %v515 = vld [vmem:[#allocation2 + $0x50] sm:$0xff]
    %v516 = vld [vmem:[#allocation2 + $0x58] sm:$0xff]
    %v517 = vld [vmem:[#allocation12] sm:$0xff]
    %v518 = vld [vmem:[#allocation12 + $0x8] sm:$0xff]
    %v519 = vld [vmem:[#allocation12 + $0x10] sm:$0xff]
    %v520 = vld [vmem:[#allocation12 + $0x18] sm:$0xff]
    %v521 = vld [vmem:[#allocation12 + $0x20] sm:$0xff]
    %v522 = vld [vmem:[#allocation12 + $0x28] sm:$0xff]
    %v523 = vld [vmem:[#allocation12 + $0x30] sm:$0xff]
    %v524 = vld [vmem:[#allocation12 + $0x38] sm:$0xff]
    %v525 = vld [vmem:[#allocation12 + $0x40] sm:$0xff]
    %v526 = vld [vmem:[#allocation12 + $0x48] sm:$0xff]
    %v527 = vld [vmem:[#allocation12 + $0x50] sm:$0xff]
    %v528 = vld [vmem:[#allocation12 + $0x58] sm:$0xff]
    %v529 = vld [vmem:[#allocation12 + $0x60] sm:$0xff]
    %v530 = vld [vmem:[#allocation12 + $0x68] sm:$0xff]
    %v531 = vld [vmem:[#allocation12 + $0x70] sm:$0xff]
    %v532 = vld [vmem:[#allocation12 + $0x78] sm:$0xff]
    %v533 = vld [vmem:[#allocation12 + $0x80] sm:$0xff]
    %v534 = vld [vmem:[#allocation12 + $0x88] sm:$0xff]
    %v535 = vld [vmem:[#allocation12 + $0x90] sm:$0xff]
    %v536 = vld [vmem:[#allocation12 + $0x98] sm:$0xff]
    %v537 = vld [vmem:[#allocation12 + $0xa0] sm:$0xff]
    %v538 = vld [vmem:[#allocation12 + $0xa8] sm:$0xff]
    %v539 = vld [vmem:[#allocation12 + $0xb0] sm:$0xff]
    %v540 = vld [vmem:[#allocation12 + $0xb8] sm:$0xff]
    %v541 = vld [vmem:[#allocation12 + $0xc0] sm:$0xff]
    %v542 = vld [vmem:[#allocation12 + $0xc8] sm:$0xff]
    %v543 = vld [vmem:[#allocation12 + $0xd0] sm:$0xff]
    %v544 = vld [vmem:[#allocation12 + $0xd8] sm:$0xff]
    %v545 = vld [vmem:[#allocation12 + $0xe0] sm:$0xff]
    %v546 = vld [vmem:[#allocation12 + $0xe8] sm:$0xff]
    %v547 = vld [vmem:[#allocation12 + $0xf0] sm:$0xff]
    %v548 = vld [vmem:[#allocation12 + $0xf8] sm:$0xff]
    %v549 = vld [vmem:[#allocation12 + $0x100] sm:$0xff]
    %v550 = vld [vmem:[#allocation12 + $0x108] sm:$0xff]
    %v551 = vld [vmem:[#allocation12 + $0x110] sm:$0xff]
    %v552 = vld [vmem:[#allocation12 + $0x118] sm:$0xff]
    %v553 = vld [vmem:[#allocation12 + $0x120] sm:$0xff]
    %v554 = vld [vmem:[#allocation12 + $0x128] sm:$0xff]
    %v555 = vld [vmem:[#allocation12 + $0x130] sm:$0xff]
    %v556 = vld [vmem:[#allocation12 + $0x138] sm:$0xff]
    %v557 = vld [vmem:[#allocation12 + $0x140] sm:$0xff]
    %v558 = vld [vmem:[#allocation12 + $0x148] sm:$0xff]
    %v559 = vld [vmem:[#allocation12 + $0x150] sm:$0xff]
    %v560 = vld [vmem:[#allocation12 + $0x158] sm:$0xff]
    %v561 = vld [vmem:[#allocation12 + $0x160] sm:$0xff]
    %v562 = vld [vmem:[#allocation12 + $0x168] sm:$0xff]
    %v563 = vld [vmem:[#allocation12 + $0x170] sm:$0xff]
    %v564 = vld [vmem:[#allocation12 + $0x178] sm:$0xff]
    %v565 = vld [vmem:[#allocation12 + $0x180] sm:$0xff]
    %v566 = vld [vmem:[#allocation12 + $0x188] sm:$0xff]
    %v567 = vld [vmem:[#allocation12 + $0x190] sm:$0xff]
    %v568 = vld [vmem:[#allocation12 + $0x198] sm:$0xff]
    %v569 = vld [vmem:[#allocation12 + $0x1a0] sm:$0xff]
    %v570 = vld [vmem:[#allocation12 + $0x1a8] sm:$0xff]
    %v571 = vld [vmem:[#allocation12 + $0x1b0] sm:$0xff]
    %v572 = vld [vmem:[#allocation12 + $0x1b8] sm:$0xff]
    %v573 = vld [vmem:[#allocation12 + $0x1c0] sm:$0xff]
    %v574 = vld [vmem:[#allocation12 + $0x1c8] sm:$0xff]
    %v575 = vld [vmem:[#allocation12 + $0x1d0] sm:$0xff]
    %v576 = vld [vmem:[#allocation12 + $0x1d8] sm:$0xff]
    %v577 = vld [vmem:[#allocation12 + $0x1e0] sm:$0xff]
    %v578 = vld [vmem:[#allocation12 + $0x1e8] sm:$0xff]
    %v579 = vld [vmem:[#allocation12 + $0x1f0] sm:$0xff]
    %v580 = vld [vmem:[#allocation12 + $0x1f8] sm:$0xff]
    %v581 = vld [vmem:[#allocation12 + $0x200] sm:$0xff]
    %v582 = vld [vmem:[#allocation12 + $0x208] sm:$0xff]
    %v583 = vld [vmem:[#allocation12 + $0x210] sm:$0xff]
    %v584 = vld [vmem:[#allocation12 + $0x218] sm:$0xff]
    %v585 = vld [vmem:[#allocation12 + $0x220] sm:$0xff]
    %v586 = vld [vmem:[#allocation12 + $0x228] sm:$0xff]
    %v587 = vld [vmem:[#allocation12 + $0x230] sm:$0xff]
    %v588 = vld [vmem:[#allocation12 + $0x238] sm:$0xff]
    %v589 = vld [vmem:[#allocation12 + $0x240] sm:$0xff]
    %v590 = vld [vmem:[#allocation12 + $0x248] sm:$0xff]
    %v591 = vld [vmem:[#allocation12 + $0x250] sm:$0xff]
    %v592 = vld [vmem:[#allocation12 + $0x258] sm:$0xff]
    %v593 = vld [vmem:[#allocation12 + $0x260] sm:$0xff]
    %v594 = vld [vmem:[#allocation12 + $0x268] sm:$0xff]
    %v595 = vld [vmem:[#allocation12 + $0x270] sm:$0xff]
    %v596 = vld [vmem:[#allocation12 + $0x278] sm:$0xff]
    %v597 = vld [vmem:[#allocation12 + $0x280] sm:$0xff]
    %v598 = vld [vmem:[#allocation12 + $0x288] sm:$0xff]
    %v599 = vld [vmem:[#allocation12 + $0x290] sm:$0xff]
    %v600 = vld [vmem:[#allocation12 + $0x298] sm:$0xff]
    %v601 = vld [vmem:[#allocation12 + $0x2a0] sm:$0xff]
    %v602 = vld [vmem:[#allocation12 + $0x2a8] sm:$0xff]
    %v603 = vld [vmem:[#allocation12 + $0x2b0] sm:$0xff]
    %v604 = vld [vmem:[#allocation12 + $0x2b8] sm:$0xff]
    %v605 = vld [vmem:[#allocation12 + $0x2c0] sm:$0xff]
    %v606 = vld [vmem:[#allocation12 + $0x2c8] sm:$0xff]
    %v607 = vld [vmem:[#allocation12 + $0x2d0] sm:$0xff]
    %v608 = vld [vmem:[#allocation12 + $0x2d8] sm:$0xff]
    %v609 = vld [vmem:[#allocation12 + $0x2e0] sm:$0xff]
    %v610 = vld [vmem:[#allocation12 + $0x2e8] sm:$0xff]
    %v611 = vld [vmem:[#allocation12 + $0x2f0] sm:$0xff]
    %v612 = vld [vmem:[#allocation12 + $0x2f8] sm:$0xff]
    %v613 = vld [vmem:[#allocation12 + $0x300] sm:$0xff]
    %v614 = vld [vmem:[#allocation12 + $0x308] sm:$0xff]
    %v615 = vld [vmem:[#allocation12 + $0x310] sm:$0xff]
    %v616 = vld [vmem:[#allocation12 + $0x318] sm:$0xff]
    %v617 = vld [vmem:[#allocation12 + $0x320] sm:$0xff]
    %v618 = vld [vmem:[#allocation12 + $0x328] sm:$0xff]
    %v619 = vld [vmem:[#allocation12 + $0x330] sm:$0xff]
    %v620 = vld [vmem:[#allocation12 + $0x338] sm:$0xff]
    %v621 = vld [vmem:[#allocation12 + $0x340] sm:$0xff]
    %v622 = vld [vmem:[#allocation12 + $0x348] sm:$0xff]
    %v623 = vld [vmem:[#allocation12 + $0x350] sm:$0xff]
    %v624 = vld [vmem:[#allocation12 + $0x358] sm:$0xff]
    %v625 = vld [vmem:[#allocation12 + $0x360] sm:$0xff]
    %v626 = vld [vmem:[#allocation12 + $0x368] sm:$0xff]
    %v627 = vld [vmem:[#allocation12 + $0x370] sm:$0xff]
    %v628 = vld [vmem:[#allocation12 + $0x378] sm:$0xff]
    %v629 = vld [vmem:[#allocation12 + $0x380] sm:$0xff]
    %v630 = vld [vmem:[#allocation12 + $0x388] sm:$0xff]
    %v631 = vld [vmem:[#allocation12 + $0x390] sm:$0xff]
    %v632 = vld [vmem:[#allocation12 + $0x398] sm:$0xff]
    %v633 = vld [vmem:[#allocation12 + $0x3a0] sm:$0xff]
    %v634 = vld [vmem:[#allocation12 + $0x3a8] sm:$0xff]
    %v635 = vld [vmem:[#allocation12 + $0x3b0] sm:$0xff]
    %v636 = vld [vmem:[#allocation12 + $0x3b8] sm:$0xff]
    %v637 = vld [vmem:[#allocation12 + $0x3c0] sm:$0xff]
    %v638 = vld [vmem:[#allocation12 + $0x3c8] sm:$0xff]
    %v639 = vld [vmem:[#allocation12 + $0x3d0] sm:$0xff]
    %v640 = vld [vmem:[#allocation12 + $0x3d8] sm:$0xff]
    %v641 = vld [vmem:[#allocation12 + $0x3e0] sm:$0xff]
    %v642 = vld [vmem:[#allocation12 + $0x3e8] sm:$0xff]
    %v643 = vld [vmem:[#allocation12 + $0x3f0] sm:$0xff]
    %v644 = vld [vmem:[#allocation12 + $0x3f8] sm:$0xff]
    %645 = vmatprep.subr.mxu0 %v548
    %646 = vmatpush1.msra.mxu0 %v547
    %647 = vmatprep.subr.mxu0 %v546
    %648 = vmatpush1.msra.mxu0 %v545
    %649 = vmatprep.subr.mxu0 %v544
    %650 = vmatpush1.msra.mxu0 %v543
    %651 = vmatprep.subr.mxu0 %v542
    %652 = vmatpush1.msra.mxu0 %v541
    %653 = vmatprep.subr.mxu0 %v540
    %654 = vmatpush1.msra.mxu0 %v539
    %655 = vmatprep.subr.mxu0 %v538
    %656 = vmatpush1.msra.mxu0 %v537
    %657 = vmatprep.subr.mxu0 %v536
    %658 = vmatpush1.msra.mxu0 %v535
    %659 = vmatprep.subr.mxu0 %v534
    %660 = vmatpush1.msra.mxu0 %v533
    %661 = vmatprep.subr.mxu0 %v532
    %662 = vmatpush1.msra.mxu0 %v531
    %663 = vmatprep.subr.mxu0 %v530
    %664 = vmatpush1.msra.mxu0 %v529
    %665 = vmatprep.subr.mxu0 %v528
    %666 = vmatpush1.msra.mxu0 %v527
    %667 = vmatprep.subr.mxu0 %v526
    %668 = vmatpush1.msra.mxu0 %v525
    %669 = vmatprep.subr.mxu0 %v524
    %670 = vmatpush1.msra.mxu0 %v523
    %671 = vmatprep.subr.mxu0 %v522
    %672 = vmatpush1.msra.mxu0 %v521
    %673 = vmatprep.subr.mxu0 %v520
    %674 = vmatpush1.msra.mxu0 %v519
    %675 = vmatprep.subr.mxu0 %v518
    %676 = vmatpush1.msra.mxu0 %v517
    %677 = vmatprep.subr.mxu0 %v580
    %678 = vmatpush2.msra.mxu0 %v579
    %679 = vmatprep.subr.mxu0 %v578
    %680 = vmatpush2.msra.mxu0 %v577
    %681 = vmatprep.subr.mxu0 %v576
    %682 = vmatpush2.msra.mxu0 %v575
    %683 = vmatprep.subr.mxu0 %v574
    %684 = vmatpush2.msra.mxu0 %v573
    %685 = vmatprep.subr.mxu0 %v572
    %686 = vmatpush2.msra.mxu0 %v571
    %687 = vmatprep.subr.mxu0 %v570
    %688 = vmatpush2.msra.mxu0 %v569
    %689 = vmatprep.subr.mxu0 %v568
    %690 = vmatpush2.msra.mxu0 %v567
    %691 = vmatprep.subr.mxu0 %v566
    %692 = vmatpush2.msra.mxu0 %v565
    %693 = vmatprep.subr.mxu0 %v564
    %694 = vmatpush2.msra.mxu0 %v563
    %695 = vmatprep.subr.mxu0 %v562
    %696 = vmatpush2.msra.mxu0 %v561
    %697 = vmatprep.subr.mxu0 %v560
    %698 = vmatpush2.msra.mxu0 %v559
    %699 = vmatprep.subr.mxu0 %v558
    %700 = vmatpush2.msra.mxu0 %v557
    %701 = vmatprep.subr.mxu0 %v556
    %702 = vmatpush2.msra.mxu0 %v555
    %703 = vmatprep.subr.mxu0 %v554
    %704 = vmatpush2.msra.mxu0 %v553
    %705 = vmatprep.subr.mxu0 %v552
    %706 = vmatpush2.msra.mxu0 %v551
    %707 = vmatprep.subr.mxu0 %v550
    %708 = vmatpush2.msra.mxu0 %v549
    %709 = vmatprep.mubr.f32.mxu0 %v506
    %710 = vmatmul.mubr.f32.gmra.mxu0 %v505
    %v711 = vpop.f32.mrf.mxu0
    %v712 = vadd.f32 0.0, %v711
    %v713 = vpop.f32.mrf.mxu0
    %v714 = vadd.f32 0.0, %v713
    %715 = vmatprep.mubr.f32.mxu0 %v510
    %716 = vmatmul.mubr.f32.gmra.mxu0 %v509
    %v717 = vpop.f32.mrf.mxu0
    %v718 = vadd.f32 0.0, %v717
    %v719 = vpop.f32.mrf.mxu0
    %v720 = vadd.f32 0.0, %v719
    %721 = vmatprep.mubr.f32.mxu0 %v514
    %722 = vmatmul.mubr.f32.gmra.mxu0 %v513
    %v723 = vpop.f32.mrf.mxu0
    %v724 = vadd.f32 0.0, %v723
    %v725 = vpop.f32.mrf.mxu0
    %v726 = vadd.f32 0.0, %v725
    %727 = vdwg.mxu0
    %728 = vmatprep.subr.mxu0 %v612
    %729 = vmatpush1.msra.mxu0 %v611
    %730 = vmatprep.subr.mxu0 %v610
    %731 = vmatpush1.msra.mxu0 %v609
    %732 = vmatprep.subr.mxu0 %v608
    %733 = vmatpush1.msra.mxu0 %v607
    %734 = vmatprep.subr.mxu0 %v606
    %735 = vmatpush1.msra.mxu0 %v605
    %736 = vmatprep.subr.mxu0 %v604
    %737 = vmatpush1.msra.mxu0 %v603
    %738 = vmatprep.subr.mxu0 %v602
    %739 = vmatpush1.msra.mxu0 %v601
    %740 = vmatprep.subr.mxu0 %v600
    %741 = vmatpush1.msra.mxu0 %v599
    %742 = vmatprep.subr.mxu0 %v598
    %743 = vmatpush1.msra.mxu0 %v597
    %744 = vmatprep.subr.mxu0 %v596
    %745 = vmatpush1.msra.mxu0 %v595
    %746 = vmatprep.subr.mxu0 %v594
    %747 = vmatpush1.msra.mxu0 %v593
    %748 = vmatprep.subr.mxu0 %v592
    %749 = vmatpush1.msra.mxu0 %v591
    %750 = vmatprep.subr.mxu0 %v590
    %751 = vmatpush1.msra.mxu0 %v589
    %752 = vmatprep.subr.mxu0 %v588
    %753 = vmatpush1.msra.mxu0 %v587
    %754 = vmatprep.subr.mxu0 %v586
    %755 = vmatpush1.msra.mxu0 %v585
    %756 = vmatprep.subr.mxu0 %v584
    %757 = vmatpush1.msra.mxu0 %v583
    %758 = vmatprep.subr.mxu0 %v582
    %759 = vmatpush1.msra.mxu0 %v581
    %760 = vmatprep.subr.mxu0 %v644
    %761 = vmatpush2.msra.mxu0 %v643
    %762 = vmatprep.subr.mxu0 %v642
    %763 = vmatpush2.msra.mxu0 %v641
    %764 = vmatprep.subr.mxu0 %v640
    %765 = vmatpush2.msra.mxu0 %v639
    %766 = vmatprep.subr.mxu0 %v638
    %767 = vmatpush2.msra.mxu0 %v637
    %768 = vmatprep.subr.mxu0 %v636
    %769 = vmatpush2.msra.mxu0 %v635
    %770 = vmatprep.subr.mxu0 %v634
    %771 = vmatpush2.msra.mxu0 %v633
    %772 = vmatprep.subr.mxu0 %v632
    %773 = vmatpush2.msra.mxu0 %v631
    %774 = vmatprep.subr.mxu0 %v630
    %775 = vmatpush2.msra.mxu0 %v629
    %776 = vmatprep.subr.mxu0 %v628
    %777 = vmatpush2.msra.mxu0 %v627
    %778 = vmatprep.subr.mxu0 %v626
    %779 = vmatpush2.msra.mxu0 %v625
    %780 = vmatprep.subr.mxu0 %v624
    %781 = vmatpush2.msra.mxu0 %v623
    %782 = vmatprep.subr.mxu0 %v622
    %783 = vmatpush2.msra.mxu0 %v621
    %784 = vmatprep.subr.mxu0 %v620
    %785 = vmatpush2.msra.mxu0 %v619
    %786 = vmatprep.subr.mxu0 %v618
    %787 = vmatpush2.msra.mxu0 %v617
    %788 = vmatprep.subr.mxu0 %v616
    %789 = vmatpush2.msra.mxu0 %v615
    %790 = vmatprep.subr.mxu0 %v614
    %791 = vmatpush2.msra.mxu0 %v613
    %792 = vmatprep.mubr.f32.mxu0 %v508
    %793 = vmatmul.mubr.f32.gmra.mxu0 %v507
    %v794 = vpop.f32.mrf.mxu0
    %v795 = vadd.f32 %v712, %v794
    %v796 = vpop.f32.mrf.mxu0
    %v797 = vadd.f32 %v714, %v796
    %798 = vmatprep.mubr.f32.mxu0 %v512
    %799 = vmatmul.mubr.f32.gmra.mxu0 %v511
    %v800 = vpop.f32.mrf.mxu0
    %v801 = vadd.f32 %v718, %v800
    %v802 = vpop.f32.mrf.mxu0
    %v803 = vadd.f32 %v720, %v802
    %804 = vmatprep.mubr.f32.mxu0 %v516
    %805 = vmatmul.mubr.f32.gmra.mxu0 %v515
    %v806 = vpop.f32.mrf.mxu0
    %v807 = vadd.f32 %v724, %v806
    %v808 = vpop.f32.mrf.mxu0
    %v809 = vadd.f32 %v726, %v808
    %810 = vdwg.mxu0
    %811 = vst [vmem:[#allocation15] sm:$0xff] %v795
    %812 = vst [vmem:[#allocation15 + $0x8] sm:$0xff] %v797
    %813 = vst [vmem:[#allocation15 + $0x10] sm:$0xff] %v801
    %814 = vst [vmem:[#allocation15 + $0x18] sm:$0xff] %v803
    %815 = vst [vmem:[#allocation15 + $0x20] sm:$0xff] %v807
    %816 = vst [vmem:[#allocation15 + $0x28] sm:$0xff] %v809
    // Predicated region
    $region62: #{tpu_custom_call.1} parent=1 // pred_check
      _
    $region63: #{tpu_custom_call.1} parent=1 // pred_check_branch
      %818 = sbr.rel (0) target = $region65
    $region64: #{tpu_custom_call.1} parent=1 // pred_region
      %s820 = ssub.s32 1536, 1536
      %821 = vsyncadd [#allocation5], %s820
      %s822 = sshll.u32 [#allocation14], 4
      %s823 = int_to_ptr.vmem [resolvable:$true] %s822
      %828 = dma.vmem_to_hbm [thread:$0]  %s823, 1536, %s8, [#allocation5], 512, 512, 32
    $region65: #{tpu_custom_call.1} parent=1 // pred_fallthru
      _
    // Predicated region
    $region66: #{tpu_custom_call.1} parent=1 // pred_check
      _
    $region67: #{tpu_custom_call.1} parent=1 // pred_check_branch
      %830 = sbr.rel (0) target = $region69
    $region68: #{tpu_custom_call.1} parent=1 // pred_region
      %s832 = ssub.s32 768, 768
      %833 = vsyncadd [#allocation16], %s832
      %s834 = sshll.u32 [#allocation15], 4
      %s835 = int_to_ptr.vmem [resolvable:$true] %s834
      %840 = dma.vmem_to_hbm [thread:$0]  %s835, 768, %s9, [#allocation16], 256, 256, 16
    $region69: #{tpu_custom_call.1} parent=1 // pred_fallthru
      _
    // Predicated region
    $region70: #{tpu_custom_call.1} parent=1 // pred_check
      _
    $region71: #{tpu_custom_call.1} parent=1 // pred_check_branch
      %842 = sbr.rel (0) target = $region73
    $region72: #{tpu_custom_call.1} parent=1 // pred_region
      %843 = dma.done [#allocation5], 1536
    $region73: #{tpu_custom_call.1} parent=1 // pred_fallthru
      _
    // Predicated region
    $region74: #{tpu_custom_call.1} parent=1 // pred_check
      _
    $region75: #{tpu_custom_call.1} parent=1 // pred_check_branch
      %845 = sbr.rel (0) target = $region77
    $region76: #{tpu_custom_call.1} parent=1 // pred_region
      %846 = dma.done [#allocation16], 768
    $region77: #{tpu_custom_call.1} parent=1 // pred_fallthru
      _
    %847 = vsyncpa [#allocation4], 1
    %848 = vsyncpa [#allocation7], 1
    %849 = vsyncpa [#allocation10], 1
    %850 = vsyncpa [#allocation13], 1
    %851 = vsyncpa [#allocation5], 1
    %852 = vsyncpa [#allocation16], 1

// kernel: tpu_custom_call.1
$region0: #{tpu_custom_call.1}
  #allocation0 [shape = 'u32[]', space=smem, size = 0x4, offset = 0x4, fixed_abs, tag = 'smem constant byte address 0x4 - core index']
  #allocation1 [shape = 'u32[144,128]{1,0:T(1,128)}', space=vmem, size = 0x12000, scoped, tag = 'internal scratch']
  #allocation2 [shape = 'f32[24,512]{1,0:T(8,128)}', space=vmem, size = 0xc000, scoped, tag = 'scratch operand']
  %s0 = inlined_call_operand.hbm [shape: f32[1,24,128], index: 0, kind: input, shape index: {}]
  %s1 = inlined_call_operand.hbm [shape: f32[1,24,128], index: 1, kind: input, shape index: {}]
  %s2 = inlined_call_operand.hbm [shape: f32[1,24,128], index: 2, kind: input, shape index: {}]
  %s3 = inlined_call_operand.hbm [shape: f32[3,4,128], index: 3, kind: input, shape index: {}]
  %s4 = inlined_call_operand.vmem [shape: f32[4,128], index: 4, kind: input, shape index: {}]
  %s5 = inlined_call_operand.vmem [shape: f32[4,128], index: 5, kind: input, shape index: {}]
  %s6 = inlined_call_operand.hbm [shape: f32[4,128], index: 6, kind: input, shape index: {}]
  %s7 = inlined_call_operand.hbm [shape: f32[512,256], index: 7, kind: input, shape index: {}]
  %s8 = inlined_call_operand.hbm [shape: f32[1,24,512], index: 8, kind: output, shape index: {0}]
  %s9 = inlined_call_operand.hbm [shape: f32[1,24,256], index: 9, kind: output, shape index: {1}]
  %10 = xla_tuple %s8, %s9
  %s11 = sld [smem:[#allocation0]]
  $region78: #{tpu_custom_call.1} parent=0
    _
  %s13 = ssub.s32 1, %s11
  %s14 = scalar_select 0, %s13, %s11
  $region1: #{tpu_custom_call.1} parent=0
    #allocation3 [shape = 'u8[12288]{0}', space=vmem, size = 0x3000, scoped, tag = 'input window, operand 0, single buffered']
    #allocation4 [shape = 's32[1]{0}', space=sflag, size = 0x4, scoped, tag = 'scoped memory for tpu_custom_call.1']
    #allocation5 [shape = 's32[1]{0}', space=sflag, size = 0x4, scoped, tag = 'scoped memory for tpu_custom_call.1']
    #allocation6 [shape = 'u8[12288]{0}', space=vmem, size = 0x3000, scoped, tag = 'input window, operand 1, single buffered']
    #allocation7 [shape = 's32[1]{0}', space=sflag, size = 0x4, scoped, tag = 'scoped memory for tpu_custom_call.1']
    #allocation8 [shape = 'u8[12288]{0}', space=vmem, size = 0x3000, scoped, tag = 'input window, operand 2, single buffered']
    #allocation9 [shape = 'u8[6144]{0}', space=vmem, size = 0x1800, scoped, tag = 'input window, operand 3, single buffered']
    #allocation10 [shape = 's32[1]{0}', space=sflag, size = 0x4, scoped, tag = 'scoped memory for tpu_custom_call.1']
    #allocation11 [shape = 'u8[2048]{0}', space=vmem, size = 0x800, scoped, tag = 'input window, operand 6, single buffered']
    #allocation12 [shape = 'u8[524288]{0}', space=vmem, size = 0x80000, scoped, tag = 'input window, operand 7, single buffered']
    #allocation13 [shape = 's32[1]{0}', space=sflag, size = 0x4, scoped, tag = 'scoped memory for tpu_custom_call.1']
    #allocation14 [shape = 'u8[49152]{0}', space=vmem, size = 0xc000, scoped, tag = 'output window, operand 0, single buffered']
    #allocation15 [shape = 'u8[24576]{0}', space=vmem, size = 0x6000, scoped, tag = 'output window, operand 1, single buffered']
    #allocation16 [shape = 's32[1]{0}', space=sflag, size = 0x4, scoped, tag = 'scoped memory for tpu_custom_call.1']
    %15 = vsyncpa [#allocation4], 0
    %16 = vsyncpa [#allocation7], 0
    %17 = vsyncpa [#allocation10], 0
    %18 = vsyncpa [#allocation13], 0
    %19 = vsyncpa [#allocation5], 0
    %20 = vsyncpa [#allocation16], 0
    // Predicated region
    $region2: #{tpu_custom_call.1} parent=1 // pred_check
      _
    $region3: #{tpu_custom_call.1} parent=1 // pred_check_branch
      %22 = sbr.rel (0) target = $region5
    $region4: #{tpu_custom_call.1} parent=1 // pred_region
      %s24 = ssub.s32 384, 384
      %25 = vsyncadd [#allocation4], %s24
      %s26 = sshll.u32 [#allocation3], 4
      %s27 = int_to_ptr.vmem [resolvable:$true] %s26
      %32 = dma.hbm_to_vmem [thread:$0]  %s0, 384, %s27, [#allocation4], 128, 128, 8
    $region5: #{tpu_custom_call.1} parent=1 // pred_fallthru
      _
    // Predicated region
    $region6: #{tpu_custom_call.1} parent=1 // pred_check
      _
    $region7: #{tpu_custom_call.1} parent=1 // pred_check_branch
      %34 = sbr.rel (0) target = $region9
    $region8: #{tpu_custom_call.1} parent=1 // pred_region
      %s36 = ssub.s32 384, 384
      %37 = vsyncadd [#allocation7], %s36
      %s38 = sshll.u32 [#allocation6], 4
      %s39 = int_to_ptr.vmem [resolvable:$true] %s38
      %44 = dma.hbm_to_vmem [thread:$0]  %s1, 384, %s39, [#allocation7], 128, 128, 8
    $region9: #{tpu_custom_call.1} parent=1 // pred_fallthru
      _
    // Predicated region
    $region10: #{tpu_custom_call.1} parent=1 // pred_check
      _
    $region11: #{tpu_custom_call.1} parent=1 // pred_check_branch
      %46 = sbr.rel (0) target = $region13
    $region12: #{tpu_custom_call.1} parent=1 // pred_region
      %s48 = ssub.s32 384, 384
      %49 = vsyncadd [#allocation7], %s48
      %s50 = sshll.u32 [#allocation8], 4
      %s51 = int_to_ptr.vmem [resolvable:$true] %s50
      %56 = dma.hbm_to_vmem [thread:$0]  %s2, 384, %s51, [#allocation7], 128, 128, 8
    $region13: #{tpu_custom_call.1} parent=1 // pred_fallthru
      _
    // Predicated region
    $region14: #{tpu_custom_call.1} parent=1 // pred_check
      _
    $region15: #{tpu_custom_call.1} parent=1 // pred_check_branch
      %58 = sbr.rel (0) target = $region17
    $region16: #{tpu_custom_call.1} parent=1 // pred_region
      %s60 = ssub.s32 192, 192
      %61 = vsyncadd [#allocation10], %s60
      %s62 = sshll.u32 [#allocation9], 4
      %s63 = int_to_ptr.vmem [resolvable:$true] %s62
      %68 = dma.hbm_to_vmem [thread:$0]  %s3, 192, %s63, [#allocation10], 64, 64, 4
    $region17: #{tpu_custom_call.1} parent=1 // pred_fallthru
      _
    // Predicated region
    $region18: #{tpu_custom_call.1} parent=1 // pred_check
      _
    $region19: #{tpu_custom_call.1} parent=1 // pred_check_branch
      %70 = sbr.rel (0) target = $region21
    $region20: #{tpu_custom_call.1} parent=1 // pred_region
      _
    $region21: #{tpu_custom_call.1} parent=1 // pred_fallthru
      _
    // Predicated region
    $region22: #{tpu_custom_call.1} parent=1 // pred_check
      _
    $region23: #{tpu_custom_call.1} parent=1 // pred_check_branch
      %72 = sbr.rel (0) target = $region25
    $region24: #{tpu_custom_call.1} parent=1 // pred_region
      _
    $region25: #{tpu_custom_call.1} parent=1 // pred_fallthru
      _
    // Predicated region
    $region26: #{tpu_custom_call.1} parent=1 // pred_check
      _
    $region27: #{tpu_custom_call.1} parent=1 // pred_check_branch
      %74 = sbr.rel (0) target = $region29
    $region28: #{tpu_custom_call.1} parent=1 // pred_region
      %s76 = ssub.s32 64, 64
      %77 = vsyncadd [#allocation10], %s76
      %s79 = sshll.u32 [#allocation11], 4
      %s80 = int_to_ptr.vmem [resolvable:$true] %s79
      %82 = dma.hbm_to_vmem [thread:$0]  %s6, 64, %s80, [#allocation10]
    $region29: #{tpu_custom_call.1} parent=1 // pred_fallthru
      _
    // Predicated region
    $region30: #{tpu_custom_call.1} parent=1 // pred_check
      _
    $region31: #{tpu_custom_call.1} parent=1 // pred_check_branch
      %84 = sbr.rel (0) target = $region33
    $region32: #{tpu_custom_call.1} parent=1 // pred_region
      %s86 = ssub.s32 16384, 16384
      %87 = vsyncadd [#allocation13], %s86
      %s88 = sshll.u32 [#allocation12], 4
      %s89 = int_to_ptr.vmem [resolvable:$true] %s88
      %94 = dma.hbm_to_vmem [thread:$0]  %s7, 16384, %s89, [#allocation13], 256, 256, 16
    $region33: #{tpu_custom_call.1} parent=1 // pred_fallthru
      _
    // Predicated region
    $region34: #{tpu_custom_call.1} parent=1 // pred_check
      _
    $region35: #{tpu_custom_call.1} parent=1 // pred_check_branch
      %96 = sbr.rel (0) target = $region37
    $region36: #{tpu_custom_call.1} parent=1 // pred_region
      %97 = dma.done [#allocation4], 384
    $region37: #{tpu_custom_call.1} parent=1 // pred_fallthru
      _
    // Predicated region
    $region38: #{tpu_custom_call.1} parent=1 // pred_check
      _
    $region39: #{tpu_custom_call.1} parent=1 // pred_check_branch
      %99 = sbr.rel (0) target = $region41
    $region40: #{tpu_custom_call.1} parent=1 // pred_region
      %100 = dma.done [#allocation7], 384
    $region41: #{tpu_custom_call.1} parent=1 // pred_fallthru
      _
    // Predicated region
    $region42: #{tpu_custom_call.1} parent=1 // pred_check
      _
    $region43: #{tpu_custom_call.1} parent=1 // pred_check_branch
      %102 = sbr.rel (0) target = $region45
    $region44: #{tpu_custom_call.1} parent=1 // pred_region
      %103 = dma.done [#allocation7], 384
    $region45: #{tpu_custom_call.1} parent=1 // pred_fallthru
      _
    // Predicated region
    $region46: #{tpu_custom_call.1} parent=1 // pred_check
      _
    $region47: #{tpu_custom_call.1} parent=1 // pred_check_branch
      %105 = sbr.rel (0) target = $region49
    $region48: #{tpu_custom_call.1} parent=1 // pred_region
      %106 = dma.done [#allocation10], 192
    $region49: #{tpu_custom_call.1} parent=1 // pred_fallthru
      _
    // Predicated region
    $region50: #{tpu_custom_call.1} parent=1 // pred_check
      _
    $region51: #{tpu_custom_call.1} parent=1 // pred_check_branch
      %108 = sbr.rel (0) target = $region53
    $region52: #{tpu_custom_call.1} parent=1 // pred_region
      %109 = dma.done [#allocation10], 64
    $region53: #{tpu_custom_call.1} parent=1 // pred_fallthru
      _
    // Predicated region
    $region54: #{tpu_custom_call.1} parent=1 // pred_check
      _
    $region55: #{tpu_custom_call.1} parent=1 // pred_check_branch
      %111 = sbr.rel (0) target = $region57
    $region56: #{tpu_custom_call.1} parent=1 // pred_region
      %112 = dma.done [#allocation13], 16384
    $region57: #{tpu_custom_call.1} parent=1 // pred_fallthru
      _
    %p113 = scmp.eq.s32.totalorder 0, 0
    // Predicated region
    $region58: #{tpu_custom_call.1} parent=1 // pred_check
      %p114 = pneg %p113
    $region59: #{tpu_custom_call.1} parent=1 // pred_check_branch
      %116 = sbr.rel (%p114) target = $region61
    $region60: #{tpu_custom_call.1} parent=1 // pred_region
      %v117 = vld [vmem:[#allocation3] sm:$0xff]
      %v118 = vld [vmem:[#allocation3 + $0x8] sm:$0xff]
      %v119 = vld [vmem:[#allocation3 + $0x10] sm:$0xff]
      %v120 = vld [vmem:[#allocation6] sm:$0xff]
      %v121 = vld [vmem:[#allocation6 + $0x8] sm:$0xff]
      %v122 = vld [vmem:[#allocation6 + $0x10] sm:$0xff]
      %v123 = vld [vmem:[#allocation8] sm:$0xff]
      %v124 = vld [vmem:[#allocation8 + $0x8] sm:$0xff]
      %v125 = vld [vmem:[#allocation8 + $0x10] sm:$0xff]
      %v126 = vld [vmem:[#allocation9] sm:$0xf]
      %v127 = vld [vmem:[#allocation9 + $0x4] sm:$0xf]
      %v128 = vld [vmem:[#allocation9 + $0x8] sm:$0xf]
      %v129 = vld [vmem:[%s4] sm:$0xf]
      %v130 = vld [vmem:[%s5] sm:$0xf]
      %v131 = vld [vmem:[#allocation11] sm:$0xf]
      %v132 = vmul.f32 %v118, %v122
      %v133 = vmul.f32 %v119, %v121
      %v134 = vsub.f32 %v132, %v133
      %v135 = vmul.f32 %v119, %v120
      %v136 = vmul.f32 %v117, %v122
      %v137 = vsub.f32 %v135, %v136
      %v138 = vmul.f32 %v117, %v121
      %v139 = vmul.f32 %v118, %v120
      %v140 = vsub.f32 %v138, %v139
      %v141 = vlaneseq
      %v142 = vshrl.u32 %v141, 7
      %v143 = vsub.s32 0, %v142
      %v144 = vrot.slane %v126, %v143
      %v145 = vmul.f32 %v144, %v117
      %v146 = vlaneseq
      %v147 = vshrl.u32 %v146, 7
      %v148 = vsub.s32 0, %v147
      %v149 = vrot.slane %v127, %v148
      %v150 = vmul.f32 %v149, %v120
      %v151 = vadd.f32 %v145, %v150
      %v152 = vlaneseq
      %v153 = vshrl.u32 %v152, 7
      %v154 = vsub.s32 0, %v153
      %v155 = vrot.slane %v128, %v154
      %v156 = vmul.f32 %v155, %v134
      %v157 = vadd.f32 %v151, %v156
      %v158 = vmul.f32 %v144, %v118
      %v159 = vmul.f32 %v149, %v121
      %v160 = vadd.f32 %v158, %v159
      %v161 = vmul.f32 %v155, %v137
      %v162 = vadd.f32 %v160, %v161
      %v163 = vmul.f32 %v144, %v119
      %v164 = vmul.f32 %v149, %v122
      %v165 = vadd.f32 %v163, %v164
      %v166 = vmul.f32 %v155, %v140
      %v167 = vadd.f32 %v165, %v166
      %v168 = vmul.f32 %v157, %v157
      %v169 = vmul.f32 %v162, %v162
      %v170 = vadd.f32 %v168, %v169
      %v171 = vmul.f32 %v167, %v167
      %v172 = vadd.f32 %v170, %v171
      %v173 = vmax.f32 %v172, 1e-30
      %v174 = vrsqrt.pop %v173
      %v175 = vmul.f32 %v157, %v174
      %v176 = vmul.f32 %v162, %v174
      %v177 = vmul.f32 %v167, %v174
      %178 = vst [vmem:[#allocation14] sm:$0xff] %v175
      %179 = vst [vmem:[#allocation14 + $0x20] sm:$0xff] %v176
      %180 = vst [vmem:[#allocation14 + $0x40] sm:$0xff] %v177
      %v181 = vlaneseq
      %v182 = vshrl.u32 %v181, 7
      %v183 = vsub.s32 0, %v182
      %v184 = vrot.slane %v130, %v183
      %v185 = vmul.f32 %v184, %v175
      %v186 = vmul.f32 %v184, %v176
      %v187 = vmul.f32 %v184, %v177
      %v188 = vmul.f32 %v186, %v119
      %v189 = vmul.f32 %v187, %v118
      %v190 = vsub.f32 %v188, %v189
      %v191 = vmul.f32 %v187, %v117
      %v192 = vmul.f32 %v185, %v119
      %v193 = vsub.f32 %v191, %v192
      %v194 = vmul.f32 %v185, %v118
      %v195 = vmul.f32 %v186, %v117
      %v196 = vsub.f32 %v194, %v195
      %v197 = vlaneseq
      %v198 = vshrl.u32 %v197, 7
      %v199 = vsub.s32 0, %v198
      %v200 = vrot.slane %v129, %v199
      %v201 = vmul.f32 %v200, %v190
      %v202 = vadd.f32 %v117, %v201
      %v203 = vmul.f32 %v186, %v196
      %v204 = vmul.f32 %v187, %v193
      %v205 = vsub.f32 %v203, %v204
      %v206 = vadd.f32 %v202, %v205
      %v207 = vmul.f32 %v200, %v193
      %v208 = vadd.f32 %v118, %v207
      %v209 = vmul.f32 %v187, %v190
      %v210 = vmul.f32 %v185, %v196
      %v211 = vsub.f32 %v209, %v210
      %v212 = vadd.f32 %v208, %v211
      %v213 = vmul.f32 %v200, %v196
      %v214 = vadd.f32 %v119, %v213
      %v215 = vmul.f32 %v185, %v193
      %v216 = vmul.f32 %v186, %v190
      %v217 = vsub.f32 %v215, %v216
      %v218 = vadd.f32 %v214, %v217
      %v219 = vlaneseq
      %v220 = vshrl.u32 %v219, 7
      %v221 = vsub.s32 0, %v220
      %v222 = vrot.slane %v131, %v221
      %v223 = vmul.f32 %v222, %v206
      %v224 = vadd.f32 %v223, %v123
      %225 = vst [vmem:[#allocation2] sm:$0xff] %v224
      %v226 = vmul.f32 %v222, %v212
      %v227 = vadd.f32 %v226, %v124
      %228 = vst [vmem:[#allocation2 + $0x20] sm:$0xff] %v227
      %v229 = vmul.f32 %v222, %v218
      %v230 = vadd.f32 %v229, %v125
      %231 = vst [vmem:[#allocation2 + $0x40] sm:$0xff] %v230
      %v232 = vlaneseq
      %v233 = vshrl.u32 %v232, 7
      %v234 = vsub.s32 1, %v233
      %v235 = vrot.slane %v126, %v234
      %v236 = vmul.f32 %v235, %v117
      %v237 = vlaneseq
      %v238 = vshrl.u32 %v237, 7
      %v239 = vsub.s32 1, %v238
      %v240 = vrot.slane %v127, %v239
      %v241 = vmul.f32 %v240, %v120
      %v242 = vadd.f32 %v236, %v241
      %v243 = vlaneseq
      %v244 = vshrl.u32 %v243, 7
      %v245 = vsub.s32 1, %v244
      %v246 = vrot.slane %v128, %v245
      %v247 = vmul.f32 %v246, %v134
      %v248 = vadd.f32 %v242, %v247
      %v249 = vmul.f32 %v235, %v118
      %v250 = vmul.f32 %v240, %v121
      %v251 = vadd.f32 %v249, %v250
      %v252 = vmul.f32 %v246, %v137
      %v253 = vadd.f32 %v251, %v252
      %v254 = vmul.f32 %v235, %v119
      %v255 = vmul.f32 %v240, %v122
      %v256 = vadd.f32 %v254, %v255
      %v257 = vmul.f32 %v246, %v140
      %v258 = vadd.f32 %v256, %v257
      %v259 = vmul.f32 %v248, %v248
      %v260 = vmul.f32 %v253, %v253
      %v261 = vadd.f32 %v259, %v260
      %v262 = vmul.f32 %v258, %v258
      %v263 = vadd.f32 %v261, %v262
      %v264 = vmax.f32 %v263, 1e-30
      %v265 = vrsqrt.pop %v264
      %v266 = vmul.f32 %v248, %v265
      %v267 = vmul.f32 %v253, %v265
      %v268 = vmul.f32 %v258, %v265
      %269 = vst [vmem:[#allocation14 + $0x8] sm:$0xff] %v266
      %270 = vst [vmem:[#allocation14 + $0x28] sm:$0xff] %v267
      %271 = vst [vmem:[#allocation14 + $0x48] sm:$0xff] %v268
      %v272 = vlaneseq
      %v273 = vshrl.u32 %v272, 7
      %v274 = vsub.s32 1, %v273
      %v275 = vrot.slane %v130, %v274
      %v276 = vmul.f32 %v275, %v266
      %v277 = vmul.f32 %v275, %v267
      %v278 = vmul.f32 %v275, %v268
      %v279 = vmul.f32 %v277, %v119
      %v280 = vmul.f32 %v278, %v118
      %v281 = vsub.f32 %v279, %v280
      %v282 = vmul.f32 %v278, %v117
      %v283 = vmul.f32 %v276, %v119
      %v284 = vsub.f32 %v282, %v283
      %v285 = vmul.f32 %v276, %v118
      %v286 = vmul.f32 %v277, %v117
      %v287 = vsub.f32 %v285, %v286
      %v288 = vlaneseq
      %v289 = vshrl.u32 %v288, 7
      %v290 = vsub.s32 1, %v289
      %v291 = vrot.slane %v129, %v290
      %v292 = vmul.f32 %v291, %v281
      %v293 = vadd.f32 %v117, %v292
      %v294 = vmul.f32 %v277, %v287
      %v295 = vmul.f32 %v278, %v284
      %v296 = vsub.f32 %v294, %v295
      %v297 = vadd.f32 %v293, %v296
      %v298 = vmul.f32 %v291, %v284
      %v299 = vadd.f32 %v118, %v298
      %v300 = vmul.f32 %v278, %v281
      %v301 = vmul.f32 %v276, %v287
      %v302 = vsub.f32 %v300, %v301
      %v303 = vadd.f32 %v299, %v302
      %v304 = vmul.f32 %v291, %v287
      %v305 = vadd.f32 %v119, %v304
      %v306 = vmul.f32 %v276, %v284
      %v307 = vmul.f32 %v277, %v281
      %v308 = vsub.f32 %v306, %v307
      %v309 = vadd.f32 %v305, %v308
      %v310 = vlaneseq
      %v311 = vshrl.u32 %v310, 7
      %v312 = vsub.s32 1, %v311
      %v313 = vrot.slane %v131, %v312
      %v314 = vmul.f32 %v313, %v297
      %v315 = vadd.f32 %v314, %v123
      %316 = vst [vmem:[#allocation2 + $0x8] sm:$0xff] %v315
      %v317 = vmul.f32 %v313, %v303
      %v318 = vadd.f32 %v317, %v124
      %319 = vst [vmem:[#allocation2 + $0x28] sm:$0xff] %v318
      %v320 = vmul.f32 %v313, %v309
      %v321 = vadd.f32 %v320, %v125
      %322 = vst [vmem:[#allocation2 + $0x48] sm:$0xff] %v321
      %v323 = vlaneseq
      %v324 = vshrl.u32 %v323, 7
      %v325 = vsub.s32 2, %v324
      %v326 = vrot.slane %v126, %v325
      %v327 = vmul.f32 %v326, %v117
      %v328 = vlaneseq
      %v329 = vshrl.u32 %v328, 7
      %v330 = vsub.s32 2, %v329
      %v331 = vrot.slane %v127, %v330
      %v332 = vmul.f32 %v331, %v120
      %v333 = vadd.f32 %v327, %v332
      %v334 = vlaneseq
      %v335 = vshrl.u32 %v334, 7
      %v336 = vsub.s32 2, %v335
      %v337 = vrot.slane %v128, %v336
      %v338 = vmul.f32 %v337, %v134
      %v339 = vadd.f32 %v333, %v338
      %v340 = vmul.f32 %v326, %v118
      %v341 = vmul.f32 %v331, %v121
      %v342 = vadd.f32 %v340, %v341
      %v343 = vmul.f32 %v337, %v137
      %v344 = vadd.f32 %v342, %v343
      %v345 = vmul.f32 %v326, %v119
      %v346 = vmul.f32 %v331, %v122
      %v347 = vadd.f32 %v345, %v346
      %v348 = vmul.f32 %v337, %v140
      %v349 = vadd.f32 %v347, %v348
      %v350 = vmul.f32 %v339, %v339
      %v351 = vmul.f32 %v344, %v344
      %v352 = vadd.f32 %v350, %v351
      %v353 = vmul.f32 %v349, %v349
      %v354 = vadd.f32 %v352, %v353
      %v355 = vmax.f32 %v354, 1e-30
      %v356 = vrsqrt.pop %v355
      %v357 = vmul.f32 %v339, %v356
      %v358 = vmul.f32 %v344, %v356
      %v359 = vmul.f32 %v349, %v356
      %360 = vst [vmem:[#allocation14 + $0x10] sm:$0xff] %v357
      %361 = vst [vmem:[#allocation14 + $0x30] sm:$0xff] %v358
      %362 = vst [vmem:[#allocation14 + $0x50] sm:$0xff] %v359
      %v363 = vlaneseq
      %v364 = vshrl.u32 %v363, 7
      %v365 = vsub.s32 2, %v364
      %v366 = vrot.slane %v130, %v365
      %v367 = vmul.f32 %v366, %v357
      %v368 = vmul.f32 %v366, %v358
      %v369 = vmul.f32 %v366, %v359
      %v370 = vmul.f32 %v368, %v119
      %v371 = vmul.f32 %v369, %v118
      %v372 = vsub.f32 %v370, %v371
      %v373 = vmul.f32 %v369, %v117
      %v374 = vmul.f32 %v367, %v119
      %v375 = vsub.f32 %v373, %v374
      %v376 = vmul.f32 %v367, %v118
      %v377 = vmul.f32 %v368, %v117
      %v378 = vsub.f32 %v376, %v377
      %v379 = vlaneseq
      %v380 = vshrl.u32 %v379, 7
      %v381 = vsub.s32 2, %v380
      %v382 = vrot.slane %v129, %v381
      %v383 = vmul.f32 %v382, %v372
      %v384 = vadd.f32 %v117, %v383
      %v385 = vmul.f32 %v368, %v378
      %v386 = vmul.f32 %v369, %v375
      %v387 = vsub.f32 %v385, %v386
      %v388 = vadd.f32 %v384, %v387
      %v389 = vmul.f32 %v382, %v375
      %v390 = vadd.f32 %v118, %v389
      %v391 = vmul.f32 %v369, %v372
      %v392 = vmul.f32 %v367, %v378
      %v393 = vsub.f32 %v391, %v392
      %v394 = vadd.f32 %v390, %v393
      %v395 = vmul.f32 %v382, %v378
      %v396 = vadd.f32 %v119, %v395
      %v397 = vmul.f32 %v367, %v375
      %v398 = vmul.f32 %v368, %v372
      %v399 = vsub.f32 %v397, %v398
      %v400 = vadd.f32 %v396, %v399
      %v401 = vlaneseq
      %v402 = vshrl.u32 %v401, 7
      %v403 = vsub.s32 2, %v402
      %v404 = vrot.slane %v131, %v403
      %v405 = vmul.f32 %v404, %v388
      %v406 = vadd.f32 %v405, %v123
      %407 = vst [vmem:[#allocation2 + $0x10] sm:$0xff] %v406
      %v408 = vmul.f32 %v404, %v394
      %v409 = vadd.f32 %v408, %v124
      %410 = vst [vmem:[#allocation2 + $0x30] sm:$0xff] %v409
      %v411 = vmul.f32 %v404, %v400
      %v412 = vadd.f32 %v411, %v125
      %413 = vst [vmem:[#allocation2 + $0x50] sm:$0xff] %v412
      %v414 = vlaneseq
      %v415 = vshrl.u32 %v414, 7
      %v416 = vsub.s32 3, %v415
      %v417 = vrot.slane %v126, %v416
      %v418 = vmul.f32 %v417, %v117
      %v419 = vlaneseq
      %v420 = vshrl.u32 %v419, 7
      %v421 = vsub.s32 3, %v420
      %v422 = vrot.slane %v127, %v421
      %v423 = vmul.f32 %v422, %v120
      %v424 = vadd.f32 %v418, %v423
      %v425 = vlaneseq
      %v426 = vshrl.u32 %v425, 7
      %v427 = vsub.s32 3, %v426
      %v428 = vrot.slane %v128, %v427
      %v429 = vmul.f32 %v428, %v134
      %v430 = vadd.f32 %v424, %v429
      %v431 = vmul.f32 %v417, %v118
      %v432 = vmul.f32 %v422, %v121
      %v433 = vadd.f32 %v431, %v432
      %v434 = vmul.f32 %v428, %v137
      %v435 = vadd.f32 %v433, %v434
      %v436 = vmul.f32 %v417, %v119
      %v437 = vmul.f32 %v422, %v122
      %v438 = vadd.f32 %v436, %v437
      %v439 = vmul.f32 %v428, %v140
      %v440 = vadd.f32 %v438, %v439
      %v441 = vmul.f32 %v430, %v430
      %v442 = vmul.f32 %v435, %v435
      %v443 = vadd.f32 %v441, %v442
      %v444 = vmul.f32 %v440, %v440
      %v445 = vadd.f32 %v443, %v444
      %v446 = vmax.f32 %v445, 1e-30
      %v447 = vrsqrt.pop %v446
      %v448 = vmul.f32 %v430, %v447
      %v449 = vmul.f32 %v435, %v447
      %v450 = vmul.f32 %v440, %v447
      %451 = vst [vmem:[#allocation14 + $0x18] sm:$0xff] %v448
      %452 = vst [vmem:[#allocation14 + $0x38] sm:$0xff] %v449
      %453 = vst [vmem:[#allocation14 + $0x58] sm:$0xff] %v450
      %v454 = vlaneseq
      %v455 = vshrl.u32 %v454, 7
      %v456 = vsub.s32 3, %v455
      %v457 = vrot.slane %v130, %v456
      %v458 = vmul.f32 %v457, %v448
      %v459 = vmul.f32 %v457, %v449
      %v460 = vmul.f32 %v457, %v450
      %v461 = vmul.f32 %v459, %v119
      %v462 = vmul.f32 %v460, %v118
      %v463 = vsub.f32 %v461, %v462
      %v464 = vmul.f32 %v460, %v117
      %v465 = vmul.f32 %v458, %v119
      %v466 = vsub.f32 %v464, %v465
      %v467 = vmul.f32 %v458, %v118
      %v468 = vmul.f32 %v459, %v117
      %v469 = vsub.f32 %v467, %v468
      %v470 = vlaneseq
      %v471 = vshrl.u32 %v470, 7
      %v472 = vsub.s32 3, %v471
      %v473 = vrot.slane %v129, %v472
      %v474 = vmul.f32 %v473, %v463
      %v475 = vadd.f32 %v117, %v474
      %v476 = vmul.f32 %v459, %v469
      %v477 = vmul.f32 %v460, %v466
      %v478 = vsub.f32 %v476, %v477
      %v479 = vadd.f32 %v475, %v478
      %v480 = vmul.f32 %v473, %v466
      %v481 = vadd.f32 %v118, %v480
      %v482 = vmul.f32 %v460, %v463
      %v483 = vmul.f32 %v458, %v469
      %v484 = vsub.f32 %v482, %v483
      %v485 = vadd.f32 %v481, %v484
      %v486 = vmul.f32 %v473, %v469
      %v487 = vadd.f32 %v119, %v486
      %v488 = vmul.f32 %v458, %v466
      %v489 = vmul.f32 %v459, %v463
      %v490 = vsub.f32 %v488, %v489
      %v491 = vadd.f32 %v487, %v490
      %v492 = vlaneseq
      %v493 = vshrl.u32 %v492, 7
      %v494 = vsub.s32 3, %v493
      %v495 = vrot.slane %v131, %v494
      %v496 = vmul.f32 %v495, %v479
      %v497 = vadd.f32 %v496, %v123
      %498 = vst [vmem:[#allocation2 + $0x18] sm:$0xff] %v497
      %v499 = vmul.f32 %v495, %v485
      %v500 = vadd.f32 %v499, %v124
      %501 = vst [vmem:[#allocation2 + $0x38] sm:$0xff] %v500
      %v502 = vmul.f32 %v495, %v491
      %v503 = vadd.f32 %v502, %v125
      %504 = vst [vmem:[#allocation2 + $0x58] sm:$0xff] %v503
    $region61: #{tpu_custom_call.1} parent=1 // pred_fallthru
      _
    %v505 = vld [vmem:[#allocation2] sm:$0xff]
    %v506 = vld [vmem:[#allocation2 + $0x8] sm:$0xff]
    %v507 = vld [vmem:[#allocation2 + $0x10] sm:$0xff]
    %v508 = vld [vmem:[#allocation2 + $0x18] sm:$0xff]
    %v509 = vld [vmem:[#allocation2 + $0x20] sm:$0xff]
    %v510 = vld [vmem:[#allocation2 + $0x28] sm:$0xff]
    %v511 = vld [vmem:[#allocation2 + $0x30] sm:$0xff]
    %v512 = vld [vmem:[#allocation2 + $0x38] sm:$0xff]
    %v513 = vld [vmem:[#allocation2 + $0x40] sm:$0xff]
    %v514 = vld [vmem:[#allocation2 + $0x48] sm:$0xff]
    %v515 = vld [vmem:[#allocation2 + $0x50] sm:$0xff]
    %v516 = vld [vmem:[#allocation2 + $0x58] sm:$0xff]
    %v517 = vld [vmem:[#allocation12] sm:$0xff]
    %v518 = vld [vmem:[#allocation12 + $0x8] sm:$0xff]
    %v519 = vld [vmem:[#allocation12 + $0x10] sm:$0xff]
    %v520 = vld [vmem:[#allocation12 + $0x18] sm:$0xff]
    %v521 = vld [vmem:[#allocation12 + $0x20] sm:$0xff]
    %v522 = vld [vmem:[#allocation12 + $0x28] sm:$0xff]
    %v523 = vld [vmem:[#allocation12 + $0x30] sm:$0xff]
    %v524 = vld [vmem:[#allocation12 + $0x38] sm:$0xff]
    %v525 = vld [vmem:[#allocation12 + $0x40] sm:$0xff]
    %v526 = vld [vmem:[#allocation12 + $0x48] sm:$0xff]
    %v527 = vld [vmem:[#allocation12 + $0x50] sm:$0xff]
    %v528 = vld [vmem:[#allocation12 + $0x58] sm:$0xff]
    %v529 = vld [vmem:[#allocation12 + $0x60] sm:$0xff]
    %v530 = vld [vmem:[#allocation12 + $0x68] sm:$0xff]
    %v531 = vld [vmem:[#allocation12 + $0x70] sm:$0xff]
    %v532 = vld [vmem:[#allocation12 + $0x78] sm:$0xff]
    %v533 = vld [vmem:[#allocation12 + $0x80] sm:$0xff]
    %v534 = vld [vmem:[#allocation12 + $0x88] sm:$0xff]
    %v535 = vld [vmem:[#allocation12 + $0x90] sm:$0xff]
    %v536 = vld [vmem:[#allocation12 + $0x98] sm:$0xff]
    %v537 = vld [vmem:[#allocation12 + $0xa0] sm:$0xff]
    %v538 = vld [vmem:[#allocation12 + $0xa8] sm:$0xff]
    %v539 = vld [vmem:[#allocation12 + $0xb0] sm:$0xff]
    %v540 = vld [vmem:[#allocation12 + $0xb8] sm:$0xff]
    %v541 = vld [vmem:[#allocation12 + $0xc0] sm:$0xff]
    %v542 = vld [vmem:[#allocation12 + $0xc8] sm:$0xff]
    %v543 = vld [vmem:[#allocation12 + $0xd0] sm:$0xff]
    %v544 = vld [vmem:[#allocation12 + $0xd8] sm:$0xff]
    %v545 = vld [vmem:[#allocation12 + $0xe0] sm:$0xff]
    %v546 = vld [vmem:[#allocation12 + $0xe8] sm:$0xff]
    %v547 = vld [vmem:[#allocation12 + $0xf0] sm:$0xff]
    %v548 = vld [vmem:[#allocation12 + $0xf8] sm:$0xff]
    %v549 = vld [vmem:[#allocation12 + $0x100] sm:$0xff]
    %v550 = vld [vmem:[#allocation12 + $0x108] sm:$0xff]
    %v551 = vld [vmem:[#allocation12 + $0x110] sm:$0xff]
    %v552 = vld [vmem:[#allocation12 + $0x118] sm:$0xff]
    %v553 = vld [vmem:[#allocation12 + $0x120] sm:$0xff]
    %v554 = vld [vmem:[#allocation12 + $0x128] sm:$0xff]
    %v555 = vld [vmem:[#allocation12 + $0x130] sm:$0xff]
    %v556 = vld [vmem:[#allocation12 + $0x138] sm:$0xff]
    %v557 = vld [vmem:[#allocation12 + $0x140] sm:$0xff]
    %v558 = vld [vmem:[#allocation12 + $0x148] sm:$0xff]
    %v559 = vld [vmem:[#allocation12 + $0x150] sm:$0xff]
    %v560 = vld [vmem:[#allocation12 + $0x158] sm:$0xff]
    %v561 = vld [vmem:[#allocation12 + $0x160] sm:$0xff]
    %v562 = vld [vmem:[#allocation12 + $0x168] sm:$0xff]
    %v563 = vld [vmem:[#allocation12 + $0x170] sm:$0xff]
    %v564 = vld [vmem:[#allocation12 + $0x178] sm:$0xff]
    %v565 = vld [vmem:[#allocation12 + $0x180] sm:$0xff]
    %v566 = vld [vmem:[#allocation12 + $0x188] sm:$0xff]
    %v567 = vld [vmem:[#allocation12 + $0x190] sm:$0xff]
    %v568 = vld [vmem:[#allocation12 + $0x198] sm:$0xff]
    %v569 = vld [vmem:[#allocation12 + $0x1a0] sm:$0xff]
    %v570 = vld [vmem:[#allocation12 + $0x1a8] sm:$0xff]
    %v571 = vld [vmem:[#allocation12 + $0x1b0] sm:$0xff]
    %v572 = vld [vmem:[#allocation12 + $0x1b8] sm:$0xff]
    %v573 = vld [vmem:[#allocation12 + $0x1c0] sm:$0xff]
    %v574 = vld [vmem:[#allocation12 + $0x1c8] sm:$0xff]
    %v575 = vld [vmem:[#allocation12 + $0x1d0] sm:$0xff]
    %v576 = vld [vmem:[#allocation12 + $0x1d8] sm:$0xff]
    %v577 = vld [vmem:[#allocation12 + $0x1e0] sm:$0xff]
    %v578 = vld [vmem:[#allocation12 + $0x1e8] sm:$0xff]
    %v579 = vld [vmem:[#allocation12 + $0x1f0] sm:$0xff]
    %v580 = vld [vmem:[#allocation12 + $0x1f8] sm:$0xff]
    %v581 = vld [vmem:[#allocation12 + $0x200] sm:$0xff]
    %v582 = vld [vmem:[#allocation12 + $0x208] sm:$0xff]
    %v583 = vld [vmem:[#allocation12 + $0x210] sm:$0xff]
    %v584 = vld [vmem:[#allocation12 + $0x218] sm:$0xff]
    %v585 = vld [vmem:[#allocation12 + $0x220] sm:$0xff]
    %v586 = vld [vmem:[#allocation12 + $0x228] sm:$0xff]
    %v587 = vld [vmem:[#allocation12 + $0x230] sm:$0xff]
    %v588 = vld [vmem:[#allocation12 + $0x238] sm:$0xff]
    %v589 = vld [vmem:[#allocation12 + $0x240] sm:$0xff]
    %v590 = vld [vmem:[#allocation12 + $0x248] sm:$0xff]
    %v591 = vld [vmem:[#allocation12 + $0x250] sm:$0xff]
    %v592 = vld [vmem:[#allocation12 + $0x258] sm:$0xff]
    %v593 = vld [vmem:[#allocation12 + $0x260] sm:$0xff]
    %v594 = vld [vmem:[#allocation12 + $0x268] sm:$0xff]
    %v595 = vld [vmem:[#allocation12 + $0x270] sm:$0xff]
    %v596 = vld [vmem:[#allocation12 + $0x278] sm:$0xff]
    %v597 = vld [vmem:[#allocation12 + $0x280] sm:$0xff]
    %v598 = vld [vmem:[#allocation12 + $0x288] sm:$0xff]
    %v599 = vld [vmem:[#allocation12 + $0x290] sm:$0xff]
    %v600 = vld [vmem:[#allocation12 + $0x298] sm:$0xff]
    %v601 = vld [vmem:[#allocation12 + $0x2a0] sm:$0xff]
    %v602 = vld [vmem:[#allocation12 + $0x2a8] sm:$0xff]
    %v603 = vld [vmem:[#allocation12 + $0x2b0] sm:$0xff]
    %v604 = vld [vmem:[#allocation12 + $0x2b8] sm:$0xff]
    %v605 = vld [vmem:[#allocation12 + $0x2c0] sm:$0xff]
    %v606 = vld [vmem:[#allocation12 + $0x2c8] sm:$0xff]
    %v607 = vld [vmem:[#allocation12 + $0x2d0] sm:$0xff]
    %v608 = vld [vmem:[#allocation12 + $0x2d8] sm:$0xff]
    %v609 = vld [vmem:[#allocation12 + $0x2e0] sm:$0xff]
    %v610 = vld [vmem:[#allocation12 + $0x2e8] sm:$0xff]
    %v611 = vld [vmem:[#allocation12 + $0x2f0] sm:$0xff]
    %v612 = vld [vmem:[#allocation12 + $0x2f8] sm:$0xff]
    %v613 = vld [vmem:[#allocation12 + $0x300] sm:$0xff]
    %v614 = vld [vmem:[#allocation12 + $0x308] sm:$0xff]
    %v615 = vld [vmem:[#allocation12 + $0x310] sm:$0xff]
    %v616 = vld [vmem:[#allocation12 + $0x318] sm:$0xff]
    %v617 = vld [vmem:[#allocation12 + $0x320] sm:$0xff]
    %v618 = vld [vmem:[#allocation12 + $0x328] sm:$0xff]
    %v619 = vld [vmem:[#allocation12 + $0x330] sm:$0xff]
    %v620 = vld [vmem:[#allocation12 + $0x338] sm:$0xff]
    %v621 = vld [vmem:[#allocation12 + $0x340] sm:$0xff]
    %v622 = vld [vmem:[#allocation12 + $0x348] sm:$0xff]
    %v623 = vld [vmem:[#allocation12 + $0x350] sm:$0xff]
    %v624 = vld [vmem:[#allocation12 + $0x358] sm:$0xff]
    %v625 = vld [vmem:[#allocation12 + $0x360] sm:$0xff]
    %v626 = vld [vmem:[#allocation12 + $0x368] sm:$0xff]
    %v627 = vld [vmem:[#allocation12 + $0x370] sm:$0xff]
    %v628 = vld [vmem:[#allocation12 + $0x378] sm:$0xff]
    %v629 = vld [vmem:[#allocation12 + $0x380] sm:$0xff]
    %v630 = vld [vmem:[#allocation12 + $0x388] sm:$0xff]
    %v631 = vld [vmem:[#allocation12 + $0x390] sm:$0xff]
    %v632 = vld [vmem:[#allocation12 + $0x398] sm:$0xff]
    %v633 = vld [vmem:[#allocation12 + $0x3a0] sm:$0xff]
    %v634 = vld [vmem:[#allocation12 + $0x3a8] sm:$0xff]
    %v635 = vld [vmem:[#allocation12 + $0x3b0] sm:$0xff]
    %v636 = vld [vmem:[#allocation12 + $0x3b8] sm:$0xff]
    %v637 = vld [vmem:[#allocation12 + $0x3c0] sm:$0xff]
    %v638 = vld [vmem:[#allocation12 + $0x3c8] sm:$0xff]
    %v639 = vld [vmem:[#allocation12 + $0x3d0] sm:$0xff]
    %v640 = vld [vmem:[#allocation12 + $0x3d8] sm:$0xff]
    %v641 = vld [vmem:[#allocation12 + $0x3e0] sm:$0xff]
    %v642 = vld [vmem:[#allocation12 + $0x3e8] sm:$0xff]
    %v643 = vld [vmem:[#allocation12 + $0x3f0] sm:$0xff]
    %v644 = vld [vmem:[#allocation12 + $0x3f8] sm:$0xff]
    %645 = vmatprep.subr.mxu0 %v548
    %646 = vmatpush1.msra.mxu0 %v547
    %647 = vmatprep.subr.mxu0 %v546
    %648 = vmatpush1.msra.mxu0 %v545
    %649 = vmatprep.subr.mxu0 %v544
    %650 = vmatpush1.msra.mxu0 %v543
    %651 = vmatprep.subr.mxu0 %v542
    %652 = vmatpush1.msra.mxu0 %v541
    %653 = vmatprep.subr.mxu0 %v540
    %654 = vmatpush1.msra.mxu0 %v539
    %655 = vmatprep.subr.mxu0 %v538
    %656 = vmatpush1.msra.mxu0 %v537
    %657 = vmatprep.subr.mxu0 %v536
    %658 = vmatpush1.msra.mxu0 %v535
    %659 = vmatprep.subr.mxu0 %v534
    %660 = vmatpush1.msra.mxu0 %v533
    %661 = vmatprep.subr.mxu0 %v532
    %662 = vmatpush1.msra.mxu0 %v531
    %663 = vmatprep.subr.mxu0 %v530
    %664 = vmatpush1.msra.mxu0 %v529
    %665 = vmatprep.subr.mxu0 %v528
    %666 = vmatpush1.msra.mxu0 %v527
    %667 = vmatprep.subr.mxu0 %v526
    %668 = vmatpush1.msra.mxu0 %v525
    %669 = vmatprep.subr.mxu0 %v524
    %670 = vmatpush1.msra.mxu0 %v523
    %671 = vmatprep.subr.mxu0 %v522
    %672 = vmatpush1.msra.mxu0 %v521
    %673 = vmatprep.subr.mxu0 %v520
    %674 = vmatpush1.msra.mxu0 %v519
    %675 = vmatprep.subr.mxu0 %v518
    %676 = vmatpush1.msra.mxu0 %v517
    %677 = vmatprep.subr.mxu0 %v580
    %678 = vmatpush2.msra.mxu0 %v579
    %679 = vmatprep.subr.mxu0 %v578
    %680 = vmatpush2.msra.mxu0 %v577
    %681 = vmatprep.subr.mxu0 %v576
    %682 = vmatpush2.msra.mxu0 %v575
    %683 = vmatprep.subr.mxu0 %v574
    %684 = vmatpush2.msra.mxu0 %v573
    %685 = vmatprep.subr.mxu0 %v572
    %686 = vmatpush2.msra.mxu0 %v571
    %687 = vmatprep.subr.mxu0 %v570
    %688 = vmatpush2.msra.mxu0 %v569
    %689 = vmatprep.subr.mxu0 %v568
    %690 = vmatpush2.msra.mxu0 %v567
    %691 = vmatprep.subr.mxu0 %v566
    %692 = vmatpush2.msra.mxu0 %v565
    %693 = vmatprep.subr.mxu0 %v564
    %694 = vmatpush2.msra.mxu0 %v563
    %695 = vmatprep.subr.mxu0 %v562
    %696 = vmatpush2.msra.mxu0 %v561
    %697 = vmatprep.subr.mxu0 %v560
    %698 = vmatpush2.msra.mxu0 %v559
    %699 = vmatprep.subr.mxu0 %v558
    %700 = vmatpush2.msra.mxu0 %v557
    %701 = vmatprep.subr.mxu0 %v556
    %702 = vmatpush2.msra.mxu0 %v555
    %703 = vmatprep.subr.mxu0 %v554
    %704 = vmatpush2.msra.mxu0 %v553
    %705 = vmatprep.subr.mxu0 %v552
    %706 = vmatpush2.msra.mxu0 %v551
    %707 = vmatprep.subr.mxu0 %v550
    %708 = vmatpush2.msra.mxu0 %v549
    %709 = vmatprep.mubr.f32.mxu0 %v506
    %710 = vmatmul.mubr.f32.gmra.mxu0 %v505
    %v711 = vpop.f32.mrf.mxu0
    %v712 = vadd.f32 0.0, %v711
    %v713 = vpop.f32.mrf.mxu0
    %v714 = vadd.f32 0.0, %v713
    %715 = vmatprep.mubr.f32.mxu0 %v510
    %716 = vmatmul.mubr.f32.gmra.mxu0 %v509
    %v717 = vpop.f32.mrf.mxu0
    %v718 = vadd.f32 0.0, %v717
    %v719 = vpop.f32.mrf.mxu0
    %v720 = vadd.f32 0.0, %v719
    %721 = vmatprep.mubr.f32.mxu0 %v514
    %722 = vmatmul.mubr.f32.gmra.mxu0 %v513
    %v723 = vpop.f32.mrf.mxu0
    %v724 = vadd.f32 0.0, %v723
    %v725 = vpop.f32.mrf.mxu0
    %v726 = vadd.f32 0.0, %v725
    %727 = vdwg.mxu0
    %728 = vmatprep.subr.mxu0 %v612
    %729 = vmatpush1.msra.mxu0 %v611
    %730 = vmatprep.subr.mxu0 %v610
    %731 = vmatpush1.msra.mxu0 %v609
    %732 = vmatprep.subr.mxu0 %v608
    %733 = vmatpush1.msra.mxu0 %v607
    %734 = vmatprep.subr.mxu0 %v606
    %735 = vmatpush1.msra.mxu0 %v605
    %736 = vmatprep.subr.mxu0 %v604
    %737 = vmatpush1.msra.mxu0 %v603
    %738 = vmatprep.subr.mxu0 %v602
    %739 = vmatpush1.msra.mxu0 %v601
    %740 = vmatprep.subr.mxu0 %v600
    %741 = vmatpush1.msra.mxu0 %v599
    %742 = vmatprep.subr.mxu0 %v598
    %743 = vmatpush1.msra.mxu0 %v597
    %744 = vmatprep.subr.mxu0 %v596
    %745 = vmatpush1.msra.mxu0 %v595
    %746 = vmatprep.subr.mxu0 %v594
    %747 = vmatpush1.msra.mxu0 %v593
    %748 = vmatprep.subr.mxu0 %v592
    %749 = vmatpush1.msra.mxu0 %v591
    %750 = vmatprep.subr.mxu0 %v590
    %751 = vmatpush1.msra.mxu0 %v589
    %752 = vmatprep.subr.mxu0 %v588
    %753 = vmatpush1.msra.mxu0 %v587
    %754 = vmatprep.subr.mxu0 %v586
    %755 = vmatpush1.msra.mxu0 %v585
    %756 = vmatprep.subr.mxu0 %v584
    %757 = vmatpush1.msra.mxu0 %v583
    %758 = vmatprep.subr.mxu0 %v582
    %759 = vmatpush1.msra.mxu0 %v581
    %760 = vmatprep.subr.mxu0 %v644
    %761 = vmatpush2.msra.mxu0 %v643
    %762 = vmatprep.subr.mxu0 %v642
    %763 = vmatpush2.msra.mxu0 %v641
    %764 = vmatprep.subr.mxu0 %v640
    %765 = vmatpush2.msra.mxu0 %v639
    %766 = vmatprep.subr.mxu0 %v638
    %767 = vmatpush2.msra.mxu0 %v637
    %768 = vmatprep.subr.mxu0 %v636
    %769 = vmatpush2.msra.mxu0 %v635
    %770 = vmatprep.subr.mxu0 %v634
    %771 = vmatpush2.msra.mxu0 %v633
    %772 = vmatprep.subr.mxu0 %v632
    %773 = vmatpush2.msra.mxu0 %v631
    %774 = vmatprep.subr.mxu0 %v630
    %775 = vmatpush2.msra.mxu0 %v629
    %776 = vmatprep.subr.mxu0 %v628
    %777 = vmatpush2.msra.mxu0 %v627
    %778 = vmatprep.subr.mxu0 %v626
    %779 = vmatpush2.msra.mxu0 %v625
    %780 = vmatprep.subr.mxu0 %v624
    %781 = vmatpush2.msra.mxu0 %v623
    %782 = vmatprep.subr.mxu0 %v622
    %783 = vmatpush2.msra.mxu0 %v621
    %784 = vmatprep.subr.mxu0 %v620
    %785 = vmatpush2.msra.mxu0 %v619
    %786 = vmatprep.subr.mxu0 %v618
    %787 = vmatpush2.msra.mxu0 %v617
    %788 = vmatprep.subr.mxu0 %v616
    %789 = vmatpush2.msra.mxu0 %v615
    %790 = vmatprep.subr.mxu0 %v614
    %791 = vmatpush2.msra.mxu0 %v613
    %792 = vmatprep.mubr.f32.mxu0 %v508
    %793 = vmatmul.mubr.f32.gmra.mxu0 %v507
    %v794 = vpop.f32.mrf.mxu0
    %v795 = vadd.f32 %v712, %v794
    %v796 = vpop.f32.mrf.mxu0
    %v797 = vadd.f32 %v714, %v796
    %798 = vmatprep.mubr.f32.mxu0 %v512
    %799 = vmatmul.mubr.f32.gmra.mxu0 %v511
    %v800 = vpop.f32.mrf.mxu0
    %v801 = vadd.f32 %v718, %v800
    %v802 = vpop.f32.mrf.mxu0
    %v803 = vadd.f32 %v720, %v802
    %804 = vmatprep.mubr.f32.mxu0 %v516
    %805 = vmatmul.mubr.f32.gmra.mxu0 %v515
    %v806 = vpop.f32.mrf.mxu0
    %v807 = vadd.f32 %v724, %v806
    %v808 = vpop.f32.mrf.mxu0
    %v809 = vadd.f32 %v726, %v808
    %810 = vdwg.mxu0
    %811 = vst [vmem:[#allocation15] sm:$0xff] %v795
    %812 = vst [vmem:[#allocation15 + $0x8] sm:$0xff] %v797
    %813 = vst [vmem:[#allocation15 + $0x10] sm:$0xff] %v801
    %814 = vst [vmem:[#allocation15 + $0x18] sm:$0xff] %v803
    %815 = vst [vmem:[#allocation15 + $0x20] sm:$0xff] %v807
    %816 = vst [vmem:[#allocation15 + $0x28] sm:$0xff] %v809
    // Predicated region
    $region62: #{tpu_custom_call.1} parent=1 // pred_check
      _
    $region63: #{tpu_custom_call.1} parent=1 // pred_check_branch
      %818 = sbr.rel (0) target = $region65
    $region64: #{tpu_custom_call.1} parent=1 // pred_region
      %s820 = ssub.s32 1536, 1536
      %821 = vsyncadd [#allocation5], %s820
      %s822 = sshll.u32 [#allocation14], 4
      %s823 = int_to_ptr.vmem [resolvable:$true] %s822
      %828 = dma.vmem_to_hbm [thread:$0]  %s823, 1536, %s8, [#allocation5], 512, 512, 32
    $region65: #{tpu_custom_call.1} parent=1 // pred_fallthru
      _
    // Predicated region
    $region66: #{tpu_custom_call.1} parent=1 // pred_check
      _
    $region67: #{tpu_custom_call.1} parent=1 // pred_check_branch
      %830 = sbr.rel (0) target = $region69
    $region68: #{tpu_custom_call.1} parent=1 // pred_region
      %s832 = ssub.s32 768, 768
      %833 = vsyncadd [#allocation16], %s832
      %s834 = sshll.u32 [#allocation15], 4
      %s835 = int_to_ptr.vmem [resolvable:$true] %s834
      %840 = dma.vmem_to_hbm [thread:$0]  %s835, 768, %s9, [#allocation16], 256, 256, 16
    $region69: #{tpu_custom_call.1} parent=1 // pred_fallthru
      _
    // Predicated region
    $region70: #{tpu_custom_call.1} parent=1 // pred_check
      _
    $region71: #{tpu_custom_call.1} parent=1 // pred_check_branch
      %842 = sbr.rel (0) target = $region73
    $region72: #{tpu_custom_call.1} parent=1 // pred_region
      %843 = dma.done [#allocation5], 1536
    $region73: #{tpu_custom_call.1} parent=1 // pred_fallthru
      _
    // Predicated region
    $region74: #{tpu_custom_call.1} parent=1 // pred_check
      _
    $region75: #{tpu_custom_call.1} parent=1 // pred_check_branch
      %845 = sbr.rel (0) target = $region77
    $region76: #{tpu_custom_call.1} parent=1 // pred_region
      %846 = dma.done [#allocation16], 768
    $region77: #{tpu_custom_call.1} parent=1 // pred_fallthru
      _
    %847 = vsyncpa [#allocation4], 1
    %848 = vsyncpa [#allocation7], 1
    %849 = vsyncpa [#allocation10], 1
    %850 = vsyncpa [#allocation13], 1
    %851 = vsyncpa [#allocation5], 1
    %852 = vsyncpa [#allocation16], 1

</llo_original>
